<compile_context>
chip_gen: v5e
topology: v5e:2x2
jax: 0.10.0
libtpu: 0.0.40
codegen_flags: <defaults>
</compile_context>

<pallas_src>
import jax
import jax.numpy as jnp
from jax.experimental import pallas as pl
from jax.experimental.pallas import tpu as pltpu

# ---- model hyper-parameters (small, consistent with the module's ctor) ----
MEL_DIM = 8
R = 2                       # reduction factor
ENC_DIM = 16                # encoder_output_dim == attention_context_dim
PRENET_DIMS = (32, 16)
ATTN_DIM = 32
ATTN_RNN = 32               # attention_rnn_units
DEC_RNN = 32                # decoder_rnn_units
B = 2
T_ENC = 8
T_DEC = 8                   # multiple of R
N_STEPS = T_DEC // R

ATT_IN = PRENET_DIMS[1] + ENC_DIM       # attention-GRU input width (32)
PROJ_IN = ATTN_RNN + ENC_DIM            # project_to_decoder_in width (48)
OUT_IN = DEC_RNN + ENC_DIM              # mel/stop projection input (48)
OUT_W = R * MEL_DIM + 1                 # fused mel+stop output width (17)
WPAD = 128                              # lane width of the packed slabs


def _ceil8(n):
    return -(-n // 8) * 8


# ---- static layout of the packed weight slab: name -> (row_offset, rows, cols)
# GRU gate weights are split into (r,z) and n column groups, and every fused
# "concat" weight is split into its sublane-aligned row halves, so all in-loop
# matmul operands are contiguous, 8-aligned slab slices.
_W_SHAPES = [
    ('wmem', ENC_DIM, ATTN_DIM),                 # memory_layer (no bias)
    ('pw1', MEL_DIM, PRENET_DIMS[0]),            # prenet layer 1
    ('pw2', PRENET_DIMS[0], PRENET_DIMS[1]),     # prenet layer 2
    ('awih_pre', PRENET_DIMS[1], 3 * ATTN_RNN),  # attn GRU ih, prenet rows (hoisted)
    ('awih_ctx_rz', ENC_DIM, 2 * ATTN_RNN),      # attn GRU ih, ctx rows, r|z gates
    ('awih_ctx_n', ENC_DIM, ATTN_RNN),           # attn GRU ih, ctx rows, n gate
    ('awhh_rz', ATTN_RNN, 2 * ATTN_RNN),
    ('awhh_n', ATTN_RNN, ATTN_RNN),
    ('wq', ATTN_RNN, ATTN_DIM),                  # Bahdanau query layer (no bias)
    ('v', 1, ATTN_DIM),                          # Bahdanau v (no bias)
    ('wproj_h', ATTN_RNN, DEC_RNN),              # project_to_decoder_in, h_att rows
    ('wproj_c', ENC_DIM, DEC_RNN),               # project_to_decoder_in, ctx rows
    ('d0wih_rz', DEC_RNN, 2 * DEC_RNN),
    ('d0wih_n', DEC_RNN, DEC_RNN),
    ('d0whh_rz', DEC_RNN, 2 * DEC_RNN),
    ('d0whh_n', DEC_RNN, DEC_RNN),
    ('d1wih_rz', DEC_RNN, 2 * DEC_RNN),
    ('d1wih_n', DEC_RNN, DEC_RNN),
    ('d1whh_rz', DEC_RNN, 2 * DEC_RNN),
    ('d1whh_n', DEC_RNN, DEC_RNN),
    ('wout_d', DEC_RNN, OUT_W),                  # fused mel+stop proj, d_in rows
    ('wout_c', ENC_DIM, OUT_W),                  # fused mel+stop proj, ctx rows
]
_W_META = {}
_row = 0
for _n, _r, _c in _W_SHAPES:
    _W_META[_n] = (_row, _r, _c)
    _row += _ceil8(_r)                           # keep every slice sublane-aligned
W_ROWS = _ceil8(_row)

# ---- static layout of the packed bias slab: name -> (row, width) ----
_B_SPECS = [
    ('pb1', PRENET_DIMS[0]), ('pb2', PRENET_DIMS[1]),
    ('abih', 3 * ATTN_RNN),                      # used only in the hoisted precompute
    ('abhh_rz', 2 * ATTN_RNN), ('abhh_n', ATTN_RNN),
    ('bproj', DEC_RNN),
    ('d0bih_rz', 2 * DEC_RNN), ('d0bih_n', DEC_RNN),
    ('d0bhh_rz', 2 * DEC_RNN), ('d0bhh_n', DEC_RNN),
    ('d1bih_rz', 2 * DEC_RNN), ('d1bih_n', DEC_RNN),
    ('d1bhh_rz', 2 * DEC_RNN), ('d1bhh_n', DEC_RNN),
    ('bout', OUT_W),
]
_B_META = {n: (i, c) for i, (n, c) in enumerate(_B_SPECS)}
B_ROWS = _ceil8(len(_B_SPECS))


# ---- v7x second-TensorCore use: shard the (independent) batch axis ----
def _num_batch_blocks():
    try:
        dk = jax.devices()[0].device_kind.lower()
    except Exception:
        return 1
    if ('v7' in dk or '7x' in dk) and B % 2 == 0:
        return 2          # one batch element per TensorCore on v7x
    return 1              # serial grid over batch would only add latency on 1-TC chips


N_BLOCKS = _num_batch_blocks()
BB = B // N_BLOCKS


def decoder_kernel(enc_ref, cur_ref, w_ref, b_ref, mel_ref, attn_ref, stop_ref):
    f32 = jnp.float32
    bb = enc_ref.shape[0]                        # batch elements in this block

    def w(name):                                 # static, sublane-aligned slab slice
        off, r, c = _W_META[name]
        return w_ref[off:off + r, :c]

    def b(name):                                 # (1, c) bias row
        row, c = _B_META[name]
        return b_ref[row:row + 1, :c]

    enc = enc_ref[...]                           # (bb, T_ENC, ENC_DIM)

    # processed_memory = memory_layer(encoder_outputs): one flattened MXU matmul
    pm = jnp.dot(enc.reshape(bb * T_ENC, ENC_DIM), w('wmem'),
                 preferred_element_type=f32).reshape(bb, T_ENC, ATTN_DIM)

    # ---- hoisted teacher-forcing compute (off the serial recurrence) ----
    # prenet + prenet half of the attention-GRU input gates for ALL steps at
    # once; only the ctx half is computed inside the step loop.
    # TODO(synk): Prenet dropout (p=0.5) is stochastic; omitted for
    # deterministic eval semantics.
    cur = jnp.swapaxes(cur_ref[...], 0, 1).reshape(N_STEPS * bb, MEL_DIM)
    a1 = jax.nn.relu(jnp.dot(cur, w('pw1'), preferred_element_type=f32) + b('pb1'))
    a2 = jax.nn.relu(jnp.dot(a1, w('pw2'), preferred_element_type=f32) + b('pb2'))
    gi_pre = jnp.dot(a2, w('awih_pre'), preferred_element_type=f32) + b('abih')
    gi_pre_rz = gi_pre[:, :2 * ATTN_RNN]         # (N_STEPS*bb, 64), split once
    gi_pre_n = gi_pre[:, 2 * ATTN_RNN:]          # (N_STEPS*bb, 32)

    # hottest per-step weights hoisted into values; the rest re-sliced near use
    v_row = w('v')                               # (1, ATTN_DIM)
    wq = w('wq')
    awhh_rz, awhh_n = w('awhh_rz'), w('awhh_n')
    d0whh_rz, d0whh_n = w('d0whh_rz'), w('d0whh_n')
    d1whh_rz, d1whh_n = w('d1whh_rz'), w('d1whh_n')
    wout_d, wout_c = w('wout_d'), w('wout_c')

    def gru(gi_rz, gi_n, h, whh_rz, whh_n, bhh_rz, bhh_n, hidden):
        # PyTorch nn.GRUCell with (r,z) / n gate matmuls split so every
        # elementwise operand sits at lane offset 0 (no critical-path rotate).
        gh_rz = jnp.dot(h, whh_rz, preferred_element_type=f32) + bhh_rz
        gh_n = jnp.dot(h, whh_n, preferred_element_type=f32) + bhh_n
        rz = jax.nn.sigmoid(gi_rz + gh_rz)
        r = rz[:, :hidden]
        z = rz[:, hidden:]
        n = jnp.tanh(gi_n + r * gh_n)
        return (1.0 - z) * n + z * h

    h_att = jnp.zeros((bb, ATTN_RNN), f32)
    h0 = jnp.zeros((bb, DEC_RNN), f32)
    h1 = jnp.zeros((bb, DEC_RNN), f32)
    ctx = jnp.zeros((bb, ENC_DIM), f32)

    # fully-unrolled static step loop (all slice / store indices are Python ints)
    for s in range(N_STEPS):
        lo, hi = s * bb, (s + 1) * bb

        # ---- attention RNN: precomputed prenet gates + ctx gates (no concat) ----
        gi_rz = gi_pre_rz[lo:hi, :] + jnp.dot(ctx, w('awih_ctx_rz'),
                                              preferred_element_type=f32)
        gi_n = gi_pre_n[lo:hi, :] + jnp.dot(ctx, w('awih_ctx_n'),
                                            preferred_element_type=f32)
        h_att = gru(gi_rz, gi_n, h_att, awhh_rz, awhh_n,
                    b('abhh_rz'), b('abhh_n'), ATTN_RNN)

        # ---- Bahdanau attention ----
        proc_q = jnp.dot(h_att, wq, preferred_element_type=f32)     # (bb, A)
        tanh_sum = jnp.tanh(proc_q[:, None, :] + pm)                # (bb, T_ENC, A)
        scores = jnp.sum(tanh_sum * v_row[None, :, :], axis=-1)     # (bb, T_ENC)
        scores = scores - jnp.max(scores, axis=-1, keepdims=True)
        e = jnp.exp(scores)
        align = e * pl.reciprocal(jnp.sum(e, axis=-1, keepdims=True), approx=True)
        # context via VPU multiply + sublane reduce (avoids M=1 MXU pops)
        ctx = jnp.sum(align[:, :, None] * enc, axis=1)              # (bb, ENC_DIM)

        # ---- project_to_decoder_in: split fused matmul (no lane concat) ----
        d_in = (jnp.dot(h_att, w('wproj_h'), preferred_element_type=f32)
                + jnp.dot(ctx, w('wproj_c'), preferred_element_type=f32)
                + b('bproj'))

        # ---- decoder GRU stack with residual connections ----
        gi0_rz = jnp.dot(d_in, w('d0wih_rz'), preferred_element_type=f32) + b('d0bih_rz')
        gi0_n = jnp.dot(d_in, w('d0wih_n'), preferred_element_type=f32) + b('d0bih_n')
        h0 = gru(gi0_rz, gi0_n, h0, d0whh_rz, d0whh_n,
                 b('d0bhh_rz'), b('d0bhh_n'), DEC_RNN)
        d_in = h0 + d_in
        gi1_rz = jnp.dot(d_in, w('d1wih_rz'), preferred_element_type=f32) + b('d1bih_rz')
        gi1_n = jnp.dot(d_in, w('d1wih_n'), preferred_element_type=f32) + b('d1bih_n')
        h1 = gru(gi1_rz, gi1_n, h1, d1whh_rz, d1whh_n,
                 b('d1bhh_rz'), b('d1bhh_n'), DEC_RNN)
        d_in = h1 + d_in

        # ---- fused mel/stop projection, split halves; direct per-output stores ----
        o = (jnp.dot(d_in, wout_d, preferred_element_type=f32)
             + jnp.dot(ctx, wout_c, preferred_element_type=f32)
             + b('bout'))                                           # (bb, R*MEL+1)
        mel_ref[:, s, :] = o[:, :R * MEL_DIM]
        stop_ref[:, s, :] = jax.nn.sigmoid(o[:, R * MEL_DIM:])
        attn_ref[:, s, :] = align


def init_params(key):
    keys = iter(jax.random.split(key, 32))

    def w(shape, scale=0.1):
        return scale * jax.random.normal(next(keys), shape, dtype=jnp.float32)

    p = {}
    p['wmem'] = w((ATTN_DIM, ENC_DIM))                       # memory_layer (no bias)
    p['pw1'] = w((PRENET_DIMS[0], MEL_DIM)); p['pb1'] = w((PRENET_DIMS[0],))
    p['pw2'] = w((PRENET_DIMS[1], PRENET_DIMS[0])); p['pb2'] = w((PRENET_DIMS[1],))
    att_in = PRENET_DIMS[1] + ENC_DIM
    p['awih'] = w((3 * ATTN_RNN, att_in)); p['awhh'] = w((3 * ATTN_RNN, ATTN_RNN))
    p['abih'] = w((3 * ATTN_RNN,)); p['abhh'] = w((3 * ATTN_RNN,))
    p['wq'] = w((ATTN_DIM, ATTN_RNN))                        # query_layer (no bias)
    p['wv'] = w((1, ATTN_DIM))                               # v (no bias)
    p['wproj'] = w((DEC_RNN, ATTN_RNN + ENC_DIM)); p['bproj'] = w((DEC_RNN,))
    for i in range(2):
        p[f'd{i}wih'] = w((3 * DEC_RNN, DEC_RNN)); p[f'd{i}whh'] = w((3 * DEC_RNN, DEC_RNN))
        p[f'd{i}bih'] = w((3 * DEC_RNN,)); p[f'd{i}bhh'] = w((3 * DEC_RNN,))
    p['wmel'] = w((MEL_DIM * R, DEC_RNN + ENC_DIM)); p['bmel'] = w((MEL_DIM * R,))
    p['wstop'] = w((1, DEC_RNN + ENC_DIM)); p['bstop'] = w((1,))
    return p


def _pack_weights(p):
    """Pack all weights (pre-transposed to (in,out)), gate-split, into two slabs."""
    aT = p['awih'].T                                  # (ATT_IN, 96)
    ahT = p['awhh'].T                                 # (32, 96)
    prT = p['wproj'].T                                # (48, 32)
    woT = jnp.concatenate([p['wmel'], p['wstop']], axis=0).T   # (48, 17)
    wlist = {
        'wmem': p['wmem'].T,
        'pw1': p['pw1'].T, 'pw2': p['pw2'].T,
        'awih_pre': aT[:PRENET_DIMS[1], :],
        'awih_ctx_rz': aT[PRENET_DIMS[1]:, :2 * ATTN_RNN],
        'awih_ctx_n': aT[PRENET_DIMS[1]:, 2 * ATTN_RNN:],
        'awhh_rz': ahT[:, :2 * ATTN_RNN], 'awhh_n': ahT[:, 2 * ATTN_RNN:],
        'wq': p['wq'].T, 'v': p['wv'],
        'wproj_h': prT[:ATTN_RNN, :], 'wproj_c': prT[ATTN_RNN:, :],
        'wout_d': woT[:DEC_RNN, :], 'wout_c': woT[DEC_RNN:, :],
    }
    for i in range(2):
        ihT = p[f'd{i}wih'].T
        hhT = p[f'd{i}whh'].T
        wlist[f'd{i}wih_rz'] = ihT[:, :2 * DEC_RNN]
        wlist[f'd{i}wih_n'] = ihT[:, 2 * DEC_RNN:]
        wlist[f'd{i}whh_rz'] = hhT[:, :2 * DEC_RNN]
        wlist[f'd{i}whh_n'] = hhT[:, 2 * DEC_RNN:]
    wslab = jnp.zeros((W_ROWS, WPAD), jnp.float32)
    for name, (off, r, c) in _W_META.items():
        wslab = wslab.at[off:off + r, :c].set(wlist[name].astype(jnp.float32))

    blist = {
        'pb1': p['pb1'], 'pb2': p['pb2'],
        'abih': p['abih'],
        'abhh_rz': p['abhh'][:2 * ATTN_RNN], 'abhh_n': p['abhh'][2 * ATTN_RNN:],
        'bproj': p['bproj'],
        'bout': jnp.concatenate([p['bmel'], p['bstop']]),
    }
    for i in range(2):
        blist[f'd{i}bih_rz'] = p[f'd{i}bih'][:2 * DEC_RNN]
        blist[f'd{i}bih_n'] = p[f'd{i}bih'][2 * DEC_RNN:]
        blist[f'd{i}bhh_rz'] = p[f'd{i}bhh'][:2 * DEC_RNN]
        blist[f'd{i}bhh_n'] = p[f'd{i}bhh'][2 * DEC_RNN:]
    bslab = jnp.zeros((B_ROWS, WPAD), jnp.float32)
    for name, (row, c) in _B_META.items():
        bslab = bslab.at[row, :c].set(blist[name].astype(jnp.float32))
    return wslab, bslab


@jax.jit
def run_decoder(params, encoder_outputs, inputs):
    """Teacher-forced decoder. inputs: (B, T_dec, mel_dim)."""
    assert T_DEC % R == 0
    enc = encoder_outputs.astype(jnp.float32)
    x = inputs.astype(jnp.float32)

    # Teacher-forcing frames per step, built once (pure data movement):
    # step 0 uses the zero go-frame, step s>0 uses inputs[:, s*R-1, :].
    shifted = x[:, jnp.arange(1, N_STEPS) * R - 1, :]                 # (B, S-1, MEL)
    cur_all = jnp.concatenate(
        [jnp.zeros((B, 1, MEL_DIM), jnp.float32), shifted], axis=1)   # (B, S, MEL)

    wslab, bslab = _pack_weights(params)

    mel_s, attn_s, stop_s = pl.pallas_call(
        decoder_kernel,
        out_shape=(
            jax.ShapeDtypeStruct((B, N_STEPS, R * MEL_DIM), jnp.float32),
            jax.ShapeDtypeStruct((B, N_STEPS, T_ENC), jnp.float32),
            jax.ShapeDtypeStruct((B, N_STEPS, 1), jnp.float32),
        ),
        grid=(N_BLOCKS,),
        in_specs=[
            pl.BlockSpec((BB, T_ENC, ENC_DIM), lambda i: (i, 0, 0)),
            pl.BlockSpec((BB, N_STEPS, MEL_DIM), lambda i: (i, 0, 0)),
            pl.BlockSpec((W_ROWS, WPAD), lambda i: (0, 0)),
            pl.BlockSpec((B_ROWS, WPAD), lambda i: (0, 0)),
        ],
        out_specs=(
            pl.BlockSpec((BB, N_STEPS, R * MEL_DIM), lambda i: (i, 0, 0)),
            pl.BlockSpec((BB, N_STEPS, T_ENC), lambda i: (i, 0, 0)),
            pl.BlockSpec((BB, N_STEPS, 1), lambda i: (i, 0, 0)),
        ),
        compiler_params=pltpu.CompilerParams(
            dimension_semantics=("parallel",)),
    )(enc, cur_all, wslab, bslab)

    # glue: reassemble PyTorch output conventions
    mel_outputs = mel_s.reshape(B, T_DEC, MEL_DIM)                    # (B, T_dec, MEL)
    stop_tokens = jnp.repeat(stop_s[:, :, 0], R, axis=1)              # (B, T_dec)
    attn_scores = attn_s                                              # (B, S, T_ENC)
    return mel_outputs, stop_tokens, attn_scores


def reference_decoder(p, enc, inputs):
    """Pure-JAX reference mirroring the PyTorch forward (teacher forcing, eval)."""
    pm = jnp.einsum('bte,ae->bta', enc, p['wmem'])
    dec_tm = jnp.transpose(inputs, (1, 0, 2))
    h_att = jnp.zeros((B, ATTN_RNN), jnp.float32)
    h0 = jnp.zeros((B, DEC_RNN), jnp.float32)
    h1 = jnp.zeros((B, DEC_RNN), jnp.float32)
    ctx = jnp.zeros((B, ENC_DIM), jnp.float32)

    def gru(x, h, wih, whh, bih, bhh):
        gi = x @ wih.T + bih
        gh = h @ whh.T + bhh
        H = h.shape[-1]
        r = jax.nn.sigmoid(gi[:, :H] + gh[:, :H])
        z = jax.nn.sigmoid(gi[:, H:2 * H] + gh[:, H:2 * H])
        n = jnp.tanh(gi[:, 2 * H:] + r * gh[:, 2 * H:])
        return (1 - z) * n + z * h

    mels, stops, attns = [], [], []
    for s in range(N_STEPS):
        cur = jnp.zeros((B, MEL_DIM), jnp.float32) if s == 0 else dec_tm[s * R - 1]
        a = jax.nn.relu(cur @ p['pw1'].T + p['pb1'])
        a = jax.nn.relu(a @ p['pw2'].T + p['pb2'])
        cell_in = jnp.concatenate([a, ctx], -1)
        h_att = gru(cell_in, h_att, p['awih'], p['awhh'], p['abih'], p['abhh'])
        pq = h_att @ p['wq'].T
        t = jnp.tanh(pq[:, None, :] + pm)
        sc = jnp.einsum('bta,a->bt', t, p['wv'][0])
        al = jax.nn.softmax(sc, axis=-1)
        ctx = jnp.einsum('bt,bte->be', al, enc)
        d_in = jnp.concatenate([h_att, ctx], -1) @ p['wproj'].T + p['bproj']
        h0 = gru(d_in, h0, p['d0wih'], p['d0whh'], p['d0bih'], p['d0bhh'])
        d_in = h0 + d_in
        h1 = gru(d_in, h1, p['d1wih'], p['d1whh'], p['d1bih'], p['d1bhh'])
        d_in = h1 + d_in
        pi = jnp.concatenate([d_in, ctx], -1)
        mels.append((pi @ p['wmel'].T + p['bmel']).reshape(B, R, MEL_DIM))
        stops.extend([jax.nn.sigmoid(pi @ p['wstop'].T + p['bstop'])] * R)
        attns.append(al[:, None, :])
    return (jnp.concatenate(mels, axis=1),
            jnp.concatenate(stops, axis=1),
            jnp.concatenate(attns, axis=1))


if __name__ == "__main__":
    # TODO(synk): greedy (inputs=None) decoding has a data-dependent stop
    # condition; only the teacher-forced path is implemented here.
    key = jax.random.PRNGKey(0)
    k_param, k_enc, k_dec = jax.random.split(key, 3)
    params = init_params(k_param)
    encoder_outputs = 0.5 * jax.random.normal(k_enc, (B, T_ENC, ENC_DIM), dtype=jnp.float32)
    mel_inputs = 0.5 * jax.random.normal(k_dec, (B, T_DEC, MEL_DIM), dtype=jnp.float32)

    mel, stop, attn = run_decoder(params, encoder_outputs, mel_inputs)
    jax.block_until_ready((mel, stop, attn))

    mel_r, stop_r, attn_r = reference_decoder(params, encoder_outputs, mel_inputs)

    assert mel.shape == (B, T_DEC, MEL_DIM)
    assert stop.shape == (B, T_DEC)
    assert attn.shape == (B, N_STEPS, T_ENC)
    assert jnp.allclose(mel, mel_r, atol=5e-2, rtol=5e-2)
    assert jnp.allclose(stop, stop_r, atol=5e-2, rtol=5e-2)
    assert jnp.allclose(attn, attn_r, atol=5e-2, rtol=5e-2)

    print("KERNEL_OK")
</pallas_src>

<mosaic_0001>
module attributes {stable_mosaic.version = 11 : i64} {
  func.func @decoder_kernel(%arg0: i32, %arg1: memref<2x8x16xf32, #tpu.memory_space<vmem>>, %arg2: memref<2x4x8xf32, #tpu.memory_space<vmem>>, %arg3: memref<560x128xf32, #tpu.memory_space<vmem>>, %arg4: memref<16x128xf32, #tpu.memory_space<vmem>>, %arg5: memref<2x4x16xf32, #tpu.memory_space<vmem>>, %arg6: memref<2x4x8xf32, #tpu.memory_space<vmem>>, %arg7: memref<2x4x1xf32, #tpu.memory_space<vmem>>) attributes {dimension_semantics = [#tpu.dimension_semantics<parallel>], iteration_bounds = array<i64: 1>, scalar_prefetch = 0 : i64, scratch_operands = 0 : i64, tpu.core_type = #tpu.core_type<tc>, window_params = [{transform_indices = @transform_0, window_bounds = array<i64: 2, 8, 16>}, {transform_indices = @transform_1, window_bounds = array<i64: 2, 4, 8>}, {pipeline_mode = #tpu.pipeline_mode<synchronous>, transform_indices = @transform_2, window_bounds = array<i64: 560, 128>}, {pipeline_mode = #tpu.pipeline_mode<synchronous>, transform_indices = @transform_3, window_bounds = array<i64: 16, 128>}, {transform_indices = @transform_4, window_bounds = array<i64: 2, 4, 16>}, {transform_indices = @transform_5, window_bounds = array<i64: 2, 4, 8>}, {transform_indices = @transform_6, window_bounds = array<i64: 2, 4, 1>}]} {
    %c0 = arith.constant 0 : index
    %c0_0 = arith.constant 0 : index
    %c0_1 = arith.constant 0 : index
    %0 = vector.load %arg1[%c0, %c0_0, %c0_1] : memref<2x8x16xf32, #tpu.memory_space<vmem>>, vector<2x8x16xf32>
    %1 = vector.shape_cast %0 : vector<2x8x16xf32> to vector<16x16xf32>
    %c0_2 = arith.constant 0 : index
    %c0_3 = arith.constant 0 : index
    %2 = vector.load %arg3[%c0_2, %c0_3] : memref<560x128xf32, #tpu.memory_space<vmem>>, vector<16x32xf32>
    %cst = arith.constant dense<0.000000e+00> : vector<16x32xf32>
    %3 = tpu.matmul %1, %2, %cst {dimension_numbers = #tpu.dot_dimension_numbers<[1], [0], [0], [1], [0, 0, 1, 1], [], []>} : vector<16x16xf32>, vector<16x32xf32>, vector<16x32xf32> -> vector<16x32xf32>
    %4 = vector.shape_cast %3 : vector<16x32xf32> to vector<2x8x32xf32>
    %c0_4 = arith.constant 0 : index
    %c0_5 = arith.constant 0 : index
    %c0_6 = arith.constant 0 : index
    %5 = vector.load %arg2[%c0_4, %c0_5, %c0_6] : memref<2x4x8xf32, #tpu.memory_space<vmem>>, vector<2x4x8xf32>
    %6 = tpu.transpose %5, [1, 0, 2] : vector<2x4x8xf32> -> vector<4x2x8xf32>
    %7 = vector.shape_cast %6 : vector<4x2x8xf32> to vector<8x8xf32>
    %c16 = arith.constant 16 : index
    %c0_7 = arith.constant 0 : index
    %8 = vector.load %arg3[%c16, %c0_7] : memref<560x128xf32, #tpu.memory_space<vmem>>, vector<8x32xf32>
    %cst_8 = arith.constant dense<0.000000e+00> : vector<8x32xf32>
    %9 = tpu.matmul %7, %8, %cst_8 {dimension_numbers = #tpu.dot_dimension_numbers<[1], [0], [0], [1], [0, 0, 1, 1], [], []>} : vector<8x8xf32>, vector<8x32xf32>, vector<8x32xf32> -> vector<8x32xf32>
    %c0_9 = arith.constant 0 : index
    %c0_10 = arith.constant 0 : index
    %10 = vector.load %arg4[%c0_9, %c0_10] : memref<16x128xf32, #tpu.memory_space<vmem>>, vector<1x32xf32>
    %11 = vector.broadcast %10 : vector<1x32xf32> to vector<8x32xf32>
    %12 = arith.addf %9, %11 : vector<8x32xf32>
    %cst_11 = arith.constant 0.000000e+00 : f32
    %13 = vector.broadcast %cst_11 : f32 to vector<8x32xf32>
    %14 = arith.maximumf %12, %13 : vector<8x32xf32>
    %c24 = arith.constant 24 : index
    %c0_12 = arith.constant 0 : index
    %15 = vector.load %arg3[%c24, %c0_12] : memref<560x128xf32, #tpu.memory_space<vmem>>, vector<32x16xf32>
    %cst_13 = arith.constant dense<0.000000e+00> : vector<8x16xf32>
    %16 = tpu.matmul %14, %15, %cst_13 {dimension_numbers = #tpu.dot_dimension_numbers<[1], [0], [0], [1], [0, 0, 1, 1], [], []>} : vector<8x32xf32>, vector<32x16xf32>, vector<8x16xf32> -> vector<8x16xf32>
    %c1 = arith.constant 1 : index
    %c0_14 = arith.constant 0 : index
    %17 = vector.load %arg4[%c1, %c0_14] : memref<16x128xf32, #tpu.memory_space<vmem>>, vector<1x16xf32>
    %18 = vector.broadcast %17 : vector<1x16xf32> to vector<8x16xf32>
    %19 = arith.addf %16, %18 : vector<8x16xf32>
    %cst_15 = arith.constant 0.000000e+00 : f32
    %20 = vector.broadcast %cst_15 : f32 to vector<8x16xf32>
    %21 = arith.maximumf %19, %20 : vector<8x16xf32>
    %c56 = arith.constant 56 : index
    %c0_16 = arith.constant 0 : index
    %22 = vector.load %arg3[%c56, %c0_16] : memref<560x128xf32, #tpu.memory_space<vmem>>, vector<16x96xf32>
    %cst_17 = arith.constant dense<0.000000e+00> : vector<8x96xf32>
    %23 = tpu.matmul %21, %22, %cst_17 {dimension_numbers = #tpu.dot_dimension_numbers<[1], [0], [0], [1], [0, 0, 1, 1], [], []>} : vector<8x16xf32>, vector<16x96xf32>, vector<8x96xf32> -> vector<8x96xf32>
    %c2 = arith.constant 2 : index
    %c0_18 = arith.constant 0 : index
    %24 = vector.load %arg4[%c2, %c0_18] : memref<16x128xf32, #tpu.memory_space<vmem>>, vector<1x96xf32>
    %25 = vector.broadcast %24 : vector<1x96xf32> to vector<8x96xf32>
    %26 = arith.addf %23, %25 : vector<8x96xf32>
    %27 = vector.extract_strided_slice %26 {offsets = [0, 0], sizes = [8, 64], strides = [1, 1]} : vector<8x96xf32> to vector<8x64xf32>
    %28 = vector.extract_strided_slice %26 {offsets = [0, 64], sizes = [8, 32], strides = [1, 1]} : vector<8x96xf32> to vector<8x32xf32>
    %c200 = arith.constant 200 : index
    %c0_19 = arith.constant 0 : index
    %29 = vector.load %arg3[%c200, %c0_19] : memref<560x128xf32, #tpu.memory_space<vmem>>, vector<1x32xf32>
    %c168 = arith.constant 168 : index
    %c0_20 = arith.constant 0 : index
    %30 = vector.load %arg3[%c168, %c0_20] : memref<560x128xf32, #tpu.memory_space<vmem>>, vector<32x32xf32>
    %c104 = arith.constant 104 : index
    %c0_21 = arith.constant 0 : index
    %31 = vector.load %arg3[%c104, %c0_21] : memref<560x128xf32, #tpu.memory_space<vmem>>, vector<32x64xf32>
    %c136 = arith.constant 136 : index
    %c0_22 = arith.constant 0 : index
    %32 = vector.load %arg3[%c136, %c0_22] : memref<560x128xf32, #tpu.memory_space<vmem>>, vector<32x32xf32>
    %c320 = arith.constant 320 : index
    %c0_23 = arith.constant 0 : index
    %33 = vector.load %arg3[%c320, %c0_23] : memref<560x128xf32, #tpu.memory_space<vmem>>, vector<32x64xf32>
    %c352 = arith.constant 352 : index
    %c0_24 = arith.constant 0 : index
    %34 = vector.load %arg3[%c352, %c0_24] : memref<560x128xf32, #tpu.memory_space<vmem>>, vector<32x32xf32>
    %c448 = arith.constant 448 : index
    %c0_25 = arith.constant 0 : index
    %35 = vector.load %arg3[%c448, %c0_25] : memref<560x128xf32, #tpu.memory_space<vmem>>, vector<32x64xf32>
    %c480 = arith.constant 480 : index
    %c0_26 = arith.constant 0 : index
    %36 = vector.load %arg3[%c480, %c0_26] : memref<560x128xf32, #tpu.memory_space<vmem>>, vector<32x32xf32>
    %c512 = arith.constant 512 : index
    %c0_27 = arith.constant 0 : index
    %37 = vector.load %arg3[%c512, %c0_27] : memref<560x128xf32, #tpu.memory_space<vmem>>, vector<32x17xf32>
    %c544 = arith.constant 544 : index
    %c0_28 = arith.constant 0 : index
    %38 = vector.load %arg3[%c544, %c0_28] : memref<560x128xf32, #tpu.memory_space<vmem>>, vector<16x17xf32>
    %cst_29 = arith.constant 0.000000e+00 : f32
    %39 = vector.broadcast %cst_29 : f32 to vector<2x32xf32>
    %cst_30 = arith.constant 0.000000e+00 : f32
    %40 = vector.broadcast %cst_30 : f32 to vector<2x32xf32>
    %cst_31 = arith.constant 0.000000e+00 : f32
    %41 = vector.broadcast %cst_31 : f32 to vector<2x32xf32>
    %cst_32 = arith.constant 0.000000e+00 : f32
    %42 = vector.broadcast %cst_32 : f32 to vector<2x16xf32>
    %43 = vector.extract_strided_slice %27 {offsets = [0, 0], sizes = [2, 64], strides = [1, 1]} : vector<8x64xf32> to vector<2x64xf32>
    %c72 = arith.constant 72 : index
    %c0_33 = arith.constant 0 : index
    %44 = vector.load %arg3[%c72, %c0_33] : memref<560x128xf32, #tpu.memory_space<vmem>>, vector<16x64xf32>
    %cst_34 = arith.constant dense<0.000000e+00> : vector<2x64xf32>
    %45 = tpu.matmul %42, %44, %cst_34 {dimension_numbers = #tpu.dot_dimension_numbers<[1], [0], [0], [1], [0, 0, 1, 1], [], []>} : vector<2x16xf32>, vector<16x64xf32>, vector<2x64xf32> -> vector<2x64xf32>
    %46 = arith.addf %43, %45 : vector<2x64xf32>
    %47 = vector.extract_strided_slice %28 {offsets = [0, 0], sizes = [2, 32], strides = [1, 1]} : vector<8x32xf32> to vector<2x32xf32>
    %c88 = arith.constant 88 : index
    %c0_35 = arith.constant 0 : index
    %48 = vector.load %arg3[%c88, %c0_35] : memref<560x128xf32, #tpu.memory_space<vmem>>, vector<16x32xf32>
    %cst_36 = arith.constant dense<0.000000e+00> : vector<2x32xf32>
    %49 = tpu.matmul %42, %48, %cst_36 {dimension_numbers = #tpu.dot_dimension_numbers<[1], [0], [0], [1], [0, 0, 1, 1], [], []>} : vector<2x16xf32>, vector<16x32xf32>, vector<2x32xf32> -> vector<2x32xf32>
    %50 = arith.addf %47, %49 : vector<2x32xf32>
    %c3 = arith.constant 3 : index
    %c0_37 = arith.constant 0 : index
    %51 = vector.load %arg4[%c3, %c0_37] : memref<16x128xf32, #tpu.memory_space<vmem>>, vector<1x64xf32>
    %c4 = arith.constant 4 : index
    %c0_38 = arith.constant 0 : index
    %52 = vector.load %arg4[%c4, %c0_38] : memref<16x128xf32, #tpu.memory_space<vmem>>, vector<1x32xf32>
    %cst_39 = arith.constant dense<0.000000e+00> : vector<2x64xf32>
    %53 = tpu.matmul %39, %31, %cst_39 {dimension_numbers = #tpu.dot_dimension_numbers<[1], [0], [0], [1], [0, 0, 1, 1], [], []>} : vector<2x32xf32>, vector<32x64xf32>, vector<2x64xf32> -> vector<2x64xf32>
    %54 = vector.broadcast %51 : vector<1x64xf32> to vector<2x64xf32>
    %55 = arith.addf %53, %54 : vector<2x64xf32>
    %cst_40 = arith.constant dense<0.000000e+00> : vector<2x32xf32>
    %56 = tpu.matmul %39, %32, %cst_40 {dimension_numbers = #tpu.dot_dimension_numbers<[1], [0], [0], [1], [0, 0, 1, 1], [], []>} : vector<2x32xf32>, vector<32x32xf32>, vector<2x32xf32> -> vector<2x32xf32>
    %57 = vector.broadcast %52 : vector<1x32xf32> to vector<2x32xf32>
    %58 = arith.addf %56, %57 : vector<2x32xf32>
    %59 = arith.addf %46, %55 : vector<2x64xf32>
    %60 = arith.negf %59 : vector<2x64xf32>
    %61 = math.exp %60 : vector<2x64xf32>
    %cst_41 = arith.constant 1.000000e+00 : f32
    %62 = vector.broadcast %cst_41 : f32 to vector<2x64xf32>
    %63 = arith.addf %62, %61 : vector<2x64xf32>
    %64 = arith.divf %62, %63 : vector<2x64xf32>
    %65 = vector.extract_strided_slice %64 {offsets = [0, 0], sizes = [2, 32], strides = [1, 1]} : vector<2x64xf32> to vector<2x32xf32>
    %66 = vector.extract_strided_slice %64 {offsets = [0, 32], sizes = [2, 32], strides = [1, 1]} : vector<2x64xf32> to vector<2x32xf32>
    %67 = arith.mulf %65, %58 : vector<2x32xf32>
    %68 = arith.addf %50, %67 : vector<2x32xf32>
    %69 = math.tanh %68 : vector<2x32xf32>
    %cst_42 = arith.constant 1.000000e+00 : f32
    %70 = vector.broadcast %cst_42 : f32 to vector<2x32xf32>
    %71 = arith.subf %70, %66 : vector<2x32xf32>
    %72 = arith.mulf %71, %69 : vector<2x32xf32>
    %73 = arith.mulf %66, %39 : vector<2x32xf32>
    %74 = arith.addf %72, %73 : vector<2x32xf32>
    %cst_43 = arith.constant dense<0.000000e+00> : vector<2x32xf32>
    %75 = tpu.matmul %74, %30, %cst_43 {dimension_numbers = #tpu.dot_dimension_numbers<[1], [0], [0], [1], [0, 0, 1, 1], [], []>} : vector<2x32xf32>, vector<32x32xf32>, vector<2x32xf32> -> vector<2x32xf32>
    %76 = vector.shape_cast %75 : vector<2x32xf32> to vector<2x1x32xf32>
    %77 = vector.broadcast %76 : vector<2x1x32xf32> to vector<2x8x32xf32>
    %78 = arith.addf %77, %4 : vector<2x8x32xf32>
    %79 = math.tanh %78 : vector<2x8x32xf32>
    %80 = vector.shape_cast %29 : vector<1x32xf32> to vector<1x1x32xf32>
    %81 = vector.broadcast %80 : vector<1x1x32xf32> to vector<2x8x32xf32>
    %82 = arith.mulf %79, %81 : vector<2x8x32xf32>
    %cst_44 = arith.constant dense<0.000000e+00> : vector<2x8xf32>
    %83 = vector.multi_reduction <add>, %82, %cst_44 [2] : vector<2x8x32xf32> to vector<2x8xf32>
    %cst_45 = arith.constant dense<0xFF800000> : vector<2xf32>
    %84 = vector.multi_reduction <maximumf>, %83, %cst_45 [1] : vector<2x8xf32> to vector<2xf32>
    %85 = vector.shape_cast %84 : vector<2xf32> to vector<2x1xf32>
    %86 = vector.broadcast %85 : vector<2x1xf32> to vector<2x8xf32>
    %87 = arith.subf %83, %86 : vector<2x8xf32>
    %88 = math.exp %87 : vector<2x8xf32>
    %cst_46 = arith.constant dense<0.000000e+00> : vector<2xf32>
    %89 = vector.multi_reduction <add>, %88, %cst_46 [1] : vector<2x8xf32> to vector<2xf32>
    %90 = vector.shape_cast %89 : vector<2xf32> to vector<2x1xf32>
    %91 = tpu.reciprocal %90 {approx = true} : vector<2x1xf32> -> vector<2x1xf32>
    %92 = vector.broadcast %91 : vector<2x1xf32> to vector<2x8xf32>
    %93 = arith.mulf %88, %92 : vector<2x8xf32>
    %94 = vector.shape_cast %93 : vector<2x8xf32> to vector<2x8x1xf32>
    %95 = vector.broadcast %94 : vector<2x8x1xf32> to vector<2x8x16xf32>
    %96 = arith.mulf %95, %0 : vector<2x8x16xf32>
    %cst_47 = arith.constant dense<0.000000e+00> : vector<2x16xf32>
    %97 = vector.multi_reduction <add>, %96, %cst_47 [1] : vector<2x8x16xf32> to vector<2x16xf32>
    %c208 = arith.constant 208 : index
    %c0_48 = arith.constant 0 : index
    %98 = vector.load %arg3[%c208, %c0_48] : memref<560x128xf32, #tpu.memory_space<vmem>>, vector<32x32xf32>
    %cst_49 = arith.constant dense<0.000000e+00> : vector<2x32xf32>
    %99 = tpu.matmul %74, %98, %cst_49 {dimension_numbers = #tpu.dot_dimension_numbers<[1], [0], [0], [1], [0, 0, 1, 1], [], []>} : vector<2x32xf32>, vector<32x32xf32>, vector<2x32xf32> -> vector<2x32xf32>
    %c240 = arith.constant 240 : index
    %c0_50 = arith.constant 0 : index
    %100 = vector.load %arg3[%c240, %c0_50] : memref<560x128xf32, #tpu.memory_space<vmem>>, vector<16x32xf32>
    %cst_51 = arith.constant dense<0.000000e+00> : vector<2x32xf32>
    %101 = tpu.matmul %97, %100, %cst_51 {dimension_numbers = #tpu.dot_dimension_numbers<[1], [0], [0], [1], [0, 0, 1, 1], [], []>} : vector<2x16xf32>, vector<16x32xf32>, vector<2x32xf32> -> vector<2x32xf32>
    %102 = arith.addf %99, %101 : vector<2x32xf32>
    %c5 = arith.constant 5 : index
    %c0_52 = arith.constant 0 : index
    %103 = vector.load %arg4[%c5, %c0_52] : memref<16x128xf32, #tpu.memory_space<vmem>>, vector<1x32xf32>
    %104 = vector.broadcast %103 : vector<1x32xf32> to vector<2x32xf32>
    %105 = arith.addf %102, %104 : vector<2x32xf32>
    %c256 = arith.constant 256 : index
    %c0_53 = arith.constant 0 : index
    %106 = vector.load %arg3[%c256, %c0_53] : memref<560x128xf32, #tpu.memory_space<vmem>>, vector<32x64xf32>
    %cst_54 = arith.constant dense<0.000000e+00> : vector<2x64xf32>
    %107 = tpu.matmul %105, %106, %cst_54 {dimension_numbers = #tpu.dot_dimension_numbers<[1], [0], [0], [1], [0, 0, 1, 1], [], []>} : vector<2x32xf32>, vector<32x64xf32>, vector<2x64xf32> -> vector<2x64xf32>
    %c6 = arith.constant 6 : index
    %c0_55 = arith.constant 0 : index
    %108 = vector.load %arg4[%c6, %c0_55] : memref<16x128xf32, #tpu.memory_space<vmem>>, vector<1x64xf32>
    %109 = vector.broadcast %108 : vector<1x64xf32> to vector<2x64xf32>
    %110 = arith.addf %107, %109 : vector<2x64xf32>
    %c288 = arith.constant 288 : index
    %c0_56 = arith.constant 0 : index
    %111 = vector.load %arg3[%c288, %c0_56] : memref<560x128xf32, #tpu.memory_space<vmem>>, vector<32x32xf32>
    %cst_57 = arith.constant dense<0.000000e+00> : vector<2x32xf32>
    %112 = tpu.matmul %105, %111, %cst_57 {dimension_numbers = #tpu.dot_dimension_numbers<[1], [0], [0], [1], [0, 0, 1, 1], [], []>} : vector<2x32xf32>, vector<32x32xf32>, vector<2x32xf32> -> vector<2x32xf32>
    %c7 = arith.constant 7 : index
    %c0_58 = arith.constant 0 : index
    %113 = vector.load %arg4[%c7, %c0_58] : memref<16x128xf32, #tpu.memory_space<vmem>>, vector<1x32xf32>
    %114 = vector.broadcast %113 : vector<1x32xf32> to vector<2x32xf32>
    %115 = arith.addf %112, %114 : vector<2x32xf32>
    %c8 = arith.constant 8 : index
    %c0_59 = arith.constant 0 : index
    %116 = vector.load %arg4[%c8, %c0_59] : memref<16x128xf32, #tpu.memory_space<vmem>>, vector<1x64xf32>
    %c9 = arith.constant 9 : index
    %c0_60 = arith.constant 0 : index
    %117 = vector.load %arg4[%c9, %c0_60] : memref<16x128xf32, #tpu.memory_space<vmem>>, vector<1x32xf32>
    %cst_61 = arith.constant dense<0.000000e+00> : vector<2x64xf32>
    %118 = tpu.matmul %40, %33, %cst_61 {dimension_numbers = #tpu.dot_dimension_numbers<[1], [0], [0], [1], [0, 0, 1, 1], [], []>} : vector<2x32xf32>, vector<32x64xf32>, vector<2x64xf32> -> vector<2x64xf32>
    %119 = vector.broadcast %116 : vector<1x64xf32> to vector<2x64xf32>
    %120 = arith.addf %118, %119 : vector<2x64xf32>
    %cst_62 = arith.constant dense<0.000000e+00> : vector<2x32xf32>
    %121 = tpu.matmul %40, %34, %cst_62 {dimension_numbers = #tpu.dot_dimension_numbers<[1], [0], [0], [1], [0, 0, 1, 1], [], []>} : vector<2x32xf32>, vector<32x32xf32>, vector<2x32xf32> -> vector<2x32xf32>
    %122 = vector.broadcast %117 : vector<1x32xf32> to vector<2x32xf32>
    %123 = arith.addf %121, %122 : vector<2x32xf32>
    %124 = arith.addf %110, %120 : vector<2x64xf32>
    %125 = arith.negf %124 : vector<2x64xf32>
    %126 = math.exp %125 : vector<2x64xf32>
    %cst_63 = arith.constant 1.000000e+00 : f32
    %127 = vector.broadcast %cst_63 : f32 to vector<2x64xf32>
    %128 = arith.addf %127, %126 : vector<2x64xf32>
    %129 = arith.divf %127, %128 : vector<2x64xf32>
    %130 = vector.extract_strided_slice %129 {offsets = [0, 0], sizes = [2, 32], strides = [1, 1]} : vector<2x64xf32> to vector<2x32xf32>
    %131 = vector.extract_strided_slice %129 {offsets = [0, 32], sizes = [2, 32], strides = [1, 1]} : vector<2x64xf32> to vector<2x32xf32>
    %132 = arith.mulf %130, %123 : vector<2x32xf32>
    %133 = arith.addf %115, %132 : vector<2x32xf32>
    %134 = math.tanh %133 : vector<2x32xf32>
    %cst_64 = arith.constant 1.000000e+00 : f32
    %135 = vector.broadcast %cst_64 : f32 to vector<2x32xf32>
    %136 = arith.subf %135, %131 : vector<2x32xf32>
    %137 = arith.mulf %136, %134 : vector<2x32xf32>
    %138 = arith.mulf %131, %40 : vector<2x32xf32>
    %139 = arith.addf %137, %138 : vector<2x32xf32>
    %140 = arith.addf %139, %105 : vector<2x32xf32>
    %c384 = arith.constant 384 : index
    %c0_65 = arith.constant 0 : index
    %141 = vector.load %arg3[%c384, %c0_65] : memref<560x128xf32, #tpu.memory_space<vmem>>, vector<32x64xf32>
    %cst_66 = arith.constant dense<0.000000e+00> : vector<2x64xf32>
    %142 = tpu.matmul %140, %141, %cst_66 {dimension_numbers = #tpu.dot_dimension_numbers<[1], [0], [0], [1], [0, 0, 1, 1], [], []>} : vector<2x32xf32>, vector<32x64xf32>, vector<2x64xf32> -> vector<2x64xf32>
    %c10 = arith.constant 10 : index
    %c0_67 = arith.constant 0 : index
    %143 = vector.load %arg4[%c10, %c0_67] : memref<16x128xf32, #tpu.memory_space<vmem>>, vector<1x64xf32>
    %144 = vector.broadcast %143 : vector<1x64xf32> to vector<2x64xf32>
    %145 = arith.addf %142, %144 : vector<2x64xf32>
    %c416 = arith.constant 416 : index
    %c0_68 = arith.constant 0 : index
    %146 = vector.load %arg3[%c416, %c0_68] : memref<560x128xf32, #tpu.memory_space<vmem>>, vector<32x32xf32>
    %cst_69 = arith.constant dense<0.000000e+00> : vector<2x32xf32>
    %147 = tpu.matmul %140, %146, %cst_69 {dimension_numbers = #tpu.dot_dimension_numbers<[1], [0], [0], [1], [0, 0, 1, 1], [], []>} : vector<2x32xf32>, vector<32x32xf32>, vector<2x32xf32> -> vector<2x32xf32>
    %c11 = arith.constant 11 : index
    %c0_70 = arith.constant 0 : index
    %148 = vector.load %arg4[%c11, %c0_70] : memref<16x128xf32, #tpu.memory_space<vmem>>, vector<1x32xf32>
    %149 = vector.broadcast %148 : vector<1x32xf32> to vector<2x32xf32>
    %150 = arith.addf %147, %149 : vector<2x32xf32>
    %c12 = arith.constant 12 : index
    %c0_71 = arith.constant 0 : index
    %151 = vector.load %arg4[%c12, %c0_71] : memref<16x128xf32, #tpu.memory_space<vmem>>, vector<1x64xf32>
    %c13 = arith.constant 13 : index
    %c0_72 = arith.constant 0 : index
    %152 = vector.load %arg4[%c13, %c0_72] : memref<16x128xf32, #tpu.memory_space<vmem>>, vector<1x32xf32>
    %cst_73 = arith.constant dense<0.000000e+00> : vector<2x64xf32>
    %153 = tpu.matmul %41, %35, %cst_73 {dimension_numbers = #tpu.dot_dimension_numbers<[1], [0], [0], [1], [0, 0, 1, 1], [], []>} : vector<2x32xf32>, vector<32x64xf32>, vector<2x64xf32> -> vector<2x64xf32>
    %154 = vector.broadcast %151 : vector<1x64xf32> to vector<2x64xf32>
    %155 = arith.addf %153, %154 : vector<2x64xf32>
    %cst_74 = arith.constant dense<0.000000e+00> : vector<2x32xf32>
    %156 = tpu.matmul %41, %36, %cst_74 {dimension_numbers = #tpu.dot_dimension_numbers<[1], [0], [0], [1], [0, 0, 1, 1], [], []>} : vector<2x32xf32>, vector<32x32xf32>, vector<2x32xf32> -> vector<2x32xf32>
    %157 = vector.broadcast %152 : vector<1x32xf32> to vector<2x32xf32>
    %158 = arith.addf %156, %157 : vector<2x32xf32>
    %159 = arith.addf %145, %155 : vector<2x64xf32>
    %160 = arith.negf %159 : vector<2x64xf32>
    %161 = math.exp %160 : vector<2x64xf32>
    %cst_75 = arith.constant 1.000000e+00 : f32
    %162 = vector.broadcast %cst_75 : f32 to vector<2x64xf32>
    %163 = arith.addf %162, %161 : vector<2x64xf32>
    %164 = arith.divf %162, %163 : vector<2x64xf32>
    %165 = vector.extract_strided_slice %164 {offsets = [0, 0], sizes = [2, 32], strides = [1, 1]} : vector<2x64xf32> to vector<2x32xf32>
    %166 = vector.extract_strided_slice %164 {offsets = [0, 32], sizes = [2, 32], strides = [1, 1]} : vector<2x64xf32> to vector<2x32xf32>
    %167 = arith.mulf %165, %158 : vector<2x32xf32>
    %168 = arith.addf %150, %167 : vector<2x32xf32>
    %169 = math.tanh %168 : vector<2x32xf32>
    %cst_76 = arith.constant 1.000000e+00 : f32
    %170 = vector.broadcast %cst_76 : f32 to vector<2x32xf32>
    %171 = arith.subf %170, %166 : vector<2x32xf32>
    %172 = arith.mulf %171, %169 : vector<2x32xf32>
    %173 = arith.mulf %166, %41 : vector<2x32xf32>
    %174 = arith.addf %172, %173 : vector<2x32xf32>
    %175 = arith.addf %174, %140 : vector<2x32xf32>
    %cst_77 = arith.constant dense<0.000000e+00> : vector<2x17xf32>
    %176 = tpu.matmul %175, %37, %cst_77 {dimension_numbers = #tpu.dot_dimension_numbers<[1], [0], [0], [1], [0, 0, 1, 1], [], []>} : vector<2x32xf32>, vector<32x17xf32>, vector<2x17xf32> -> vector<2x17xf32>
    %cst_78 = arith.constant dense<0.000000e+00> : vector<2x17xf32>
    %177 = tpu.matmul %97, %38, %cst_78 {dimension_numbers = #tpu.dot_dimension_numbers<[1], [0], [0], [1], [0, 0, 1, 1], [], []>} : vector<2x16xf32>, vector<16x17xf32>, vector<2x17xf32> -> vector<2x17xf32>
    %178 = arith.addf %176, %177 : vector<2x17xf32>
    %c14 = arith.constant 14 : index
    %c0_79 = arith.constant 0 : index
    %179 = vector.load %arg4[%c14, %c0_79] : memref<16x128xf32, #tpu.memory_space<vmem>>, vector<1x17xf32>
    %180 = vector.broadcast %179 : vector<1x17xf32> to vector<2x17xf32>
    %181 = arith.addf %178, %180 : vector<2x17xf32>
    %182 = vector.extract_strided_slice %181 {offsets = [0, 0], sizes = [2, 16], strides = [1, 1]} : vector<2x17xf32> to vector<2x16xf32>
    %c0_80 = arith.constant 0 : index
    %c0_81 = arith.constant 0 : index
    %c0_82 = arith.constant 0 : index
    %183 = vector.load %arg5[%c0_80, %c0_81, %c0_82] : memref<2x4x16xf32, #tpu.memory_space<vmem>>, vector<2x1x16xf32>
    %184 = vector.shape_cast %183 : vector<2x1x16xf32> to vector<2x16xf32>
    %185 = vector.shape_cast %182 : vector<2x16xf32> to vector<2x1x16xf32>
    tpu.vector_store %arg5[%c0_80, %c0_81, %c0_82], %185 {strides = array<i32>} : memref<2x4x16xf32, #tpu.memory_space<vmem>>, vector<2x1x16xf32>,
    %186 = vector.extract_strided_slice %181 {offsets = [0, 16], sizes = [2, 1], strides = [1, 1]} : vector<2x17xf32> to vector<2x1xf32>
    %187 = arith.negf %186 : vector<2x1xf32>
    %188 = math.exp %187 : vector<2x1xf32>
    %cst_83 = arith.constant 1.000000e+00 : f32
    %189 = vector.broadcast %cst_83 : f32 to vector<2x1xf32>
    %190 = arith.addf %189, %188 : vector<2x1xf32>
    %191 = arith.divf %189, %190 : vector<2x1xf32>
    %c0_84 = arith.constant 0 : index
    %c0_85 = arith.constant 0 : index
    %c0_86 = arith.constant 0 : index
    %192 = vector.load %arg7[%c0_84, %c0_85, %c0_86] : memref<2x4x1xf32, #tpu.memory_space<vmem>>, vector<2x1x1xf32>
    %193 = vector.shape_cast %192 : vector<2x1x1xf32> to vector<2x1xf32>
    %194 = vector.shape_cast %191 : vector<2x1xf32> to vector<2x1x1xf32>
    tpu.vector_store %arg7[%c0_84, %c0_85, %c0_86], %194 {strides = array<i32>} : memref<2x4x1xf32, #tpu.memory_space<vmem>>, vector<2x1x1xf32>,
    %c0_87 = arith.constant 0 : index
    %c0_88 = arith.constant 0 : index
    %c0_89 = arith.constant 0 : index
    %195 = vector.load %arg6[%c0_87, %c0_88, %c0_89] : memref<2x4x8xf32, #tpu.memory_space<vmem>>, vector<2x1x8xf32>
    %196 = vector.shape_cast %195 : vector<2x1x8xf32> to vector<2x8xf32>
    %197 = vector.shape_cast %93 : vector<2x8xf32> to vector<2x1x8xf32>
    tpu.vector_store %arg6[%c0_87, %c0_88, %c0_89], %197 {strides = array<i32>} : memref<2x4x8xf32, #tpu.memory_space<vmem>>, vector<2x1x8xf32>,
    %198 = vector.extract_strided_slice %27 {offsets = [2, 0], sizes = [2, 64], strides = [1, 1]} : vector<8x64xf32> to vector<2x64xf32>
    %c72_90 = arith.constant 72 : index
    %c0_91 = arith.constant 0 : index
    %199 = vector.load %arg3[%c72_90, %c0_91] : memref<560x128xf32, #tpu.memory_space<vmem>>, vector<16x64xf32>
    %cst_92 = arith.constant dense<0.000000e+00> : vector<2x64xf32>
    %200 = tpu.matmul %97, %199, %cst_92 {dimension_numbers = #tpu.dot_dimension_numbers<[1], [0], [0], [1], [0, 0, 1, 1], [], []>} : vector<2x16xf32>, vector<16x64xf32>, vector<2x64xf32> -> vector<2x64xf32>
    %201 = arith.addf %198, %200 : vector<2x64xf32>
    %202 = vector.extract_strided_slice %28 {offsets = [2, 0], sizes = [2, 32], strides = [1, 1]} : vector<8x32xf32> to vector<2x32xf32>
    %c88_93 = arith.constant 88 : index
    %c0_94 = arith.constant 0 : index
    %203 = vector.load %arg3[%c88_93, %c0_94] : memref<560x128xf32, #tpu.memory_space<vmem>>, vector<16x32xf32>
    %cst_95 = arith.constant dense<0.000000e+00> : vector<2x32xf32>
    %204 = tpu.matmul %97, %203, %cst_95 {dimension_numbers = #tpu.dot_dimension_numbers<[1], [0], [0], [1], [0, 0, 1, 1], [], []>} : vector<2x16xf32>, vector<16x32xf32>, vector<2x32xf32> -> vector<2x32xf32>
    %205 = arith.addf %202, %204 : vector<2x32xf32>
    %c3_96 = arith.constant 3 : index
    %c0_97 = arith.constant 0 : index
    %206 = vector.load %arg4[%c3_96, %c0_97] : memref<16x128xf32, #tpu.memory_space<vmem>>, vector<1x64xf32>
    %c4_98 = arith.constant 4 : index
    %c0_99 = arith.constant 0 : index
    %207 = vector.load %arg4[%c4_98, %c0_99] : memref<16x128xf32, #tpu.memory_space<vmem>>, vector<1x32xf32>
    %cst_100 = arith.constant dense<0.000000e+00> : vector<2x64xf32>
    %208 = tpu.matmul %74, %31, %cst_100 {dimension_numbers = #tpu.dot_dimension_numbers<[1], [0], [0], [1], [0, 0, 1, 1], [], []>} : vector<2x32xf32>, vector<32x64xf32>, vector<2x64xf32> -> vector<2x64xf32>
    %209 = vector.broadcast %206 : vector<1x64xf32> to vector<2x64xf32>
    %210 = arith.addf %208, %209 : vector<2x64xf32>
    %cst_101 = arith.constant dense<0.000000e+00> : vector<2x32xf32>
    %211 = tpu.matmul %74, %32, %cst_101 {dimension_numbers = #tpu.dot_dimension_numbers<[1], [0], [0], [1], [0, 0, 1, 1], [], []>} : vector<2x32xf32>, vector<32x32xf32>, vector<2x32xf32> -> vector<2x32xf32>
    %212 = vector.broadcast %207 : vector<1x32xf32> to vector<2x32xf32>
    %213 = arith.addf %211, %212 : vector<2x32xf32>
    %214 = arith.addf %201, %210 : vector<2x64xf32>
    %215 = arith.negf %214 : vector<2x64xf32>
    %216 = math.exp %215 : vector<2x64xf32>
    %cst_102 = arith.constant 1.000000e+00 : f32
    %217 = vector.broadcast %cst_102 : f32 to vector<2x64xf32>
    %218 = arith.addf %217, %216 : vector<2x64xf32>
    %219 = arith.divf %217, %218 : vector<2x64xf32>
    %220 = vector.extract_strided_slice %219 {offsets = [0, 0], sizes = [2, 32], strides = [1, 1]} : vector<2x64xf32> to vector<2x32xf32>
    %221 = vector.extract_strided_slice %219 {offsets = [0, 32], sizes = [2, 32], strides = [1, 1]} : vector<2x64xf32> to vector<2x32xf32>
    %222 = arith.mulf %220, %213 : vector<2x32xf32>
    %223 = arith.addf %205, %222 : vector<2x32xf32>
    %224 = math.tanh %223 : vector<2x32xf32>
    %cst_103 = arith.constant 1.000000e+00 : f32
    %225 = vector.broadcast %cst_103 : f32 to vector<2x32xf32>
    %226 = arith.subf %225, %221 : vector<2x32xf32>
    %227 = arith.mulf %226, %224 : vector<2x32xf32>
    %228 = arith.mulf %221, %74 : vector<2x32xf32>
    %229 = arith.addf %227, %228 : vector<2x32xf32>
    %cst_104 = arith.constant dense<0.000000e+00> : vector<2x32xf32>
    %230 = tpu.matmul %229, %30, %cst_104 {dimension_numbers = #tpu.dot_dimension_numbers<[1], [0], [0], [1], [0, 0, 1, 1], [], []>} : vector<2x32xf32>, vector<32x32xf32>, vector<2x32xf32> -> vector<2x32xf32>
    %231 = vector.shape_cast %230 : vector<2x32xf32> to vector<2x1x32xf32>
    %232 = vector.broadcast %231 : vector<2x1x32xf32> to vector<2x8x32xf32>
    %233 = arith.addf %232, %4 : vector<2x8x32xf32>
    %234 = math.tanh %233 : vector<2x8x32xf32>
    %235 = vector.shape_cast %29 : vector<1x32xf32> to vector<1x1x32xf32>
    %236 = vector.broadcast %235 : vector<1x1x32xf32> to vector<2x8x32xf32>
    %237 = arith.mulf %234, %236 : vector<2x8x32xf32>
    %cst_105 = arith.constant dense<0.000000e+00> : vector<2x8xf32>
    %238 = vector.multi_reduction <add>, %237, %cst_105 [2] : vector<2x8x32xf32> to vector<2x8xf32>
    %cst_106 = arith.constant dense<0xFF800000> : vector<2xf32>
    %239 = vector.multi_reduction <maximumf>, %238, %cst_106 [1] : vector<2x8xf32> to vector<2xf32>
    %240 = vector.shape_cast %239 : vector<2xf32> to vector<2x1xf32>
    %241 = vector.broadcast %240 : vector<2x1xf32> to vector<2x8xf32>
    %242 = arith.subf %238, %241 : vector<2x8xf32>
    %243 = math.exp %242 : vector<2x8xf32>
    %cst_107 = arith.constant dense<0.000000e+00> : vector<2xf32>
    %244 = vector.multi_reduction <add>, %243, %cst_107 [1] : vector<2x8xf32> to vector<2xf32>
    %245 = vector.shape_cast %244 : vector<2xf32> to vector<2x1xf32>
    %246 = tpu.reciprocal %245 {approx = true} : vector<2x1xf32> -> vector<2x1xf32>
    %247 = vector.broadcast %246 : vector<2x1xf32> to vector<2x8xf32>
    %248 = arith.mulf %243, %247 : vector<2x8xf32>
    %249 = vector.shape_cast %248 : vector<2x8xf32> to vector<2x8x1xf32>
    %250 = vector.broadcast %249 : vector<2x8x1xf32> to vector<2x8x16xf32>
    %251 = arith.mulf %250, %0 : vector<2x8x16xf32>
    %cst_108 = arith.constant dense<0.000000e+00> : vector<2x16xf32>
    %252 = vector.multi_reduction <add>, %251, %cst_108 [1] : vector<2x8x16xf32> to vector<2x16xf32>
    %c208_109 = arith.constant 208 : index
    %c0_110 = arith.constant 0 : index
    %253 = vector.load %arg3[%c208_109, %c0_110] : memref<560x128xf32, #tpu.memory_space<vmem>>, vector<32x32xf32>
    %cst_111 = arith.constant dense<0.000000e+00> : vector<2x32xf32>
    %254 = tpu.matmul %229, %253, %cst_111 {dimension_numbers = #tpu.dot_dimension_numbers<[1], [0], [0], [1], [0, 0, 1, 1], [], []>} : vector<2x32xf32>, vector<32x32xf32>, vector<2x32xf32> -> vector<2x32xf32>
    %c240_112 = arith.constant 240 : index
    %c0_113 = arith.constant 0 : index
    %255 = vector.load %arg3[%c240_112, %c0_113] : memref<560x128xf32, #tpu.memory_space<vmem>>, vector<16x32xf32>
    %cst_114 = arith.constant dense<0.000000e+00> : vector<2x32xf32>
    %256 = tpu.matmul %252, %255, %cst_114 {dimension_numbers = #tpu.dot_dimension_numbers<[1], [0], [0], [1], [0, 0, 1, 1], [], []>} : vector<2x16xf32>, vector<16x32xf32>, vector<2x32xf32> -> vector<2x32xf32>
    %257 = arith.addf %254, %256 : vector<2x32xf32>
    %c5_115 = arith.constant 5 : index
    %c0_116 = arith.constant 0 : index
    %258 = vector.load %arg4[%c5_115, %c0_116] : memref<16x128xf32, #tpu.memory_space<vmem>>, vector<1x32xf32>
    %259 = vector.broadcast %258 : vector<1x32xf32> to vector<2x32xf32>
    %260 = arith.addf %257, %259 : vector<2x32xf32>
    %c256_117 = arith.constant 256 : index
    %c0_118 = arith.constant 0 : index
    %261 = vector.load %arg3[%c256_117, %c0_118] : memref<560x128xf32, #tpu.memory_space<vmem>>, vector<32x64xf32>
    %cst_119 = arith.constant dense<0.000000e+00> : vector<2x64xf32>
    %262 = tpu.matmul %260, %261, %cst_119 {dimension_numbers = #tpu.dot_dimension_numbers<[1], [0], [0], [1], [0, 0, 1, 1], [], []>} : vector<2x32xf32>, vector<32x64xf32>, vector<2x64xf32> -> vector<2x64xf32>
    %c6_120 = arith.constant 6 : index
    %c0_121 = arith.constant 0 : index
    %263 = vector.load %arg4[%c6_120, %c0_121] : memref<16x128xf32, #tpu.memory_space<vmem>>, vector<1x64xf32>
    %264 = vector.broadcast %263 : vector<1x64xf32> to vector<2x64xf32>
    %265 = arith.addf %262, %264 : vector<2x64xf32>
    %c288_122 = arith.constant 288 : index
    %c0_123 = arith.constant 0 : index
    %266 = vector.load %arg3[%c288_122, %c0_123] : memref<560x128xf32, #tpu.memory_space<vmem>>, vector<32x32xf32>
    %cst_124 = arith.constant dense<0.000000e+00> : vector<2x32xf32>
    %267 = tpu.matmul %260, %266, %cst_124 {dimension_numbers = #tpu.dot_dimension_numbers<[1], [0], [0], [1], [0, 0, 1, 1], [], []>} : vector<2x32xf32>, vector<32x32xf32>, vector<2x32xf32> -> vector<2x32xf32>
    %c7_125 = arith.constant 7 : index
    %c0_126 = arith.constant 0 : index
    %268 = vector.load %arg4[%c7_125, %c0_126] : memref<16x128xf32, #tpu.memory_space<vmem>>, vector<1x32xf32>
    %269 = vector.broadcast %268 : vector<1x32xf32> to vector<2x32xf32>
    %270 = arith.addf %267, %269 : vector<2x32xf32>
    %c8_127 = arith.constant 8 : index
    %c0_128 = arith.constant 0 : index
    %271 = vector.load %arg4[%c8_127, %c0_128] : memref<16x128xf32, #tpu.memory_space<vmem>>, vector<1x64xf32>
    %c9_129 = arith.constant 9 : index
    %c0_130 = arith.constant 0 : index
    %272 = vector.load %arg4[%c9_129, %c0_130] : memref<16x128xf32, #tpu.memory_space<vmem>>, vector<1x32xf32>
    %cst_131 = arith.constant dense<0.000000e+00> : vector<2x64xf32>
    %273 = tpu.matmul %139, %33, %cst_131 {dimension_numbers = #tpu.dot_dimension_numbers<[1], [0], [0], [1], [0, 0, 1, 1], [], []>} : vector<2x32xf32>, vector<32x64xf32>, vector<2x64xf32> -> vector<2x64xf32>
    %274 = vector.broadcast %271 : vector<1x64xf32> to vector<2x64xf32>
    %275 = arith.addf %273, %274 : vector<2x64xf32>
    %cst_132 = arith.constant dense<0.000000e+00> : vector<2x32xf32>
    %276 = tpu.matmul %139, %34, %cst_132 {dimension_numbers = #tpu.dot_dimension_numbers<[1], [0], [0], [1], [0, 0, 1, 1], [], []>} : vector<2x32xf32>, vector<32x32xf32>, vector<2x32xf32> -> vector<2x32xf32>
    %277 = vector.broadcast %272 : vector<1x32xf32> to vector<2x32xf32>
    %278 = arith.addf %276, %277 : vector<2x32xf32>
    %279 = arith.addf %265, %275 : vector<2x64xf32>
    %280 = arith.negf %279 : vector<2x64xf32>
    %281 = math.exp %280 : vector<2x64xf32>
    %cst_133 = arith.constant 1.000000e+00 : f32
    %282 = vector.broadcast %cst_133 : f32 to vector<2x64xf32>
    %283 = arith.addf %282, %281 : vector<2x64xf32>
    %284 = arith.divf %282, %283 : vector<2x64xf32>
    %285 = vector.extract_strided_slice %284 {offsets = [0, 0], sizes = [2, 32], strides = [1, 1]} : vector<2x64xf32> to vector<2x32xf32>
    %286 = vector.extract_strided_slice %284 {offsets = [0, 32], sizes = [2, 32], strides = [1, 1]} : vector<2x64xf32> to vector<2x32xf32>
    %287 = arith.mulf %285, %278 : vector<2x32xf32>
    %288 = arith.addf %270, %287 : vector<2x32xf32>
    %289 = math.tanh %288 : vector<2x32xf32>
    %cst_134 = arith.constant 1.000000e+00 : f32
    %290 = vector.broadcast %cst_134 : f32 to vector<2x32xf32>
    %291 = arith.subf %290, %286 : vector<2x32xf32>
    %292 = arith.mulf %291, %289 : vector<2x32xf32>
    %293 = arith.mulf %286, %139 : vector<2x32xf32>
    %294 = arith.addf %292, %293 : vector<2x32xf32>
    %295 = arith.addf %294, %260 : vector<2x32xf32>
    %c384_135 = arith.constant 384 : index
    %c0_136 = arith.constant 0 : index
    %296 = vector.load %arg3[%c384_135, %c0_136] : memref<560x128xf32, #tpu.memory_space<vmem>>, vector<32x64xf32>
    %cst_137 = arith.constant dense<0.000000e+00> : vector<2x64xf32>
    %297 = tpu.matmul %295, %296, %cst_137 {dimension_numbers = #tpu.dot_dimension_numbers<[1], [0], [0], [1], [0, 0, 1, 1], [], []>} : vector<2x32xf32>, vector<32x64xf32>, vector<2x64xf32> -> vector<2x64xf32>
    %c10_138 = arith.constant 10 : index
    %c0_139 = arith.constant 0 : index
    %298 = vector.load %arg4[%c10_138, %c0_139] : memref<16x128xf32, #tpu.memory_space<vmem>>, vector<1x64xf32>
    %299 = vector.broadcast %298 : vector<1x64xf32> to vector<2x64xf32>
    %300 = arith.addf %297, %299 : vector<2x64xf32>
    %c416_140 = arith.constant 416 : index
    %c0_141 = arith.constant 0 : index
    %301 = vector.load %arg3[%c416_140, %c0_141] : memref<560x128xf32, #tpu.memory_space<vmem>>, vector<32x32xf32>
    %cst_142 = arith.constant dense<0.000000e+00> : vector<2x32xf32>
    %302 = tpu.matmul %295, %301, %cst_142 {dimension_numbers = #tpu.dot_dimension_numbers<[1], [0], [0], [1], [0, 0, 1, 1], [], []>} : vector<2x32xf32>, vector<32x32xf32>, vector<2x32xf32> -> vector<2x32xf32>
    %c11_143 = arith.constant 11 : index
    %c0_144 = arith.constant 0 : index
    %303 = vector.load %arg4[%c11_143, %c0_144] : memref<16x128xf32, #tpu.memory_space<vmem>>, vector<1x32xf32>
    %304 = vector.broadcast %303 : vector<1x32xf32> to vector<2x32xf32>
    %305 = arith.addf %302, %304 : vector<2x32xf32>
    %c12_145 = arith.constant 12 : index
    %c0_146 = arith.constant 0 : index
    %306 = vector.load %arg4[%c12_145, %c0_146] : memref<16x128xf32, #tpu.memory_space<vmem>>, vector<1x64xf32>
    %c13_147 = arith.constant 13 : index
    %c0_148 = arith.constant 0 : index
    %307 = vector.load %arg4[%c13_147, %c0_148] : memref<16x128xf32, #tpu.memory_space<vmem>>, vector<1x32xf32>
    %cst_149 = arith.constant dense<0.000000e+00> : vector<2x64xf32>
    %308 = tpu.matmul %174, %35, %cst_149 {dimension_numbers = #tpu.dot_dimension_numbers<[1], [0], [0], [1], [0, 0, 1, 1], [], []>} : vector<2x32xf32>, vector<32x64xf32>, vector<2x64xf32> -> vector<2x64xf32>
    %309 = vector.broadcast %306 : vector<1x64xf32> to vector<2x64xf32>
    %310 = arith.addf %308, %309 : vector<2x64xf32>
    %cst_150 = arith.constant dense<0.000000e+00> : vector<2x32xf32>
    %311 = tpu.matmul %174, %36, %cst_150 {dimension_numbers = #tpu.dot_dimension_numbers<[1], [0], [0], [1], [0, 0, 1, 1], [], []>} : vector<2x32xf32>, vector<32x32xf32>, vector<2x32xf32> -> vector<2x32xf32>
    %312 = vector.broadcast %307 : vector<1x32xf32> to vector<2x32xf32>
    %313 = arith.addf %311, %312 : vector<2x32xf32>
    %314 = arith.addf %300, %310 : vector<2x64xf32>
    %315 = arith.negf %314 : vector<2x64xf32>
    %316 = math.exp %315 : vector<2x64xf32>
    %cst_151 = arith.constant 1.000000e+00 : f32
    %317 = vector.broadcast %cst_151 : f32 to vector<2x64xf32>
    %318 = arith.addf %317, %316 : vector<2x64xf32>
    %319 = arith.divf %317, %318 : vector<2x64xf32>
    %320 = vector.extract_strided_slice %319 {offsets = [0, 0], sizes = [2, 32], strides = [1, 1]} : vector<2x64xf32> to vector<2x32xf32>
    %321 = vector.extract_strided_slice %319 {offsets = [0, 32], sizes = [2, 32], strides = [1, 1]} : vector<2x64xf32> to vector<2x32xf32>
    %322 = arith.mulf %320, %313 : vector<2x32xf32>
    %323 = arith.addf %305, %322 : vector<2x32xf32>
    %324 = math.tanh %323 : vector<2x32xf32>
    %cst_152 = arith.constant 1.000000e+00 : f32
    %325 = vector.broadcast %cst_152 : f32 to vector<2x32xf32>
    %326 = arith.subf %325, %321 : vector<2x32xf32>
    %327 = arith.mulf %326, %324 : vector<2x32xf32>
    %328 = arith.mulf %321, %174 : vector<2x32xf32>
    %329 = arith.addf %327, %328 : vector<2x32xf32>
    %330 = arith.addf %329, %295 : vector<2x32xf32>
    %cst_153 = arith.constant dense<0.000000e+00> : vector<2x17xf32>
    %331 = tpu.matmul %330, %37, %cst_153 {dimension_numbers = #tpu.dot_dimension_numbers<[1], [0], [0], [1], [0, 0, 1, 1], [], []>} : vector<2x32xf32>, vector<32x17xf32>, vector<2x17xf32> -> vector<2x17xf32>
    %cst_154 = arith.constant dense<0.000000e+00> : vector<2x17xf32>
    %332 = tpu.matmul %252, %38, %cst_154 {dimension_numbers = #tpu.dot_dimension_numbers<[1], [0], [0], [1], [0, 0, 1, 1], [], []>} : vector<2x16xf32>, vector<16x17xf32>, vector<2x17xf32> -> vector<2x17xf32>
    %333 = arith.addf %331, %332 : vector<2x17xf32>
    %c14_155 = arith.constant 14 : index
    %c0_156 = arith.constant 0 : index
    %334 = vector.load %arg4[%c14_155, %c0_156] : memref<16x128xf32, #tpu.memory_space<vmem>>, vector<1x17xf32>
    %335 = vector.broadcast %334 : vector<1x17xf32> to vector<2x17xf32>
    %336 = arith.addf %333, %335 : vector<2x17xf32>
    %337 = vector.extract_strided_slice %336 {offsets = [0, 0], sizes = [2, 16], strides = [1, 1]} : vector<2x17xf32> to vector<2x16xf32>
    %c0_157 = arith.constant 0 : index
    %c1_158 = arith.constant 1 : index
    %c0_159 = arith.constant 0 : index
    %338 = vector.load %arg5[%c0_157, %c1_158, %c0_159] : memref<2x4x16xf32, #tpu.memory_space<vmem>>, vector<2x1x16xf32>
    %339 = vector.shape_cast %338 : vector<2x1x16xf32> to vector<2x16xf32>
    %340 = vector.shape_cast %337 : vector<2x16xf32> to vector<2x1x16xf32>
    tpu.vector_store %arg5[%c0_157, %c1_158, %c0_159], %340 {strides = array<i32>} : memref<2x4x16xf32, #tpu.memory_space<vmem>>, vector<2x1x16xf32>,
    %341 = vector.extract_strided_slice %336 {offsets = [0, 16], sizes = [2, 1], strides = [1, 1]} : vector<2x17xf32> to vector<2x1xf32>
    %342 = arith.negf %341 : vector<2x1xf32>
    %343 = math.exp %342 : vector<2x1xf32>
    %cst_160 = arith.constant 1.000000e+00 : f32
    %344 = vector.broadcast %cst_160 : f32 to vector<2x1xf32>
    %345 = arith.addf %344, %343 : vector<2x1xf32>
    %346 = arith.divf %344, %345 : vector<2x1xf32>
    %c0_161 = arith.constant 0 : index
    %c1_162 = arith.constant 1 : index
    %c0_163 = arith.constant 0 : index
    %347 = vector.load %arg7[%c0_161, %c1_162, %c0_163] : memref<2x4x1xf32, #tpu.memory_space<vmem>>, vector<2x1x1xf32>
    %348 = vector.shape_cast %347 : vector<2x1x1xf32> to vector<2x1xf32>
    %349 = vector.shape_cast %346 : vector<2x1xf32> to vector<2x1x1xf32>
    tpu.vector_store %arg7[%c0_161, %c1_162, %c0_163], %349 {strides = array<i32>} : memref<2x4x1xf32, #tpu.memory_space<vmem>>, vector<2x1x1xf32>,
    %c0_164 = arith.constant 0 : index
    %c1_165 = arith.constant 1 : index
    %c0_166 = arith.constant 0 : index
    %350 = vector.load %arg6[%c0_164, %c1_165, %c0_166] : memref<2x4x8xf32, #tpu.memory_space<vmem>>, vector<2x1x8xf32>
    %351 = vector.shape_cast %350 : vector<2x1x8xf32> to vector<2x8xf32>
    %352 = vector.shape_cast %248 : vector<2x8xf32> to vector<2x1x8xf32>
    tpu.vector_store %arg6[%c0_164, %c1_165, %c0_166], %352 {strides = array<i32>} : memref<2x4x8xf32, #tpu.memory_space<vmem>>, vector<2x1x8xf32>,
    %353 = vector.extract_strided_slice %27 {offsets = [4, 0], sizes = [2, 64], strides = [1, 1]} : vector<8x64xf32> to vector<2x64xf32>
    %c72_167 = arith.constant 72 : index
    %c0_168 = arith.constant 0 : index
    %354 = vector.load %arg3[%c72_167, %c0_168] : memref<560x128xf32, #tpu.memory_space<vmem>>, vector<16x64xf32>
    %cst_169 = arith.constant dense<0.000000e+00> : vector<2x64xf32>
    %355 = tpu.matmul %252, %354, %cst_169 {dimension_numbers = #tpu.dot_dimension_numbers<[1], [0], [0], [1], [0, 0, 1, 1], [], []>} : vector<2x16xf32>, vector<16x64xf32>, vector<2x64xf32> -> vector<2x64xf32>
    %356 = arith.addf %353, %355 : vector<2x64xf32>
    %357 = vector.extract_strided_slice %28 {offsets = [4, 0], sizes = [2, 32], strides = [1, 1]} : vector<8x32xf32> to vector<2x32xf32>
    %c88_170 = arith.constant 88 : index
    %c0_171 = arith.constant 0 : index
    %358 = vector.load %arg3[%c88_170, %c0_171] : memref<560x128xf32, #tpu.memory_space<vmem>>, vector<16x32xf32>
    %cst_172 = arith.constant dense<0.000000e+00> : vector<2x32xf32>
    %359 = tpu.matmul %252, %358, %cst_172 {dimension_numbers = #tpu.dot_dimension_numbers<[1], [0], [0], [1], [0, 0, 1, 1], [], []>} : vector<2x16xf32>, vector<16x32xf32>, vector<2x32xf32> -> vector<2x32xf32>
    %360 = arith.addf %357, %359 : vector<2x32xf32>
    %c3_173 = arith.constant 3 : index
    %c0_174 = arith.constant 0 : index
    %361 = vector.load %arg4[%c3_173, %c0_174] : memref<16x128xf32, #tpu.memory_space<vmem>>, vector<1x64xf32>
    %c4_175 = arith.constant 4 : index
    %c0_176 = arith.constant 0 : index
    %362 = vector.load %arg4[%c4_175, %c0_176] : memref<16x128xf32, #tpu.memory_space<vmem>>, vector<1x32xf32>
    %cst_177 = arith.constant dense<0.000000e+00> : vector<2x64xf32>
    %363 = tpu.matmul %229, %31, %cst_177 {dimension_numbers = #tpu.dot_dimension_numbers<[1], [0], [0], [1], [0, 0, 1, 1], [], []>} : vector<2x32xf32>, vector<32x64xf32>, vector<2x64xf32> -> vector<2x64xf32>
    %364 = vector.broadcast %361 : vector<1x64xf32> to vector<2x64xf32>
    %365 = arith.addf %363, %364 : vector<2x64xf32>
    %cst_178 = arith.constant dense<0.000000e+00> : vector<2x32xf32>
    %366 = tpu.matmul %229, %32, %cst_178 {dimension_numbers = #tpu.dot_dimension_numbers<[1], [0], [0], [1], [0, 0, 1, 1], [], []>} : vector<2x32xf32>, vector<32x32xf32>, vector<2x32xf32> -> vector<2x32xf32>
    %367 = vector.broadcast %362 : vector<1x32xf32> to vector<2x32xf32>
    %368 = arith.addf %366, %367 : vector<2x32xf32>
    %369 = arith.addf %356, %365 : vector<2x64xf32>
    %370 = arith.negf %369 : vector<2x64xf32>
    %371 = math.exp %370 : vector<2x64xf32>
    %cst_179 = arith.constant 1.000000e+00 : f32
    %372 = vector.broadcast %cst_179 : f32 to vector<2x64xf32>
    %373 = arith.addf %372, %371 : vector<2x64xf32>
    %374 = arith.divf %372, %373 : vector<2x64xf32>
    %375 = vector.extract_strided_slice %374 {offsets = [0, 0], sizes = [2, 32], strides = [1, 1]} : vector<2x64xf32> to vector<2x32xf32>
    %376 = vector.extract_strided_slice %374 {offsets = [0, 32], sizes = [2, 32], strides = [1, 1]} : vector<2x64xf32> to vector<2x32xf32>
    %377 = arith.mulf %375, %368 : vector<2x32xf32>
    %378 = arith.addf %360, %377 : vector<2x32xf32>
    %379 = math.tanh %378 : vector<2x32xf32>
    %cst_180 = arith.constant 1.000000e+00 : f32
    %380 = vector.broadcast %cst_180 : f32 to vector<2x32xf32>
    %381 = arith.subf %380, %376 : vector<2x32xf32>
    %382 = arith.mulf %381, %379 : vector<2x32xf32>
    %383 = arith.mulf %376, %229 : vector<2x32xf32>
    %384 = arith.addf %382, %383 : vector<2x32xf32>
    %cst_181 = arith.constant dense<0.000000e+00> : vector<2x32xf32>
    %385 = tpu.matmul %384, %30, %cst_181 {dimension_numbers = #tpu.dot_dimension_numbers<[1], [0], [0], [1], [0, 0, 1, 1], [], []>} : vector<2x32xf32>, vector<32x32xf32>, vector<2x32xf32> -> vector<2x32xf32>
    %386 = vector.shape_cast %385 : vector<2x32xf32> to vector<2x1x32xf32>
    %387 = vector.broadcast %386 : vector<2x1x32xf32> to vector<2x8x32xf32>
    %388 = arith.addf %387, %4 : vector<2x8x32xf32>
    %389 = math.tanh %388 : vector<2x8x32xf32>
    %390 = vector.shape_cast %29 : vector<1x32xf32> to vector<1x1x32xf32>
    %391 = vector.broadcast %390 : vector<1x1x32xf32> to vector<2x8x32xf32>
    %392 = arith.mulf %389, %391 : vector<2x8x32xf32>
    %cst_182 = arith.constant dense<0.000000e+00> : vector<2x8xf32>
    %393 = vector.multi_reduction <add>, %392, %cst_182 [2] : vector<2x8x32xf32> to vector<2x8xf32>
    %cst_183 = arith.constant dense<0xFF800000> : vector<2xf32>
    %394 = vector.multi_reduction <maximumf>, %393, %cst_183 [1] : vector<2x8xf32> to vector<2xf32>
    %395 = vector.shape_cast %394 : vector<2xf32> to vector<2x1xf32>
    %396 = vector.broadcast %395 : vector<2x1xf32> to vector<2x8xf32>
    %397 = arith.subf %393, %396 : vector<2x8xf32>
    %398 = math.exp %397 : vector<2x8xf32>
    %cst_184 = arith.constant dense<0.000000e+00> : vector<2xf32>
    %399 = vector.multi_reduction <add>, %398, %cst_184 [1] : vector<2x8xf32> to vector<2xf32>
    %400 = vector.shape_cast %399 : vector<2xf32> to vector<2x1xf32>
    %401 = tpu.reciprocal %400 {approx = true} : vector<2x1xf32> -> vector<2x1xf32>
    %402 = vector.broadcast %401 : vector<2x1xf32> to vector<2x8xf32>
    %403 = arith.mulf %398, %402 : vector<2x8xf32>
    %404 = vector.shape_cast %403 : vector<2x8xf32> to vector<2x8x1xf32>
    %405 = vector.broadcast %404 : vector<2x8x1xf32> to vector<2x8x16xf32>
    %406 = arith.mulf %405, %0 : vector<2x8x16xf32>
    %cst_185 = arith.constant dense<0.000000e+00> : vector<2x16xf32>
    %407 = vector.multi_reduction <add>, %406, %cst_185 [1] : vector<2x8x16xf32> to vector<2x16xf32>
    %c208_186 = arith.constant 208 : index
    %c0_187 = arith.constant 0 : index
    %408 = vector.load %arg3[%c208_186, %c0_187] : memref<560x128xf32, #tpu.memory_space<vmem>>, vector<32x32xf32>
    %cst_188 = arith.constant dense<0.000000e+00> : vector<2x32xf32>
    %409 = tpu.matmul %384, %408, %cst_188 {dimension_numbers = #tpu.dot_dimension_numbers<[1], [0], [0], [1], [0, 0, 1, 1], [], []>} : vector<2x32xf32>, vector<32x32xf32>, vector<2x32xf32> -> vector<2x32xf32>
    %c240_189 = arith.constant 240 : index
    %c0_190 = arith.constant 0 : index
    %410 = vector.load %arg3[%c240_189, %c0_190] : memref<560x128xf32, #tpu.memory_space<vmem>>, vector<16x32xf32>
    %cst_191 = arith.constant dense<0.000000e+00> : vector<2x32xf32>
    %411 = tpu.matmul %407, %410, %cst_191 {dimension_numbers = #tpu.dot_dimension_numbers<[1], [0], [0], [1], [0, 0, 1, 1], [], []>} : vector<2x16xf32>, vector<16x32xf32>, vector<2x32xf32> -> vector<2x32xf32>
    %412 = arith.addf %409, %411 : vector<2x32xf32>
    %c5_192 = arith.constant 5 : index
    %c0_193 = arith.constant 0 : index
    %413 = vector.load %arg4[%c5_192, %c0_193] : memref<16x128xf32, #tpu.memory_space<vmem>>, vector<1x32xf32>
    %414 = vector.broadcast %413 : vector<1x32xf32> to vector<2x32xf32>
    %415 = arith.addf %412, %414 : vector<2x32xf32>
    %c256_194 = arith.constant 256 : index
    %c0_195 = arith.constant 0 : index
    %416 = vector.load %arg3[%c256_194, %c0_195] : memref<560x128xf32, #tpu.memory_space<vmem>>, vector<32x64xf32>
    %cst_196 = arith.constant dense<0.000000e+00> : vector<2x64xf32>
    %417 = tpu.matmul %415, %416, %cst_196 {dimension_numbers = #tpu.dot_dimension_numbers<[1], [0], [0], [1], [0, 0, 1, 1], [], []>} : vector<2x32xf32>, vector<32x64xf32>, vector<2x64xf32> -> vector<2x64xf32>
    %c6_197 = arith.constant 6 : index
    %c0_198 = arith.constant 0 : index
    %418 = vector.load %arg4[%c6_197, %c0_198] : memref<16x128xf32, #tpu.memory_space<vmem>>, vector<1x64xf32>
    %419 = vector.broadcast %418 : vector<1x64xf32> to vector<2x64xf32>
    %420 = arith.addf %417, %419 : vector<2x64xf32>
    %c288_199 = arith.constant 288 : index
    %c0_200 = arith.constant 0 : index
    %421 = vector.load %arg3[%c288_199, %c0_200] : memref<560x128xf32, #tpu.memory_space<vmem>>, vector<32x32xf32>
    %cst_201 = arith.constant dense<0.000000e+00> : vector<2x32xf32>
    %422 = tpu.matmul %415, %421, %cst_201 {dimension_numbers = #tpu.dot_dimension_numbers<[1], [0], [0], [1], [0, 0, 1, 1], [], []>} : vector<2x32xf32>, vector<32x32xf32>, vector<2x32xf32> -> vector<2x32xf32>
    %c7_202 = arith.constant 7 : index
    %c0_203 = arith.constant 0 : index
    %423 = vector.load %arg4[%c7_202, %c0_203] : memref<16x128xf32, #tpu.memory_space<vmem>>, vector<1x32xf32>
    %424 = vector.broadcast %423 : vector<1x32xf32> to vector<2x32xf32>
    %425 = arith.addf %422, %424 : vector<2x32xf32>
    %c8_204 = arith.constant 8 : index
    %c0_205 = arith.constant 0 : index
    %426 = vector.load %arg4[%c8_204, %c0_205] : memref<16x128xf32, #tpu.memory_space<vmem>>, vector<1x64xf32>
    %c9_206 = arith.constant 9 : index
    %c0_207 = arith.constant 0 : index
    %427 = vector.load %arg4[%c9_206, %c0_207] : memref<16x128xf32, #tpu.memory_space<vmem>>, vector<1x32xf32>
    %cst_208 = arith.constant dense<0.000000e+00> : vector<2x64xf32>
    %428 = tpu.matmul %294, %33, %cst_208 {dimension_numbers = #tpu.dot_dimension_numbers<[1], [0], [0], [1], [0, 0, 1, 1], [], []>} : vector<2x32xf32>, vector<32x64xf32>, vector<2x64xf32> -> vector<2x64xf32>
    %429 = vector.broadcast %426 : vector<1x64xf32> to vector<2x64xf32>
    %430 = arith.addf %428, %429 : vector<2x64xf32>
    %cst_209 = arith.constant dense<0.000000e+00> : vector<2x32xf32>
    %431 = tpu.matmul %294, %34, %cst_209 {dimension_numbers = #tpu.dot_dimension_numbers<[1], [0], [0], [1], [0, 0, 1, 1], [], []>} : vector<2x32xf32>, vector<32x32xf32>, vector<2x32xf32> -> vector<2x32xf32>
    %432 = vector.broadcast %427 : vector<1x32xf32> to vector<2x32xf32>
    %433 = arith.addf %431, %432 : vector<2x32xf32>
    %434 = arith.addf %420, %430 : vector<2x64xf32>
    %435 = arith.negf %434 : vector<2x64xf32>
    %436 = math.exp %435 : vector<2x64xf32>
    %cst_210 = arith.constant 1.000000e+00 : f32
    %437 = vector.broadcast %cst_210 : f32 to vector<2x64xf32>
    %438 = arith.addf %437, %436 : vector<2x64xf32>
    %439 = arith.divf %437, %438 : vector<2x64xf32>
    %440 = vector.extract_strided_slice %439 {offsets = [0, 0], sizes = [2, 32], strides = [1, 1]} : vector<2x64xf32> to vector<2x32xf32>
    %441 = vector.extract_strided_slice %439 {offsets = [0, 32], sizes = [2, 32], strides = [1, 1]} : vector<2x64xf32> to vector<2x32xf32>
    %442 = arith.mulf %440, %433 : vector<2x32xf32>
    %443 = arith.addf %425, %442 : vector<2x32xf32>
    %444 = math.tanh %443 : vector<2x32xf32>
    %cst_211 = arith.constant 1.000000e+00 : f32
    %445 = vector.broadcast %cst_211 : f32 to vector<2x32xf32>
    %446 = arith.subf %445, %441 : vector<2x32xf32>
    %447 = arith.mulf %446, %444 : vector<2x32xf32>
    %448 = arith.mulf %441, %294 : vector<2x32xf32>
    %449 = arith.addf %447, %448 : vector<2x32xf32>
    %450 = arith.addf %449, %415 : vector<2x32xf32>
    %c384_212 = arith.constant 384 : index
    %c0_213 = arith.constant 0 : index
    %451 = vector.load %arg3[%c384_212, %c0_213] : memref<560x128xf32, #tpu.memory_space<vmem>>, vector<32x64xf32>
    %cst_214 = arith.constant dense<0.000000e+00> : vector<2x64xf32>
    %452 = tpu.matmul %450, %451, %cst_214 {dimension_numbers = #tpu.dot_dimension_numbers<[1], [0], [0], [1], [0, 0, 1, 1], [], []>} : vector<2x32xf32>, vector<32x64xf32>, vector<2x64xf32> -> vector<2x64xf32>
    %c10_215 = arith.constant 10 : index
    %c0_216 = arith.constant 0 : index
    %453 = vector.load %arg4[%c10_215, %c0_216] : memref<16x128xf32, #tpu.memory_space<vmem>>, vector<1x64xf32>
    %454 = vector.broadcast %453 : vector<1x64xf32> to vector<2x64xf32>
    %455 = arith.addf %452, %454 : vector<2x64xf32>
    %c416_217 = arith.constant 416 : index
    %c0_218 = arith.constant 0 : index
    %456 = vector.load %arg3[%c416_217, %c0_218] : memref<560x128xf32, #tpu.memory_space<vmem>>, vector<32x32xf32>
    %cst_219 = arith.constant dense<0.000000e+00> : vector<2x32xf32>
    %457 = tpu.matmul %450, %456, %cst_219 {dimension_numbers = #tpu.dot_dimension_numbers<[1], [0], [0], [1], [0, 0, 1, 1], [], []>} : vector<2x32xf32>, vector<32x32xf32>, vector<2x32xf32> -> vector<2x32xf32>
    %c11_220 = arith.constant 11 : index
    %c0_221 = arith.constant 0 : index
    %458 = vector.load %arg4[%c11_220, %c0_221] : memref<16x128xf32, #tpu.memory_space<vmem>>, vector<1x32xf32>
    %459 = vector.broadcast %458 : vector<1x32xf32> to vector<2x32xf32>
    %460 = arith.addf %457, %459 : vector<2x32xf32>
    %c12_222 = arith.constant 12 : index
    %c0_223 = arith.constant 0 : index
    %461 = vector.load %arg4[%c12_222, %c0_223] : memref<16x128xf32, #tpu.memory_space<vmem>>, vector<1x64xf32>
    %c13_224 = arith.constant 13 : index
    %c0_225 = arith.constant 0 : index
    %462 = vector.load %arg4[%c13_224, %c0_225] : memref<16x128xf32, #tpu.memory_space<vmem>>, vector<1x32xf32>
    %cst_226 = arith.constant dense<0.000000e+00> : vector<2x64xf32>
    %463 = tpu.matmul %329, %35, %cst_226 {dimension_numbers = #tpu.dot_dimension_numbers<[1], [0], [0], [1], [0, 0, 1, 1], [], []>} : vector<2x32xf32>, vector<32x64xf32>, vector<2x64xf32> -> vector<2x64xf32>
    %464 = vector.broadcast %461 : vector<1x64xf32> to vector<2x64xf32>
    %465 = arith.addf %463, %464 : vector<2x64xf32>
    %cst_227 = arith.constant dense<0.000000e+00> : vector<2x32xf32>
    %466 = tpu.matmul %329, %36, %cst_227 {dimension_numbers = #tpu.dot_dimension_numbers<[1], [0], [0], [1], [0, 0, 1, 1], [], []>} : vector<2x32xf32>, vector<32x32xf32>, vector<2x32xf32> -> vector<2x32xf32>
    %467 = vector.broadcast %462 : vector<1x32xf32> to vector<2x32xf32>
    %468 = arith.addf %466, %467 : vector<2x32xf32>
    %469 = arith.addf %455, %465 : vector<2x64xf32>
    %470 = arith.negf %469 : vector<2x64xf32>
    %471 = math.exp %470 : vector<2x64xf32>
    %cst_228 = arith.constant 1.000000e+00 : f32
    %472 = vector.broadcast %cst_228 : f32 to vector<2x64xf32>
    %473 = arith.addf %472, %471 : vector<2x64xf32>
    %474 = arith.divf %472, %473 : vector<2x64xf32>
    %475 = vector.extract_strided_slice %474 {offsets = [0, 0], sizes = [2, 32], strides = [1, 1]} : vector<2x64xf32> to vector<2x32xf32>
    %476 = vector.extract_strided_slice %474 {offsets = [0, 32], sizes = [2, 32], strides = [1, 1]} : vector<2x64xf32> to vector<2x32xf32>
    %477 = arith.mulf %475, %468 : vector<2x32xf32>
    %478 = arith.addf %460, %477 : vector<2x32xf32>
    %479 = math.tanh %478 : vector<2x32xf32>
    %cst_229 = arith.constant 1.000000e+00 : f32
    %480 = vector.broadcast %cst_229 : f32 to vector<2x32xf32>
    %481 = arith.subf %480, %476 : vector<2x32xf32>
    %482 = arith.mulf %481, %479 : vector<2x32xf32>
    %483 = arith.mulf %476, %329 : vector<2x32xf32>
    %484 = arith.addf %482, %483 : vector<2x32xf32>
    %485 = arith.addf %484, %450 : vector<2x32xf32>
    %cst_230 = arith.constant dense<0.000000e+00> : vector<2x17xf32>
    %486 = tpu.matmul %485, %37, %cst_230 {dimension_numbers = #tpu.dot_dimension_numbers<[1], [0], [0], [1], [0, 0, 1, 1], [], []>} : vector<2x32xf32>, vector<32x17xf32>, vector<2x17xf32> -> vector<2x17xf32>
    %cst_231 = arith.constant dense<0.000000e+00> : vector<2x17xf32>
    %487 = tpu.matmul %407, %38, %cst_231 {dimension_numbers = #tpu.dot_dimension_numbers<[1], [0], [0], [1], [0, 0, 1, 1], [], []>} : vector<2x16xf32>, vector<16x17xf32>, vector<2x17xf32> -> vector<2x17xf32>
    %488 = arith.addf %486, %487 : vector<2x17xf32>
    %c14_232 = arith.constant 14 : index
    %c0_233 = arith.constant 0 : index
    %489 = vector.load %arg4[%c14_232, %c0_233] : memref<16x128xf32, #tpu.memory_space<vmem>>, vector<1x17xf32>
    %490 = vector.broadcast %489 : vector<1x17xf32> to vector<2x17xf32>
    %491 = arith.addf %488, %490 : vector<2x17xf32>
    %492 = vector.extract_strided_slice %491 {offsets = [0, 0], sizes = [2, 16], strides = [1, 1]} : vector<2x17xf32> to vector<2x16xf32>
    %c0_234 = arith.constant 0 : index
    %c2_235 = arith.constant 2 : index
    %c0_236 = arith.constant 0 : index
    %493 = vector.load %arg5[%c0_234, %c2_235, %c0_236] : memref<2x4x16xf32, #tpu.memory_space<vmem>>, vector<2x1x16xf32>
    %494 = vector.shape_cast %493 : vector<2x1x16xf32> to vector<2x16xf32>
    %495 = vector.shape_cast %492 : vector<2x16xf32> to vector<2x1x16xf32>
    tpu.vector_store %arg5[%c0_234, %c2_235, %c0_236], %495 {strides = array<i32>} : memref<2x4x16xf32, #tpu.memory_space<vmem>>, vector<2x1x16xf32>,
    %496 = vector.extract_strided_slice %491 {offsets = [0, 16], sizes = [2, 1], strides = [1, 1]} : vector<2x17xf32> to vector<2x1xf32>
    %497 = arith.negf %496 : vector<2x1xf32>
    %498 = math.exp %497 : vector<2x1xf32>
    %cst_237 = arith.constant 1.000000e+00 : f32
    %499 = vector.broadcast %cst_237 : f32 to vector<2x1xf32>
    %500 = arith.addf %499, %498 : vector<2x1xf32>
    %501 = arith.divf %499, %500 : vector<2x1xf32>
    %c0_238 = arith.constant 0 : index
    %c2_239 = arith.constant 2 : index
    %c0_240 = arith.constant 0 : index
    %502 = vector.load %arg7[%c0_238, %c2_239, %c0_240] : memref<2x4x1xf32, #tpu.memory_space<vmem>>, vector<2x1x1xf32>
    %503 = vector.shape_cast %502 : vector<2x1x1xf32> to vector<2x1xf32>
    %504 = vector.shape_cast %501 : vector<2x1xf32> to vector<2x1x1xf32>
    tpu.vector_store %arg7[%c0_238, %c2_239, %c0_240], %504 {strides = array<i32>} : memref<2x4x1xf32, #tpu.memory_space<vmem>>, vector<2x1x1xf32>,
    %c0_241 = arith.constant 0 : index
    %c2_242 = arith.constant 2 : index
    %c0_243 = arith.constant 0 : index
    %505 = vector.load %arg6[%c0_241, %c2_242, %c0_243] : memref<2x4x8xf32, #tpu.memory_space<vmem>>, vector<2x1x8xf32>
    %506 = vector.shape_cast %505 : vector<2x1x8xf32> to vector<2x8xf32>
    %507 = vector.shape_cast %403 : vector<2x8xf32> to vector<2x1x8xf32>
    tpu.vector_store %arg6[%c0_241, %c2_242, %c0_243], %507 {strides = array<i32>} : memref<2x4x8xf32, #tpu.memory_space<vmem>>, vector<2x1x8xf32>,
    %508 = vector.extract_strided_slice %27 {offsets = [6, 0], sizes = [2, 64], strides = [1, 1]} : vector<8x64xf32> to vector<2x64xf32>
    %c72_244 = arith.constant 72 : index
    %c0_245 = arith.constant 0 : index
    %509 = vector.load %arg3[%c72_244, %c0_245] : memref<560x128xf32, #tpu.memory_space<vmem>>, vector<16x64xf32>
    %cst_246 = arith.constant dense<0.000000e+00> : vector<2x64xf32>
    %510 = tpu.matmul %407, %509, %cst_246 {dimension_numbers = #tpu.dot_dimension_numbers<[1], [0], [0], [1], [0, 0, 1, 1], [], []>} : vector<2x16xf32>, vector<16x64xf32>, vector<2x64xf32> -> vector<2x64xf32>
    %511 = arith.addf %508, %510 : vector<2x64xf32>
    %512 = vector.extract_strided_slice %28 {offsets = [6, 0], sizes = [2, 32], strides = [1, 1]} : vector<8x32xf32> to vector<2x32xf32>
    %c88_247 = arith.constant 88 : index
    %c0_248 = arith.constant 0 : index
    %513 = vector.load %arg3[%c88_247, %c0_248] : memref<560x128xf32, #tpu.memory_space<vmem>>, vector<16x32xf32>
    %cst_249 = arith.constant dense<0.000000e+00> : vector<2x32xf32>
    %514 = tpu.matmul %407, %513, %cst_249 {dimension_numbers = #tpu.dot_dimension_numbers<[1], [0], [0], [1], [0, 0, 1, 1], [], []>} : vector<2x16xf32>, vector<16x32xf32>, vector<2x32xf32> -> vector<2x32xf32>
    %515 = arith.addf %512, %514 : vector<2x32xf32>
    %c3_250 = arith.constant 3 : index
    %c0_251 = arith.constant 0 : index
    %516 = vector.load %arg4[%c3_250, %c0_251] : memref<16x128xf32, #tpu.memory_space<vmem>>, vector<1x64xf32>
    %c4_252 = arith.constant 4 : index
    %c0_253 = arith.constant 0 : index
    %517 = vector.load %arg4[%c4_252, %c0_253] : memref<16x128xf32, #tpu.memory_space<vmem>>, vector<1x32xf32>
    %cst_254 = arith.constant dense<0.000000e+00> : vector<2x64xf32>
    %518 = tpu.matmul %384, %31, %cst_254 {dimension_numbers = #tpu.dot_dimension_numbers<[1], [0], [0], [1], [0, 0, 1, 1], [], []>} : vector<2x32xf32>, vector<32x64xf32>, vector<2x64xf32> -> vector<2x64xf32>
    %519 = vector.broadcast %516 : vector<1x64xf32> to vector<2x64xf32>
    %520 = arith.addf %518, %519 : vector<2x64xf32>
    %cst_255 = arith.constant dense<0.000000e+00> : vector<2x32xf32>
    %521 = tpu.matmul %384, %32, %cst_255 {dimension_numbers = #tpu.dot_dimension_numbers<[1], [0], [0], [1], [0, 0, 1, 1], [], []>} : vector<2x32xf32>, vector<32x32xf32>, vector<2x32xf32> -> vector<2x32xf32>
    %522 = vector.broadcast %517 : vector<1x32xf32> to vector<2x32xf32>
    %523 = arith.addf %521, %522 : vector<2x32xf32>
    %524 = arith.addf %511, %520 : vector<2x64xf32>
    %525 = arith.negf %524 : vector<2x64xf32>
    %526 = math.exp %525 : vector<2x64xf32>
    %cst_256 = arith.constant 1.000000e+00 : f32
    %527 = vector.broadcast %cst_256 : f32 to vector<2x64xf32>
    %528 = arith.addf %527, %526 : vector<2x64xf32>
    %529 = arith.divf %527, %528 : vector<2x64xf32>
    %530 = vector.extract_strided_slice %529 {offsets = [0, 0], sizes = [2, 32], strides = [1, 1]} : vector<2x64xf32> to vector<2x32xf32>
    %531 = vector.extract_strided_slice %529 {offsets = [0, 32], sizes = [2, 32], strides = [1, 1]} : vector<2x64xf32> to vector<2x32xf32>
    %532 = arith.mulf %530, %523 : vector<2x32xf32>
    %533 = arith.addf %515, %532 : vector<2x32xf32>
    %534 = math.tanh %533 : vector<2x32xf32>
    %cst_257 = arith.constant 1.000000e+00 : f32
    %535 = vector.broadcast %cst_257 : f32 to vector<2x32xf32>
    %536 = arith.subf %535, %531 : vector<2x32xf32>
    %537 = arith.mulf %536, %534 : vector<2x32xf32>
    %538 = arith.mulf %531, %384 : vector<2x32xf32>
    %539 = arith.addf %537, %538 : vector<2x32xf32>
    %cst_258 = arith.constant dense<0.000000e+00> : vector<2x32xf32>
    %540 = tpu.matmul %539, %30, %cst_258 {dimension_numbers = #tpu.dot_dimension_numbers<[1], [0], [0], [1], [0, 0, 1, 1], [], []>} : vector<2x32xf32>, vector<32x32xf32>, vector<2x32xf32> -> vector<2x32xf32>
    %541 = vector.shape_cast %540 : vector<2x32xf32> to vector<2x1x32xf32>
    %542 = vector.broadcast %541 : vector<2x1x32xf32> to vector<2x8x32xf32>
    %543 = arith.addf %542, %4 : vector<2x8x32xf32>
    %544 = math.tanh %543 : vector<2x8x32xf32>
    %545 = vector.shape_cast %29 : vector<1x32xf32> to vector<1x1x32xf32>
    %546 = vector.broadcast %545 : vector<1x1x32xf32> to vector<2x8x32xf32>
    %547 = arith.mulf %544, %546 : vector<2x8x32xf32>
    %cst_259 = arith.constant dense<0.000000e+00> : vector<2x8xf32>
    %548 = vector.multi_reduction <add>, %547, %cst_259 [2] : vector<2x8x32xf32> to vector<2x8xf32>
    %cst_260 = arith.constant dense<0xFF800000> : vector<2xf32>
    %549 = vector.multi_reduction <maximumf>, %548, %cst_260 [1] : vector<2x8xf32> to vector<2xf32>
    %550 = vector.shape_cast %549 : vector<2xf32> to vector<2x1xf32>
    %551 = vector.broadcast %550 : vector<2x1xf32> to vector<2x8xf32>
    %552 = arith.subf %548, %551 : vector<2x8xf32>
    %553 = math.exp %552 : vector<2x8xf32>
    %cst_261 = arith.constant dense<0.000000e+00> : vector<2xf32>
    %554 = vector.multi_reduction <add>, %553, %cst_261 [1] : vector<2x8xf32> to vector<2xf32>
    %555 = vector.shape_cast %554 : vector<2xf32> to vector<2x1xf32>
    %556 = tpu.reciprocal %555 {approx = true} : vector<2x1xf32> -> vector<2x1xf32>
    %557 = vector.broadcast %556 : vector<2x1xf32> to vector<2x8xf32>
    %558 = arith.mulf %553, %557 : vector<2x8xf32>
    %559 = vector.shape_cast %558 : vector<2x8xf32> to vector<2x8x1xf32>
    %560 = vector.broadcast %559 : vector<2x8x1xf32> to vector<2x8x16xf32>
    %561 = arith.mulf %560, %0 : vector<2x8x16xf32>
    %cst_262 = arith.constant dense<0.000000e+00> : vector<2x16xf32>
    %562 = vector.multi_reduction <add>, %561, %cst_262 [1] : vector<2x8x16xf32> to vector<2x16xf32>
    %c208_263 = arith.constant 208 : index
    %c0_264 = arith.constant 0 : index
    %563 = vector.load %arg3[%c208_263, %c0_264] : memref<560x128xf32, #tpu.memory_space<vmem>>, vector<32x32xf32>
    %cst_265 = arith.constant dense<0.000000e+00> : vector<2x32xf32>
    %564 = tpu.matmul %539, %563, %cst_265 {dimension_numbers = #tpu.dot_dimension_numbers<[1], [0], [0], [1], [0, 0, 1, 1], [], []>} : vector<2x32xf32>, vector<32x32xf32>, vector<2x32xf32> -> vector<2x32xf32>
    %c240_266 = arith.constant 240 : index
    %c0_267 = arith.constant 0 : index
    %565 = vector.load %arg3[%c240_266, %c0_267] : memref<560x128xf32, #tpu.memory_space<vmem>>, vector<16x32xf32>
    %cst_268 = arith.constant dense<0.000000e+00> : vector<2x32xf32>
    %566 = tpu.matmul %562, %565, %cst_268 {dimension_numbers = #tpu.dot_dimension_numbers<[1], [0], [0], [1], [0, 0, 1, 1], [], []>} : vector<2x16xf32>, vector<16x32xf32>, vector<2x32xf32> -> vector<2x32xf32>
    %567 = arith.addf %564, %566 : vector<2x32xf32>
    %c5_269 = arith.constant 5 : index
    %c0_270 = arith.constant 0 : index
    %568 = vector.load %arg4[%c5_269, %c0_270] : memref<16x128xf32, #tpu.memory_space<vmem>>, vector<1x32xf32>
    %569 = vector.broadcast %568 : vector<1x32xf32> to vector<2x32xf32>
    %570 = arith.addf %567, %569 : vector<2x32xf32>
    %c256_271 = arith.constant 256 : index
    %c0_272 = arith.constant 0 : index
    %571 = vector.load %arg3[%c256_271, %c0_272] : memref<560x128xf32, #tpu.memory_space<vmem>>, vector<32x64xf32>
    %cst_273 = arith.constant dense<0.000000e+00> : vector<2x64xf32>
    %572 = tpu.matmul %570, %571, %cst_273 {dimension_numbers = #tpu.dot_dimension_numbers<[1], [0], [0], [1], [0, 0, 1, 1], [], []>} : vector<2x32xf32>, vector<32x64xf32>, vector<2x64xf32> -> vector<2x64xf32>
    %c6_274 = arith.constant 6 : index
    %c0_275 = arith.constant 0 : index
    %573 = vector.load %arg4[%c6_274, %c0_275] : memref<16x128xf32, #tpu.memory_space<vmem>>, vector<1x64xf32>
    %574 = vector.broadcast %573 : vector<1x64xf32> to vector<2x64xf32>
    %575 = arith.addf %572, %574 : vector<2x64xf32>
    %c288_276 = arith.constant 288 : index
    %c0_277 = arith.constant 0 : index
    %576 = vector.load %arg3[%c288_276, %c0_277] : memref<560x128xf32, #tpu.memory_space<vmem>>, vector<32x32xf32>
    %cst_278 = arith.constant dense<0.000000e+00> : vector<2x32xf32>
    %577 = tpu.matmul %570, %576, %cst_278 {dimension_numbers = #tpu.dot_dimension_numbers<[1], [0], [0], [1], [0, 0, 1, 1], [], []>} : vector<2x32xf32>, vector<32x32xf32>, vector<2x32xf32> -> vector<2x32xf32>
    %c7_279 = arith.constant 7 : index
    %c0_280 = arith.constant 0 : index
    %578 = vector.load %arg4[%c7_279, %c0_280] : memref<16x128xf32, #tpu.memory_space<vmem>>, vector<1x32xf32>
    %579 = vector.broadcast %578 : vector<1x32xf32> to vector<2x32xf32>
    %580 = arith.addf %577, %579 : vector<2x32xf32>
    %c8_281 = arith.constant 8 : index
    %c0_282 = arith.constant 0 : index
    %581 = vector.load %arg4[%c8_281, %c0_282] : memref<16x128xf32, #tpu.memory_space<vmem>>, vector<1x64xf32>
    %c9_283 = arith.constant 9 : index
    %c0_284 = arith.constant 0 : index
    %582 = vector.load %arg4[%c9_283, %c0_284] : memref<16x128xf32, #tpu.memory_space<vmem>>, vector<1x32xf32>
    %cst_285 = arith.constant dense<0.000000e+00> : vector<2x64xf32>
    %583 = tpu.matmul %449, %33, %cst_285 {dimension_numbers = #tpu.dot_dimension_numbers<[1], [0], [0], [1], [0, 0, 1, 1], [], []>} : vector<2x32xf32>, vector<32x64xf32>, vector<2x64xf32> -> vector<2x64xf32>
    %584 = vector.broadcast %581 : vector<1x64xf32> to vector<2x64xf32>
    %585 = arith.addf %583, %584 : vector<2x64xf32>
    %cst_286 = arith.constant dense<0.000000e+00> : vector<2x32xf32>
    %586 = tpu.matmul %449, %34, %cst_286 {dimension_numbers = #tpu.dot_dimension_numbers<[1], [0], [0], [1], [0, 0, 1, 1], [], []>} : vector<2x32xf32>, vector<32x32xf32>, vector<2x32xf32> -> vector<2x32xf32>
    %587 = vector.broadcast %582 : vector<1x32xf32> to vector<2x32xf32>
    %588 = arith.addf %586, %587 : vector<2x32xf32>
    %589 = arith.addf %575, %585 : vector<2x64xf32>
    %590 = arith.negf %589 : vector<2x64xf32>
    %591 = math.exp %590 : vector<2x64xf32>
    %cst_287 = arith.constant 1.000000e+00 : f32
    %592 = vector.broadcast %cst_287 : f32 to vector<2x64xf32>
    %593 = arith.addf %592, %591 : vector<2x64xf32>
    %594 = arith.divf %592, %593 : vector<2x64xf32>
    %595 = vector.extract_strided_slice %594 {offsets = [0, 0], sizes = [2, 32], strides = [1, 1]} : vector<2x64xf32> to vector<2x32xf32>
    %596 = vector.extract_strided_slice %594 {offsets = [0, 32], sizes = [2, 32], strides = [1, 1]} : vector<2x64xf32> to vector<2x32xf32>
    %597 = arith.mulf %595, %588 : vector<2x32xf32>
    %598 = arith.addf %580, %597 : vector<2x32xf32>
    %599 = math.tanh %598 : vector<2x32xf32>
    %cst_288 = arith.constant 1.000000e+00 : f32
    %600 = vector.broadcast %cst_288 : f32 to vector<2x32xf32>
    %601 = arith.subf %600, %596 : vector<2x32xf32>
    %602 = arith.mulf %601, %599 : vector<2x32xf32>
    %603 = arith.mulf %596, %449 : vector<2x32xf32>
    %604 = arith.addf %602, %603 : vector<2x32xf32>
    %605 = arith.addf %604, %570 : vector<2x32xf32>
    %c384_289 = arith.constant 384 : index
    %c0_290 = arith.constant 0 : index
    %606 = vector.load %arg3[%c384_289, %c0_290] : memref<560x128xf32, #tpu.memory_space<vmem>>, vector<32x64xf32>
    %cst_291 = arith.constant dense<0.000000e+00> : vector<2x64xf32>
    %607 = tpu.matmul %605, %606, %cst_291 {dimension_numbers = #tpu.dot_dimension_numbers<[1], [0], [0], [1], [0, 0, 1, 1], [], []>} : vector<2x32xf32>, vector<32x64xf32>, vector<2x64xf32> -> vector<2x64xf32>
    %c10_292 = arith.constant 10 : index
    %c0_293 = arith.constant 0 : index
    %608 = vector.load %arg4[%c10_292, %c0_293] : memref<16x128xf32, #tpu.memory_space<vmem>>, vector<1x64xf32>
    %609 = vector.broadcast %608 : vector<1x64xf32> to vector<2x64xf32>
    %610 = arith.addf %607, %609 : vector<2x64xf32>
    %c416_294 = arith.constant 416 : index
    %c0_295 = arith.constant 0 : index
    %611 = vector.load %arg3[%c416_294, %c0_295] : memref<560x128xf32, #tpu.memory_space<vmem>>, vector<32x32xf32>
    %cst_296 = arith.constant dense<0.000000e+00> : vector<2x32xf32>
    %612 = tpu.matmul %605, %611, %cst_296 {dimension_numbers = #tpu.dot_dimension_numbers<[1], [0], [0], [1], [0, 0, 1, 1], [], []>} : vector<2x32xf32>, vector<32x32xf32>, vector<2x32xf32> -> vector<2x32xf32>
    %c11_297 = arith.constant 11 : index
    %c0_298 = arith.constant 0 : index
    %613 = vector.load %arg4[%c11_297, %c0_298] : memref<16x128xf32, #tpu.memory_space<vmem>>, vector<1x32xf32>
    %614 = vector.broadcast %613 : vector<1x32xf32> to vector<2x32xf32>
    %615 = arith.addf %612, %614 : vector<2x32xf32>
    %c12_299 = arith.constant 12 : index
    %c0_300 = arith.constant 0 : index
    %616 = vector.load %arg4[%c12_299, %c0_300] : memref<16x128xf32, #tpu.memory_space<vmem>>, vector<1x64xf32>
    %c13_301 = arith.constant 13 : index
    %c0_302 = arith.constant 0 : index
    %617 = vector.load %arg4[%c13_301, %c0_302] : memref<16x128xf32, #tpu.memory_space<vmem>>, vector<1x32xf32>
    %cst_303 = arith.constant dense<0.000000e+00> : vector<2x64xf32>
    %618 = tpu.matmul %484, %35, %cst_303 {dimension_numbers = #tpu.dot_dimension_numbers<[1], [0], [0], [1], [0, 0, 1, 1], [], []>} : vector<2x32xf32>, vector<32x64xf32>, vector<2x64xf32> -> vector<2x64xf32>
    %619 = vector.broadcast %616 : vector<1x64xf32> to vector<2x64xf32>
    %620 = arith.addf %618, %619 : vector<2x64xf32>
    %cst_304 = arith.constant dense<0.000000e+00> : vector<2x32xf32>
    %621 = tpu.matmul %484, %36, %cst_304 {dimension_numbers = #tpu.dot_dimension_numbers<[1], [0], [0], [1], [0, 0, 1, 1], [], []>} : vector<2x32xf32>, vector<32x32xf32>, vector<2x32xf32> -> vector<2x32xf32>
    %622 = vector.broadcast %617 : vector<1x32xf32> to vector<2x32xf32>
    %623 = arith.addf %621, %622 : vector<2x32xf32>
    %624 = arith.addf %610, %620 : vector<2x64xf32>
    %625 = arith.negf %624 : vector<2x64xf32>
    %626 = math.exp %625 : vector<2x64xf32>
    %cst_305 = arith.constant 1.000000e+00 : f32
    %627 = vector.broadcast %cst_305 : f32 to vector<2x64xf32>
    %628 = arith.addf %627, %626 : vector<2x64xf32>
    %629 = arith.divf %627, %628 : vector<2x64xf32>
    %630 = vector.extract_strided_slice %629 {offsets = [0, 0], sizes = [2, 32], strides = [1, 1]} : vector<2x64xf32> to vector<2x32xf32>
    %631 = vector.extract_strided_slice %629 {offsets = [0, 32], sizes = [2, 32], strides = [1, 1]} : vector<2x64xf32> to vector<2x32xf32>
    %632 = arith.mulf %630, %623 : vector<2x32xf32>
    %633 = arith.addf %615, %632 : vector<2x32xf32>
    %634 = math.tanh %633 : vector<2x32xf32>
    %cst_306 = arith.constant 1.000000e+00 : f32
    %635 = vector.broadcast %cst_306 : f32 to vector<2x32xf32>
    %636 = arith.subf %635, %631 : vector<2x32xf32>
    %637 = arith.mulf %636, %634 : vector<2x32xf32>
    %638 = arith.mulf %631, %484 : vector<2x32xf32>
    %639 = arith.addf %637, %638 : vector<2x32xf32>
    %640 = arith.addf %639, %605 : vector<2x32xf32>
    %cst_307 = arith.constant dense<0.000000e+00> : vector<2x17xf32>
    %641 = tpu.matmul %640, %37, %cst_307 {dimension_numbers = #tpu.dot_dimension_numbers<[1], [0], [0], [1], [0, 0, 1, 1], [], []>} : vector<2x32xf32>, vector<32x17xf32>, vector<2x17xf32> -> vector<2x17xf32>
    %cst_308 = arith.constant dense<0.000000e+00> : vector<2x17xf32>
    %642 = tpu.matmul %562, %38, %cst_308 {dimension_numbers = #tpu.dot_dimension_numbers<[1], [0], [0], [1], [0, 0, 1, 1], [], []>} : vector<2x16xf32>, vector<16x17xf32>, vector<2x17xf32> -> vector<2x17xf32>
    %643 = arith.addf %641, %642 : vector<2x17xf32>
    %c14_309 = arith.constant 14 : index
    %c0_310 = arith.constant 0 : index
    %644 = vector.load %arg4[%c14_309, %c0_310] : memref<16x128xf32, #tpu.memory_space<vmem>>, vector<1x17xf32>
    %645 = vector.broadcast %644 : vector<1x17xf32> to vector<2x17xf32>
    %646 = arith.addf %643, %645 : vector<2x17xf32>
    %647 = vector.extract_strided_slice %646 {offsets = [0, 0], sizes = [2, 16], strides = [1, 1]} : vector<2x17xf32> to vector<2x16xf32>
    %c0_311 = arith.constant 0 : index
    %c3_312 = arith.constant 3 : index
    %c0_313 = arith.constant 0 : index
    %648 = vector.load %arg5[%c0_311, %c3_312, %c0_313] : memref<2x4x16xf32, #tpu.memory_space<vmem>>, vector<2x1x16xf32>
    %649 = vector.shape_cast %648 : vector<2x1x16xf32> to vector<2x16xf32>
    %650 = vector.shape_cast %647 : vector<2x16xf32> to vector<2x1x16xf32>
    tpu.vector_store %arg5[%c0_311, %c3_312, %c0_313], %650 {strides = array<i32>} : memref<2x4x16xf32, #tpu.memory_space<vmem>>, vector<2x1x16xf32>,
    %651 = vector.extract_strided_slice %646 {offsets = [0, 16], sizes = [2, 1], strides = [1, 1]} : vector<2x17xf32> to vector<2x1xf32>
    %652 = arith.negf %651 : vector<2x1xf32>
    %653 = math.exp %652 : vector<2x1xf32>
    %cst_314 = arith.constant 1.000000e+00 : f32
    %654 = vector.broadcast %cst_314 : f32 to vector<2x1xf32>
    %655 = arith.addf %654, %653 : vector<2x1xf32>
    %656 = arith.divf %654, %655 : vector<2x1xf32>
    %c0_315 = arith.constant 0 : index
    %c3_316 = arith.constant 3 : index
    %c0_317 = arith.constant 0 : index
    %657 = vector.load %arg7[%c0_315, %c3_316, %c0_317] : memref<2x4x1xf32, #tpu.memory_space<vmem>>, vector<2x1x1xf32>
    %658 = vector.shape_cast %657 : vector<2x1x1xf32> to vector<2x1xf32>
    %659 = vector.shape_cast %656 : vector<2x1xf32> to vector<2x1x1xf32>
    tpu.vector_store %arg7[%c0_315, %c3_316, %c0_317], %659 {strides = array<i32>} : memref<2x4x1xf32, #tpu.memory_space<vmem>>, vector<2x1x1xf32>,
    %c0_318 = arith.constant 0 : index
    %c3_319 = arith.constant 3 : index
    %c0_320 = arith.constant 0 : index
    %660 = vector.load %arg6[%c0_318, %c3_319, %c0_320] : memref<2x4x8xf32, #tpu.memory_space<vmem>>, vector<2x1x8xf32>
    %661 = vector.shape_cast %660 : vector<2x1x8xf32> to vector<2x8xf32>
    %662 = vector.shape_cast %558 : vector<2x8xf32> to vector<2x1x8xf32>
    tpu.vector_store %arg6[%c0_318, %c3_319, %c0_320], %662 {strides = array<i32>} : memref<2x4x8xf32, #tpu.memory_space<vmem>>, vector<2x1x8xf32>,
    return
  }
  func.func @transform_0(%arg0: i32) -> (i32, i32, i32) {
    %c0_i32 = arith.constant 0 : i32
    %c0_i32_0 = arith.constant 0 : i32
    %c0_i32_1 = arith.constant 0 : i32
    return %arg0, %c0_i32, %c0_i32_0 : i32, i32, i32
  }
  func.func @transform_1(%arg0: i32) -> (i32, i32, i32) {
    %c0_i32 = arith.constant 0 : i32
    %c0_i32_0 = arith.constant 0 : i32
    %c0_i32_1 = arith.constant 0 : i32
    return %arg0, %c0_i32, %c0_i32_0 : i32, i32, i32
  }
  func.func @transform_2(%arg0: i32) -> (i32, i32) {
    %c0_i32 = arith.constant 0 : i32
    %c0_i32_0 = arith.constant 0 : i32
    %c0_i32_1 = arith.constant 0 : i32
    return %c0_i32, %c0_i32_0 : i32, i32
  }
  func.func @transform_3(%arg0: i32) -> (i32, i32) {
    %c0_i32 = arith.constant 0 : i32
    %c0_i32_0 = arith.constant 0 : i32
    %c0_i32_1 = arith.constant 0 : i32
    return %c0_i32, %c0_i32_0 : i32, i32
  }
  func.func @transform_4(%arg0: i32) -> (i32, i32, i32) {
    %c0_i32 = arith.constant 0 : i32
    %c0_i32_0 = arith.constant 0 : i32
    %c0_i32_1 = arith.constant 0 : i32
    return %arg0, %c0_i32, %c0_i32_0 : i32, i32, i32
  }
  func.func @transform_5(%arg0: i32) -> (i32, i32, i32) {
    %c0_i32 = arith.constant 0 : i32
    %c0_i32_0 = arith.constant 0 : i32
    %c0_i32_1 = arith.constant 0 : i32
    return %arg0, %c0_i32, %c0_i32_0 : i32, i32, i32
  }
  func.func @transform_6(%arg0: i32) -> (i32, i32, i32) {
    %c0_i32 = arith.constant 0 : i32
    %c0_i32_0 = arith.constant 0 : i32
    %c0_i32_1 = arith.constant 0 : i32
    return %arg0, %c0_i32, %c0_i32_0 : i32, i32, i32
  }
}

</mosaic_0001>

<llo_original>
// kernel: run_decoder.1
$region0: #{run_decoder.1}
  #allocation0 [shape = 'u32[]', space=smem, size = 0x4, offset = 0x4, fixed_abs, tag = 'smem constant byte address 0x4 - core index']
  #allocation1 [shape = 'u32[72,128]{1,0:T(1,128)}', space=vmem, size = 0x9000, scoped, tag = 'internal scratch']
  %s0 = inlined_call_operand.vmem [shape: f32[2,8,16], index: 0, kind: input, shape index: {}]
  %s1 = inlined_call_operand.vmem [shape: f32[2,4,8], index: 1, kind: input, shape index: {}]
  %s2 = inlined_call_operand.vmem [shape: f32[560,128], index: 2, kind: input, shape index: {}]
  %s3 = inlined_call_operand.vmem [shape: f32[16,128], index: 3, kind: input, shape index: {}]
  %s4 = inlined_call_operand.vmem [shape: f32[2,4,16], index: 4, kind: output, shape index: {0}]
  %s5 = inlined_call_operand.hbm [shape: f32[2,4,8], index: 5, kind: output, shape index: {1}]
  %s6 = inlined_call_operand.vmem [shape: f32[2,4,1], index: 6, kind: output, shape index: {2}]
  %7 = xla_tuple %s4, %s5, %s6
  %s8 = sld [smem:[#allocation0]]
  $region42: #{run_decoder.1} parent=0
    _
  %s10 = ssub.s32 1, %s8
  %s11 = scalar_select 0, %s10, %s8
  $region1: #{run_decoder.1} parent=0
    #allocation2 [shape = 'u8[4096]{0}', space=vmem, size = 0x1000, scoped, tag = 'output window, operand 1, single buffered']
    #allocation3 [shape = 's32[1]{0}', space=sflag, size = 0x4, scoped, tag = 'scoped memory for run_decoder.1']
    %12 = vsyncpa [#allocation3], 0
    // Predicated region
    $region2: #{run_decoder.1} parent=1 // pred_check
      _
    $region3: #{run_decoder.1} parent=1 // pred_check_branch
      %14 = sbr.rel (0) target = $region5
    $region4: #{run_decoder.1} parent=1 // pred_region
      _
    $region5: #{run_decoder.1} parent=1 // pred_fallthru
      _
    // Predicated region
    $region6: #{run_decoder.1} parent=1 // pred_check
      _
    $region7: #{run_decoder.1} parent=1 // pred_check_branch
      %16 = sbr.rel (0) target = $region9
    $region8: #{run_decoder.1} parent=1 // pred_region
      _
    $region9: #{run_decoder.1} parent=1 // pred_fallthru
      _
    // Predicated region
    $region10: #{run_decoder.1} parent=1 // pred_check
      _
    $region11: #{run_decoder.1} parent=1 // pred_check_branch
      %18 = sbr.rel (0) target = $region13
    $region12: #{run_decoder.1} parent=1 // pred_region
      _
    $region13: #{run_decoder.1} parent=1 // pred_fallthru
      _
    // Predicated region
    $region14: #{run_decoder.1} parent=1 // pred_check
      _
    $region15: #{run_decoder.1} parent=1 // pred_check_branch
      %20 = sbr.rel (0) target = $region17
    $region16: #{run_decoder.1} parent=1 // pred_region
      _
    $region17: #{run_decoder.1} parent=1 // pred_fallthru
      _
    %v21 = vld [vmem:[%s0] sm:$0xff]
    %v22 = vld [vmem:[%s0 + $0x8] sm:$0xff]
    %v23 = vld [vmem:[%s2] sm:$0xff]
    %v24 = vld [vmem:[%s2 + $0x8] sm:$0xff]
    %vm25 = vcmask 130048
    %v27 = vsel %vm25, %v21, 0
    %v30 = vsel %vm25, %v22, 0
    %32 = vmatpush.msra.mxu0 0.0
    %33 = vmatpush.msra.mxu0 0.0
    %34 = vmatpush.msra.mxu0 0.0
    %35 = vmatpush.msra.mxu0 0.0
    %36 = vmatpush.msra.mxu0 0.0
    %37 = vmatpush.msra.mxu0 0.0
    %38 = vmatpush.msra.mxu0 0.0
    %39 = vmatpush.msra.mxu0 0.0
    %40 = vmatpush.msra.mxu0 0.0
    %41 = vmatpush.msra.mxu0 0.0
    %42 = vmatpush.msra.mxu0 0.0
    %43 = vmatpush.msra.mxu0 0.0
    %44 = vmatpush.msra.mxu0 0.0
    %45 = vmatpush.msra.mxu0 0.0
    %46 = vmatpush.msra.mxu0 %v24
    %47 = vmatpush.msra.mxu0 %v23
    %48 = vmatmul.f32.gmra.mxu0 %v27
    %v49 = vpop.f32.mrf.mxu0
    %v50 = vadd.f32 0.0, %v49
    %51 = vmatmul.f32.gmra.mxu0 %v30
    %v52 = vpop.f32.mrf.mxu0
    %v53 = vadd.f32 0.0, %v52
    %54 = vdwg.mxu0
    %v55 = vld [vmem:[%s1] sm:$0xf]
    %v57 = vunpack.c.l.s4 1983009808
    %v58 = vunpack.c.0.s8 %v57
    %v59 = vperm.slane %v55, %v58
    %v60 = vld [vmem:[%s1 + $0x4] sm:$0xf]
    %v62 = vunpack.c.l.s4 1983009808
    %v63 = vunpack.c.0.s8 %v62
    %v64 = vperm.slane %v60, %v63
    %v65 = vrot.slane %v64, 4
    %vm66 = vcmask 1047556
    %v67 = vsel %vm66, %v65, %v59
    %v68 = vrot.slane %v59, 4
    %v69 = vsel %vm66, %v64, %v68
    %v71 = vunpack.c.l.s4 1934713408
    %v72 = vunpack.c.0.s8 %v71
    %v73 = vperm.slane %v67, %v72
    %v75 = vunpack.c.l.s4 1934713408
    %v76 = vunpack.c.0.s8 %v75
    %v77 = vperm.slane %v69, %v76
    %v78 = vrot.slane %v73, 4
    %v79 = vsel %vm66, 0.0, %v78
    %v80 = vrot.slane %v77, 4
    %v81 = vsel %vm66, 0.0, %v80
    %v82 = vld [vmem:[%s2 + $0x10] sm:$0xff]
    %v83 = vld [vmem:[%s3] sm:$0x1]
    %v84 = vperm.slane %v83, 0
    %89 = vst [vmem:[#allocation1] ss:$4 sm:$0xff] %v73
    %s90 = scalar_lea.vmem [#allocation1], 1
    %91 = vst [vmem:[%s90] ss:$4 sm:$0xff] %v79
    %s92 = scalar_lea.vmem [#allocation1], 2
    %93 = vst [vmem:[%s92] ss:$4 sm:$0xff] %v77
    %s94 = scalar_lea.vmem [#allocation1], 3
    %95 = vst [vmem:[%s94] ss:$4 sm:$0xff] %v81
    %v96 = vld.sshfl [vmem:[#allocation1] sm:$0xff pattern:$0x73625140]
    %vm97 = vcmask 64512
    %v98 = vsel %vm97, %v96, 0
    %100 = vmatpush.msra.mxu0 0.0
    %101 = vmatpush.msra.mxu0 0.0
    %102 = vmatpush.msra.mxu0 0.0
    %103 = vmatpush.msra.mxu0 0.0
    %104 = vmatpush.msra.mxu0 0.0
    %105 = vmatpush.msra.mxu0 0.0
    %106 = vmatpush.msra.mxu0 0.0
    %107 = vmatpush.msra.mxu0 0.0
    %108 = vmatpush.msra.mxu0 0.0
    %109 = vmatpush.msra.mxu0 0.0
    %110 = vmatpush.msra.mxu0 0.0
    %111 = vmatpush.msra.mxu0 0.0
    %112 = vmatpush.msra.mxu0 0.0
    %113 = vmatpush.msra.mxu0 0.0
    %114 = vmatpush.msra.mxu0 0.0
    %115 = vmatpush.msra.mxu0 %v82
    %116 = vmatmul.f32.gmra.mxu0 %v98
    %v117 = vpop.f32.mrf.mxu0
    %v118 = vadd.f32 %v84, %v117
    %119 = vdwg.mxu0
    %v120 = vmax.f32 %v118, 0.0
    %v121 = vld [vmem:[%s2 + $0x18] sm:$0xff]
    %v122 = vld [vmem:[%s2 + $0x20] sm:$0xff]
    %v123 = vld [vmem:[%s2 + $0x28] sm:$0xff]
    %v124 = vld [vmem:[%s2 + $0x30] sm:$0xff]
    %v125 = vld [vmem:[%s3 + $0x1] sm:$0x1]
    %v126 = vperm.slane %v125, 0
    %vm127 = vcmask 261120
    %v129 = vsel %vm127, %v120, 0
    %131 = vmatpush.msra.mxu0 0.0
    %132 = vmatpush.msra.mxu0 0.0
    %133 = vmatpush.msra.mxu0 0.0
    %134 = vmatpush.msra.mxu0 0.0
    %135 = vmatpush.msra.mxu0 0.0
    %136 = vmatpush.msra.mxu0 0.0
    %137 = vmatpush.msra.mxu0 0.0
    %138 = vmatpush.msra.mxu0 0.0
    %139 = vmatpush.msra.mxu0 0.0
    %140 = vmatpush.msra.mxu0 0.0
    %141 = vmatpush.msra.mxu0 0.0
    %142 = vmatpush.msra.mxu0 0.0
    %143 = vmatpush.msra.mxu0 %v124
    %144 = vmatpush.msra.mxu0 %v123
    %145 = vmatpush.msra.mxu0 %v122
    %146 = vmatpush.msra.mxu0 %v121
    %147 = vmatmul.f32.gmra.mxu0 %v129
    %v148 = vpop.f32.mrf.mxu0
    %v149 = vadd.f32 %v126, %v148
    %150 = vdwg.mxu0
    %v151 = vmax.f32 %v149, 0.0
    %v152 = vld [vmem:[%s2 + $0x38] sm:$0xff]
    %v153 = vld [vmem:[%s2 + $0x40] sm:$0xff]
    %v154 = vld [vmem:[%s3 + $0x2] sm:$0x1]
    %v155 = vperm.slane %v154, 0
    %v157 = vsel %vm25, %v151, 0
    %159 = vmatpush.msra.mxu0 0.0
    %160 = vmatpush.msra.mxu0 0.0
    %161 = vmatpush.msra.mxu0 0.0
    %162 = vmatpush.msra.mxu0 0.0
    %163 = vmatpush.msra.mxu0 0.0
    %164 = vmatpush.msra.mxu0 0.0
    %165 = vmatpush.msra.mxu0 0.0
    %166 = vmatpush.msra.mxu0 0.0
    %167 = vmatpush.msra.mxu0 0.0
    %168 = vmatpush.msra.mxu0 0.0
    %169 = vmatpush.msra.mxu0 0.0
    %170 = vmatpush.msra.mxu0 0.0
    %171 = vmatpush.msra.mxu0 0.0
    %172 = vmatpush.msra.mxu0 0.0
    %173 = vmatpush.msra.mxu0 %v153
    %174 = vmatpush.msra.mxu0 %v152
    %175 = vmatmul.f32.gmra.mxu0 %v157
    %v176 = vpop.f32.mrf.mxu0
    %v177 = vadd.f32 %v155, %v176
    %178 = vdwg.mxu0
    %v179 = vld [vmem:[%s2 + $0xc8] sm:$0x1]
    %v180 = vld [vmem:[%s2 + $0xa8] sm:$0xff]
    %v181 = vld [vmem:[%s2 + $0xb0] sm:$0xff]
    %v182 = vld [vmem:[%s2 + $0xb8] sm:$0xff]
    %v183 = vld [vmem:[%s2 + $0xc0] sm:$0xff]
    %v184 = vld [vmem:[%s2 + $0x68] sm:$0xff]
    %v185 = vld [vmem:[%s2 + $0x70] sm:$0xff]
    %v186 = vld [vmem:[%s2 + $0x78] sm:$0xff]
    %v187 = vld [vmem:[%s2 + $0x80] sm:$0xff]
    %v188 = vld [vmem:[%s2 + $0x88] sm:$0xff]
    %v189 = vld [vmem:[%s2 + $0x90] sm:$0xff]
    %v190 = vld [vmem:[%s2 + $0x98] sm:$0xff]
    %v191 = vld [vmem:[%s2 + $0xa0] sm:$0xff]
    %v192 = vld [vmem:[%s2 + $0x140] sm:$0xff]
    %v193 = vld [vmem:[%s2 + $0x148] sm:$0xff]
    %v194 = vld [vmem:[%s2 + $0x150] sm:$0xff]
    %v195 = vld [vmem:[%s2 + $0x158] sm:$0xff]
    %v196 = vld [vmem:[%s2 + $0x160] sm:$0xff]
    %v197 = vld [vmem:[%s2 + $0x168] sm:$0xff]
    %v198 = vld [vmem:[%s2 + $0x170] sm:$0xff]
    %v199 = vld [vmem:[%s2 + $0x178] sm:$0xff]
    %v200 = vld [vmem:[%s2 + $0x1c0] sm:$0xff]
    %v201 = vld [vmem:[%s2 + $0x1c8] sm:$0xff]
    %v202 = vld [vmem:[%s2 + $0x1d0] sm:$0xff]
    %v203 = vld [vmem:[%s2 + $0x1d8] sm:$0xff]
    %v204 = vld [vmem:[%s2 + $0x1e0] sm:$0xff]
    %v205 = vld [vmem:[%s2 + $0x1e8] sm:$0xff]
    %v206 = vld [vmem:[%s2 + $0x1f0] sm:$0xff]
    %v207 = vld [vmem:[%s2 + $0x1f8] sm:$0xff]
    %v208 = vld [vmem:[%s2 + $0x200] sm:$0xff]
    %v209 = vld [vmem:[%s2 + $0x208] sm:$0xff]
    %v210 = vld [vmem:[%s2 + $0x210] sm:$0xff]
    %v211 = vld [vmem:[%s2 + $0x218] sm:$0xff]
    %v212 = vld [vmem:[%s2 + $0x220] sm:$0xff]
    %v213 = vld [vmem:[%s2 + $0x228] sm:$0xff]
    %v214 = vld [vmem:[%s2 + $0x48] sm:$0xff]
    %v215 = vld [vmem:[%s2 + $0x50] sm:$0xff]
    %v217 = vsel %vm25, 0.0, 0
    %219 = vmatpush.msra.mxu0 0.0
    %220 = vmatpush.msra.mxu0 0.0
    %221 = vmatpush.msra.mxu0 0.0
    %222 = vmatpush.msra.mxu0 0.0
    %223 = vmatpush.msra.mxu0 0.0
    %224 = vmatpush.msra.mxu0 0.0
    %225 = vmatpush.msra.mxu0 0.0
    %226 = vmatpush.msra.mxu0 0.0
    %227 = vmatpush.msra.mxu0 0.0
    %228 = vmatpush.msra.mxu0 0.0
    %229 = vmatpush.msra.mxu0 0.0
    %230 = vmatpush.msra.mxu0 0.0
    %231 = vmatpush.msra.mxu0 0.0
    %232 = vmatpush.msra.mxu0 0.0
    %233 = vmatpush.msra.mxu0 %v215
    %234 = vmatpush.msra.mxu0 %v214
    %235 = vmatmul.f32.gmra.mxu0 %v217
    %v236 = vpop.f32.mrf.mxu0
    %v237 = vadd.f32 0.0, %v236
    %238 = vdwg.mxu0
    %v239 = vadd.f32 %v177, %v237
    %v240 = vld [vmem:[%s2 + $0x58] sm:$0xff]
    %v241 = vld [vmem:[%s2 + $0x60] sm:$0xff]
    %242 = vmatpush.msra.mxu0 0.0
    %243 = vmatpush.msra.mxu0 0.0
    %244 = vmatpush.msra.mxu0 0.0
    %245 = vmatpush.msra.mxu0 0.0
    %246 = vmatpush.msra.mxu0 0.0
    %247 = vmatpush.msra.mxu0 0.0
    %248 = vmatpush.msra.mxu0 0.0
    %249 = vmatpush.msra.mxu0 0.0
    %250 = vmatpush.msra.mxu0 0.0
    %251 = vmatpush.msra.mxu0 0.0
    %252 = vmatpush.msra.mxu0 0.0
    %253 = vmatpush.msra.mxu0 0.0
    %254 = vmatpush.msra.mxu0 0.0
    %255 = vmatpush.msra.mxu0 0.0
    %256 = vmatpush.msra.mxu0 %v241
    %257 = vmatpush.msra.mxu0 %v240
    %258 = vmatmul.f32.gmra.mxu0 %v217
    %v259 = vpop.f32.mrf.mxu0
    %v260 = vadd.f32 0.0, %v259
    %261 = vdwg.mxu0
    %263 = vrot.lane.b32.xlu0 %v260, 64
    %v264 = vpop.permute.xlu0 %263
    %v266 = vadd.f32 %v177, %v264
    %v267 = vld [vmem:[%s3 + $0x3] sm:$0x1]
    %v268 = vld [vmem:[%s3 + $0x4] sm:$0x1]
    %v269 = vperm.slane %v267, 0
    %v270 = vsel %vm127, 0.0, 0
    %272 = vmatpush.msra.mxu0 0.0
    %273 = vmatpush.msra.mxu0 0.0
    %274 = vmatpush.msra.mxu0 0.0
    %275 = vmatpush.msra.mxu0 0.0
    %276 = vmatpush.msra.mxu0 0.0
    %277 = vmatpush.msra.mxu0 0.0
    %278 = vmatpush.msra.mxu0 0.0
    %279 = vmatpush.msra.mxu0 0.0
    %280 = vmatpush.msra.mxu0 0.0
    %281 = vmatpush.msra.mxu0 0.0
    %282 = vmatpush.msra.mxu0 0.0
    %283 = vmatpush.msra.mxu0 0.0
    %284 = vmatpush.msra.mxu0 %v187
    %285 = vmatpush.msra.mxu0 %v186
    %286 = vmatpush.msra.mxu0 %v185
    %287 = vmatpush.msra.mxu0 %v184
    %288 = vmatmul.f32.gmra.mxu0 %v270
    %v289 = vpop.f32.mrf.mxu0
    %v290 = vadd.f32 %v269, %v289
    %291 = vdwg.mxu0
    %v292 = vperm.slane %v268, 0
    %293 = vmatpush.msra.mxu0 0.0
    %294 = vmatpush.msra.mxu0 0.0
    %295 = vmatpush.msra.mxu0 0.0
    %296 = vmatpush.msra.mxu0 0.0
    %297 = vmatpush.msra.mxu0 0.0
    %298 = vmatpush.msra.mxu0 0.0
    %299 = vmatpush.msra.mxu0 0.0
    %300 = vmatpush.msra.mxu0 0.0
    %301 = vmatpush.msra.mxu0 0.0
    %302 = vmatpush.msra.mxu0 0.0
    %303 = vmatpush.msra.mxu0 0.0
    %304 = vmatpush.msra.mxu0 0.0
    %305 = vmatpush.msra.mxu0 %v191
    %306 = vmatpush.msra.mxu0 %v190
    %307 = vmatpush.msra.mxu0 %v189
    %308 = vmatpush.msra.mxu0 %v188
    %309 = vmatmul.f32.gmra.mxu0 %v270
    %v310 = vpop.f32.mrf.mxu0
    %v311 = vadd.f32 %v292, %v310
    %312 = vdwg.mxu0
    %v313 = vadd.f32 %v239, %v290
    %v314 = vxor.u32 %v313, 2147483648
    %v315 = vmul.f32 %v314, 1.442695
    %v316 = vpow.pop %v315
    %v317 = vadd.f32 %v316, 1.0
    %v318 = vrcp.pop %v317
    %v319 = vmul.f32 %v317, %v318
    %v320 = vsub.f32 1.0, %v319
    %v321 = vmul.f32 %v318, %v320
    %v322 = vadd.f32 %v318, %v321
    %vm323 = vweird.f32 %v317
    %vm324 = vweird.f32 %v318
    %vm325 = vmor %vm323, %vm324
    %v326 = vsel %vm325, %v318, %v322
    %v327 = vand.u32 2147483647, %v317
    %vm328 = vcmp.eq.f32.partialorder %v327, 8.507059e+37
    %v329 = vand.u32 %v317, 2147483648
    %v330 = vor.u32 1.1754944e-38, %v329
    %v331 = vsel %vm328, %v330, %v326
    %v332 = vmul.f32 1.0, %v331
    %v333 = vmul.f32 %v332, %v311
    %335 = vrot.lane.b32.xlu0 %v333, 64
    %v336 = vpop.permute.xlu0 %335
    %v338 = vadd.f32 %v266, %v336
    %v339 = vtanh.pop %v338
    %v340 = vsub.f32 1.0, %v332
    %342 = vrot.lane.b32.xlu0 %v339, 96
    %v343 = vpop.permute.xlu0 %342
    %v345 = vmul.f32 %v340, %v343
    %v346 = vmul.f32 %v332, 0.0
    %v347 = vadd.f32 %v345, %v346
    %349 = vrot.lane.b32.xlu0 %v347, 96
    %v350 = vpop.permute.xlu0 %349
    %v351 = vsel %vm127, %v350, 0
    %353 = vmatpush.msra.mxu0 0.0
    %354 = vmatpush.msra.mxu0 0.0
    %355 = vmatpush.msra.mxu0 0.0
    %356 = vmatpush.msra.mxu0 0.0
    %357 = vmatpush.msra.mxu0 0.0
    %358 = vmatpush.msra.mxu0 0.0
    %359 = vmatpush.msra.mxu0 0.0
    %360 = vmatpush.msra.mxu0 0.0
    %361 = vmatpush.msra.mxu0 0.0
    %362 = vmatpush.msra.mxu0 0.0
    %363 = vmatpush.msra.mxu0 0.0
    %364 = vmatpush.msra.mxu0 0.0
    %365 = vmatpush.msra.mxu0 %v183
    %366 = vmatpush.msra.mxu0 %v182
    %367 = vmatpush.msra.mxu0 %v181
    %368 = vmatpush.msra.mxu0 %v180
    %369 = vmatmul.f32.gmra.mxu0 %v351
    %v370 = vpop.f32.mrf.mxu0
    %v371 = vadd.f32 0.0, %v370
    %372 = vdwg.mxu0
    %v374 = vrot.slane %v371, 1
    %v375 = vperm.slane %v371, 0
    %v376 = vperm.slane %v374, 0
    %v379 = vadd.f32 %v375, %v50
    %v380 = vadd.f32 %v376, %v53
    %v381 = vtanh.pop %v379
    %v382 = vtanh.pop %v380
    %v383 = vperm.slane %v179, 0
    %v384 = vmul.f32 %v381, %v383
    %v385 = vmul.f32 %v382, %v383
    %v386 = vsel %vm127, %v384, 0.0
    %387 = vadd.xlane.f32.xlu0 %v386
    %v388 = vpop.xlane.xlu0 %387
    %v389 = vsel %vm127, %v385, 0.0
    %390 = vadd.xlane.f32.xlu0 %v389
    %v391 = vpop.xlane.xlu0 %390
    %v394 = vlaneseq
    %v395 = vand.u32 %v394, 127
    %v396 = vperm.slane %v388, %v395
    %v397 = vperm.slane %v391, %v395
    %vm398 = vcmask 1041409
    %v399 = vsel %vm398, %v397, %v396
    %vm401 = vcmask 58368
    %v402 = vsel %vm401, %v399, -inf
    %403 = vmax.xlane.f32.xlu0 %v402
    %v404 = vpop.xlane.xlu0 %403
    %v406 = vperm.slane %v404, 0
    %v407 = vperm.slane %v404, 1
    %v410 = vsub.f32 %v388, %v406
    %v411 = vsub.f32 %v391, %v407
    %v412 = vmul.f32 %v410, 1.442695
    %v413 = vpow.pop %v412
    %v414 = vmul.f32 %v411, 1.442695
    %v415 = vpow.pop %v414
    %418 = vset.pattern.permute.xlu0 0
    %419 = vperm.xlu0 %418, %v413
    %v420 = vpop.permute.xlu0 %419
    %421 = vset.pattern.permute.xlu0 0
    %422 = vperm.xlu0 %421, %v415
    %v423 = vpop.permute.xlu0 %422
    %v424 = vperm.slane %v420, %v395
    %v425 = vperm.slane %v423, %v395
    %v426 = vsel %vm398, %v425, %v424
    %v428 = vsel %vm401, %v426, 0.0
    %429 = vadd.xlane.f32.xlu0 %v428
    %v430 = vpop.xlane.xlu0 %429
    %v431 = vrcp.pop %v430
    %v433 = vperm.slane %v431, 0
    %v434 = vperm.slane %v431, 1
    %v437 = vmul.f32 %v413, %v433
    %v438 = vmul.f32 %v415, %v434
    %440 = vset.pattern.permute.xlu0 0
    %441 = vperm.xlu0 %440, %v437
    %v442 = vpop.permute.xlu0 %441
    %445 = vset.pattern.permute.xlu0 0
    %446 = vperm.xlu0 %445, %v438
    %v447 = vpop.permute.xlu0 %446
    %v449 = vmul.f32 %v442, %v21
    %v450 = vmul.f32 %v447, %v22
    %v451 = vsel %vm25, %v449, 0.0
    %v452 = vrot.slane %v451, 4
    %v453 = vadd.f32 %v451, %v452
    %v454 = vrot.slane %v453, 2
    %v455 = vadd.f32 %v453, %v454
    %v456 = vrot.slane %v455, 1
    %v457 = vadd.f32 %v455, %v456
    %v458 = vsel %vm25, %v450, 0.0
    %v459 = vrot.slane %v458, 4
    %v460 = vadd.f32 %v458, %v459
    %v461 = vrot.slane %v460, 2
    %v462 = vadd.f32 %v460, %v461
    %v463 = vrot.slane %v462, 1
    %v464 = vadd.f32 %v462, %v463
    %v465 = vld [vmem:[%s2 + $0xd0] sm:$0xff]
    %v466 = vld [vmem:[%s2 + $0xd8] sm:$0xff]
    %v467 = vld [vmem:[%s2 + $0xe0] sm:$0xff]
    %v468 = vld [vmem:[%s2 + $0xe8] sm:$0xff]
    %v469 = vld [vmem:[%s2 + $0xf0] sm:$0xff]
    %v470 = vld [vmem:[%s2 + $0xf8] sm:$0xff]
    %v473 = vsel %vm398, %v464, %v457
    %v474 = vsel %vm25, %v473, 0
    %476 = vmatpush.msra.mxu0 0.0
    %477 = vmatpush.msra.mxu0 0.0
    %478 = vmatpush.msra.mxu0 0.0
    %479 = vmatpush.msra.mxu0 0.0
    %480 = vmatpush.msra.mxu0 0.0
    %481 = vmatpush.msra.mxu0 0.0
    %482 = vmatpush.msra.mxu0 0.0
    %483 = vmatpush.msra.mxu0 0.0
    %484 = vmatpush.msra.mxu0 0.0
    %485 = vmatpush.msra.mxu0 0.0
    %486 = vmatpush.msra.mxu0 0.0
    %487 = vmatpush.msra.mxu0 0.0
    %488 = vmatpush.msra.mxu0 0.0
    %489 = vmatpush.msra.mxu0 0.0
    %490 = vmatpush.msra.mxu0 %v470
    %491 = vmatpush.msra.mxu0 %v469
    %492 = vmatmul.f32.gmra.mxu0 %v474
    %v493 = vpop.f32.mrf.mxu0
    %v494 = vadd.f32 0.0, %v493
    %495 = vdwg.mxu0
    %496 = vmatpush.msra.mxu0 0.0
    %497 = vmatpush.msra.mxu0 0.0
    %498 = vmatpush.msra.mxu0 0.0
    %499 = vmatpush.msra.mxu0 0.0
    %500 = vmatpush.msra.mxu0 0.0
    %501 = vmatpush.msra.mxu0 0.0
    %502 = vmatpush.msra.mxu0 0.0
    %503 = vmatpush.msra.mxu0 0.0
    %504 = vmatpush.msra.mxu0 0.0
    %505 = vmatpush.msra.mxu0 0.0
    %506 = vmatpush.msra.mxu0 0.0
    %507 = vmatpush.msra.mxu0 0.0
    %508 = vmatpush.msra.mxu0 %v468
    %509 = vmatpush.msra.mxu0 %v467
    %510 = vmatpush.msra.mxu0 %v466
    %511 = vmatpush.msra.mxu0 %v465
    %512 = vmatmul.f32.gmra.mxu0 %v351
    %v513 = vpop.f32.mrf.mxu0
    %v514 = vadd.f32 %v494, %v513
    %515 = vdwg.mxu0
    %v516 = vld [vmem:[%s3 + $0x5] sm:$0x1]
    %v517 = vperm.slane %v516, 0
    %v518 = vadd.f32 %v514, %v517
    %v519 = vld [vmem:[%s2 + $0x100] sm:$0xff]
    %v520 = vld [vmem:[%s2 + $0x108] sm:$0xff]
    %v521 = vld [vmem:[%s2 + $0x110] sm:$0xff]
    %v522 = vld [vmem:[%s2 + $0x118] sm:$0xff]
    %v523 = vld [vmem:[%s3 + $0x6] sm:$0x1]
    %v524 = vperm.slane %v523, 0
    %v526 = vsel %vm127, %v518, 0
    %528 = vmatpush.msra.mxu0 0.0
    %529 = vmatpush.msra.mxu0 0.0
    %530 = vmatpush.msra.mxu0 0.0
    %531 = vmatpush.msra.mxu0 0.0
    %532 = vmatpush.msra.mxu0 0.0
    %533 = vmatpush.msra.mxu0 0.0
    %534 = vmatpush.msra.mxu0 0.0
    %535 = vmatpush.msra.mxu0 0.0
    %536 = vmatpush.msra.mxu0 0.0
    %537 = vmatpush.msra.mxu0 0.0
    %538 = vmatpush.msra.mxu0 0.0
    %539 = vmatpush.msra.mxu0 0.0
    %540 = vmatpush.msra.mxu0 %v522
    %541 = vmatpush.msra.mxu0 %v521
    %542 = vmatpush.msra.mxu0 %v520
    %543 = vmatpush.msra.mxu0 %v519
    %544 = vmatmul.f32.gmra.mxu0 %v526
    %v545 = vpop.f32.mrf.mxu0
    %v546 = vadd.f32 %v524, %v545
    %547 = vdwg.mxu0
    %v548 = vld [vmem:[%s2 + $0x120] sm:$0xff]
    %v549 = vld [vmem:[%s2 + $0x128] sm:$0xff]
    %v550 = vld [vmem:[%s2 + $0x130] sm:$0xff]
    %v551 = vld [vmem:[%s2 + $0x138] sm:$0xff]
    %v552 = vld [vmem:[%s3 + $0x7] sm:$0x1]
    %v553 = vperm.slane %v552, 0
    %554 = vmatpush.msra.mxu0 0.0
    %555 = vmatpush.msra.mxu0 0.0
    %556 = vmatpush.msra.mxu0 0.0
    %557 = vmatpush.msra.mxu0 0.0
    %558 = vmatpush.msra.mxu0 0.0
    %559 = vmatpush.msra.mxu0 0.0
    %560 = vmatpush.msra.mxu0 0.0
    %561 = vmatpush.msra.mxu0 0.0
    %562 = vmatpush.msra.mxu0 0.0
    %563 = vmatpush.msra.mxu0 0.0
    %564 = vmatpush.msra.mxu0 0.0
    %565 = vmatpush.msra.mxu0 0.0
    %566 = vmatpush.msra.mxu0 %v551
    %567 = vmatpush.msra.mxu0 %v550
    %568 = vmatpush.msra.mxu0 %v549
    %569 = vmatpush.msra.mxu0 %v548
    %570 = vmatmul.f32.gmra.mxu0 %v526
    %v571 = vpop.f32.mrf.mxu0
    %v572 = vadd.f32 %v553, %v571
    %573 = vdwg.mxu0
    %v574 = vld [vmem:[%s3 + $0x8] sm:$0x1]
    %v575 = vld [vmem:[%s3 + $0x9] sm:$0x1]
    %v576 = vperm.slane %v574, 0
    %577 = vmatpush.msra.mxu0 0.0
    %578 = vmatpush.msra.mxu0 0.0
    %579 = vmatpush.msra.mxu0 0.0
    %580 = vmatpush.msra.mxu0 0.0
    %581 = vmatpush.msra.mxu0 0.0
    %582 = vmatpush.msra.mxu0 0.0
    %583 = vmatpush.msra.mxu0 0.0
    %584 = vmatpush.msra.mxu0 0.0
    %585 = vmatpush.msra.mxu0 0.0
    %586 = vmatpush.msra.mxu0 0.0
    %587 = vmatpush.msra.mxu0 0.0
    %588 = vmatpush.msra.mxu0 0.0
    %589 = vmatpush.msra.mxu0 %v195
    %590 = vmatpush.msra.mxu0 %v194
    %591 = vmatpush.msra.mxu0 %v193
    %592 = vmatpush.msra.mxu0 %v192
    %593 = vmatmul.f32.gmra.mxu0 %v270
    %v594 = vpop.f32.mrf.mxu0
    %v595 = vadd.f32 %v576, %v594
    %596 = vdwg.mxu0
    %v597 = vperm.slane %v575, 0
    %598 = vmatpush.msra.mxu0 0.0
    %599 = vmatpush.msra.mxu0 0.0
    %600 = vmatpush.msra.mxu0 0.0
    %601 = vmatpush.msra.mxu0 0.0
    %602 = vmatpush.msra.mxu0 0.0
    %603 = vmatpush.msra.mxu0 0.0
    %604 = vmatpush.msra.mxu0 0.0
    %605 = vmatpush.msra.mxu0 0.0
    %606 = vmatpush.msra.mxu0 0.0
    %607 = vmatpush.msra.mxu0 0.0
    %608 = vmatpush.msra.mxu0 0.0
    %609 = vmatpush.msra.mxu0 0.0
    %610 = vmatpush.msra.mxu0 %v199
    %611 = vmatpush.msra.mxu0 %v198
    %612 = vmatpush.msra.mxu0 %v197
    %613 = vmatpush.msra.mxu0 %v196
    %614 = vmatmul.f32.gmra.mxu0 %v270
    %v615 = vpop.f32.mrf.mxu0
    %v616 = vadd.f32 %v597, %v615
    %617 = vdwg.mxu0
    %v618 = vadd.f32 %v546, %v595
    %v619 = vxor.u32 %v618, 2147483648
    %v620 = vmul.f32 %v619, 1.442695
    %v621 = vpow.pop %v620
    %v622 = vadd.f32 %v621, 1.0
    %v623 = vrcp.pop %v622
    %v624 = vmul.f32 %v622, %v623
    %v625 = vsub.f32 1.0, %v624
    %v626 = vmul.f32 %v623, %v625
    %v627 = vadd.f32 %v623, %v626
    %vm628 = vweird.f32 %v622
    %vm629 = vweird.f32 %v623
    %vm630 = vmor %vm628, %vm629
    %v631 = vsel %vm630, %v623, %v627
    %v632 = vand.u32 2147483647, %v622
    %vm633 = vcmp.eq.f32.partialorder %v632, 8.507059e+37
    %v634 = vand.u32 %v622, 2147483648
    %v635 = vor.u32 1.1754944e-38, %v634
    %v636 = vsel %vm633, %v635, %v631
    %v637 = vmul.f32 1.0, %v636
    %v638 = vmul.f32 %v637, %v616
    %v639 = vadd.f32 %v572, %v638
    %v640 = vtanh.pop %v639
    %v641 = vsub.f32 1.0, %v637
    %643 = vrot.lane.b32.xlu0 %v640, 32
    %v644 = vpop.permute.xlu0 %643
    %v646 = vmul.f32 %v641, %v644
    %v647 = vmul.f32 %v637, 0.0
    %v648 = vadd.f32 %v646, %v647
    %649 = vrot.lane.b32.xlu0 %v518, 32
    %v650 = vpop.permute.xlu0 %649
    %v652 = vadd.f32 %v648, %v650
    %v653 = vld [vmem:[%s2 + $0x180] sm:$0xff]
    %v654 = vld [vmem:[%s2 + $0x188] sm:$0xff]
    %v655 = vld [vmem:[%s2 + $0x190] sm:$0xff]
    %v656 = vld [vmem:[%s2 + $0x198] sm:$0xff]
    %v657 = vld [vmem:[%s3 + $0xa] sm:$0x1]
    %v658 = vperm.slane %v657, 0
    %660 = vrot.lane.b32.xlu0 %v652, 96
    %v661 = vpop.permute.xlu0 %660
    %v662 = vsel %vm127, %v661, 0
    %664 = vmatpush.msra.mxu0 0.0
    %665 = vmatpush.msra.mxu0 0.0
    %666 = vmatpush.msra.mxu0 0.0
    %667 = vmatpush.msra.mxu0 0.0
    %668 = vmatpush.msra.mxu0 0.0
    %669 = vmatpush.msra.mxu0 0.0
    %670 = vmatpush.msra.mxu0 0.0
    %671 = vmatpush.msra.mxu0 0.0
    %672 = vmatpush.msra.mxu0 0.0
    %673 = vmatpush.msra.mxu0 0.0
    %674 = vmatpush.msra.mxu0 0.0
    %675 = vmatpush.msra.mxu0 0.0
    %676 = vmatpush.msra.mxu0 %v656
    %677 = vmatpush.msra.mxu0 %v655
    %678 = vmatpush.msra.mxu0 %v654
    %679 = vmatpush.msra.mxu0 %v653
    %680 = vmatmul.f32.gmra.mxu0 %v662
    %v681 = vpop.f32.mrf.mxu0
    %v682 = vadd.f32 %v658, %v681
    %683 = vdwg.mxu0
    %v684 = vld [vmem:[%s2 + $0x1a0] sm:$0xff]
    %v685 = vld [vmem:[%s2 + $0x1a8] sm:$0xff]
    %v686 = vld [vmem:[%s2 + $0x1b0] sm:$0xff]
    %v687 = vld [vmem:[%s2 + $0x1b8] sm:$0xff]
    %v688 = vld [vmem:[%s3 + $0xb] sm:$0x1]
    %v689 = vperm.slane %v688, 0
    %690 = vmatpush.msra.mxu0 0.0
    %691 = vmatpush.msra.mxu0 0.0
    %692 = vmatpush.msra.mxu0 0.0
    %693 = vmatpush.msra.mxu0 0.0
    %694 = vmatpush.msra.mxu0 0.0
    %695 = vmatpush.msra.mxu0 0.0
    %696 = vmatpush.msra.mxu0 0.0
    %697 = vmatpush.msra.mxu0 0.0
    %698 = vmatpush.msra.mxu0 0.0
    %699 = vmatpush.msra.mxu0 0.0
    %700 = vmatpush.msra.mxu0 0.0
    %701 = vmatpush.msra.mxu0 0.0
    %702 = vmatpush.msra.mxu0 %v687
    %703 = vmatpush.msra.mxu0 %v686
    %704 = vmatpush.msra.mxu0 %v685
    %705 = vmatpush.msra.mxu0 %v684
    %706 = vmatmul.f32.gmra.mxu0 %v662
    %v707 = vpop.f32.mrf.mxu0
    %v708 = vadd.f32 %v689, %v707
    %709 = vdwg.mxu0
    %v710 = vld [vmem:[%s3 + $0xc] sm:$0x1]
    %v711 = vld [vmem:[%s3 + $0xd] sm:$0x1]
    %v712 = vperm.slane %v710, 0
    %713 = vmatpush.msra.mxu0 0.0
    %714 = vmatpush.msra.mxu0 0.0
    %715 = vmatpush.msra.mxu0 0.0
    %716 = vmatpush.msra.mxu0 0.0
    %717 = vmatpush.msra.mxu0 0.0
    %718 = vmatpush.msra.mxu0 0.0
    %719 = vmatpush.msra.mxu0 0.0
    %720 = vmatpush.msra.mxu0 0.0
    %721 = vmatpush.msra.mxu0 0.0
    %722 = vmatpush.msra.mxu0 0.0
    %723 = vmatpush.msra.mxu0 0.0
    %724 = vmatpush.msra.mxu0 0.0
    %725 = vmatpush.msra.mxu0 %v203
    %726 = vmatpush.msra.mxu0 %v202
    %727 = vmatpush.msra.mxu0 %v201
    %728 = vmatpush.msra.mxu0 %v200
    %729 = vmatmul.f32.gmra.mxu0 %v270
    %v730 = vpop.f32.mrf.mxu0
    %v731 = vadd.f32 %v712, %v730
    %732 = vdwg.mxu0
    %v733 = vperm.slane %v711, 0
    %734 = vmatpush.msra.mxu0 0.0
    %735 = vmatpush.msra.mxu0 0.0
    %736 = vmatpush.msra.mxu0 0.0
    %737 = vmatpush.msra.mxu0 0.0
    %738 = vmatpush.msra.mxu0 0.0
    %739 = vmatpush.msra.mxu0 0.0
    %740 = vmatpush.msra.mxu0 0.0
    %741 = vmatpush.msra.mxu0 0.0
    %742 = vmatpush.msra.mxu0 0.0
    %743 = vmatpush.msra.mxu0 0.0
    %744 = vmatpush.msra.mxu0 0.0
    %745 = vmatpush.msra.mxu0 0.0
    %746 = vmatpush.msra.mxu0 %v207
    %747 = vmatpush.msra.mxu0 %v206
    %748 = vmatpush.msra.mxu0 %v205
    %749 = vmatpush.msra.mxu0 %v204
    %750 = vmatmul.f32.gmra.mxu0 %v270
    %v751 = vpop.f32.mrf.mxu0
    %v752 = vadd.f32 %v733, %v751
    %753 = vdwg.mxu0
    %v754 = vadd.f32 %v682, %v731
    %v755 = vxor.u32 %v754, 2147483648
    %v756 = vmul.f32 %v755, 1.442695
    %v757 = vpow.pop %v756
    %v758 = vadd.f32 %v757, 1.0
    %v759 = vrcp.pop %v758
    %v760 = vmul.f32 %v758, %v759
    %v761 = vsub.f32 1.0, %v760
    %v762 = vmul.f32 %v759, %v761
    %v763 = vadd.f32 %v759, %v762
    %vm764 = vweird.f32 %v758
    %vm765 = vweird.f32 %v759
    %vm766 = vmor %vm764, %vm765
    %v767 = vsel %vm766, %v759, %v763
    %v768 = vand.u32 2147483647, %v758
    %vm769 = vcmp.eq.f32.partialorder %v768, 8.507059e+37
    %v770 = vand.u32 %v758, 2147483648
    %v771 = vor.u32 1.1754944e-38, %v770
    %v772 = vsel %vm769, %v771, %v767
    %v773 = vmul.f32 1.0, %v772
    %v774 = vmul.f32 %v773, %v752
    %v775 = vadd.f32 %v708, %v774
    %v776 = vtanh.pop %v775
    %v777 = vsub.f32 1.0, %v773
    %779 = vrot.lane.b32.xlu0 %v776, 32
    %v780 = vpop.permute.xlu0 %779
    %v782 = vmul.f32 %v777, %v780
    %v783 = vmul.f32 %v773, 0.0
    %v784 = vadd.f32 %v782, %v783
    %v785 = vadd.f32 %v784, %v652
    %786 = vmatpush.msra.mxu0 0.0
    %787 = vmatpush.msra.mxu0 0.0
    %788 = vmatpush.msra.mxu0 0.0
    %789 = vmatpush.msra.mxu0 0.0
    %790 = vmatpush.msra.mxu0 0.0
    %791 = vmatpush.msra.mxu0 0.0
    %792 = vmatpush.msra.mxu0 0.0
    %793 = vmatpush.msra.mxu0 0.0
    %794 = vmatpush.msra.mxu0 0.0
    %795 = vmatpush.msra.mxu0 0.0
    %796 = vmatpush.msra.mxu0 0.0
    %797 = vmatpush.msra.mxu0 0.0
    %798 = vmatpush.msra.mxu0 0.0
    %799 = vmatpush.msra.mxu0 0.0
    %800 = vmatpush.msra.mxu0 %v213
    %801 = vmatpush.msra.mxu0 %v212
    %802 = vmatmul.f32.gmra.mxu0 %v474
    %v803 = vpop.f32.mrf.mxu0
    %v804 = vadd.f32 0.0, %v803
    %805 = vdwg.mxu0
    %807 = vrot.lane.b32.xlu0 %v785, 96
    %v808 = vpop.permute.xlu0 %807
    %v809 = vsel %vm127, %v808, 0
    %811 = vmatpush.msra.mxu0 0.0
    %812 = vmatpush.msra.mxu0 0.0
    %813 = vmatpush.msra.mxu0 0.0
    %814 = vmatpush.msra.mxu0 0.0
    %815 = vmatpush.msra.mxu0 0.0
    %816 = vmatpush.msra.mxu0 0.0
    %817 = vmatpush.msra.mxu0 0.0
    %818 = vmatpush.msra.mxu0 0.0
    %819 = vmatpush.msra.mxu0 0.0
    %820 = vmatpush.msra.mxu0 0.0
    %821 = vmatpush.msra.mxu0 0.0
    %822 = vmatpush.msra.mxu0 0.0
    %823 = vmatpush.msra.mxu0 %v211
    %824 = vmatpush.msra.mxu0 %v210
    %825 = vmatpush.msra.mxu0 %v209
    %826 = vmatpush.msra.mxu0 %v208
    %827 = vmatmul.f32.gmra.mxu0 %v809
    %v828 = vpop.f32.mrf.mxu0
    %v829 = vadd.f32 %v804, %v828
    %830 = vdwg.mxu0
    %v831 = vld [vmem:[%s3 + $0xe] sm:$0x1]
    %v832 = vperm.slane %v831, 0
    %v833 = vadd.f32 %v829, %v832
    %v835 = vrot.slane %v833, 1
    %vm837 = vcmask 122880
    %838 = vst.msk [vmem:[%s4] sm:$0x1] %vm837, %v833
    %839 = vst.msk [vmem:[%s4 + $0x4] sm:$0x1] %vm837, %v835
    %v840 = vxor.u32 %v833, 2147483648
    %v841 = vmul.f32 %v840, 1.442695
    %v842 = vpow.pop %v841
    %v843 = vadd.f32 %v842, 1.0
    %v844 = vrcp.pop %v843
    %v845 = vmul.f32 %v843, %v844
    %v846 = vsub.f32 1.0, %v845
    %v847 = vmul.f32 %v844, %v846
    %v848 = vadd.f32 %v844, %v847
    %vm849 = vweird.f32 %v843
    %vm850 = vweird.f32 %v844
    %vm851 = vmor %vm849, %vm850
    %v852 = vsel %vm851, %v844, %v848
    %v853 = vand.u32 2147483647, %v843
    %vm854 = vcmp.eq.f32.partialorder %v853, 8.507059e+37
    %v855 = vand.u32 %v843, 2147483648
    %v856 = vor.u32 1.1754944e-38, %v855
    %v857 = vsel %vm854, %v856, %v852
    %v858 = vmul.f32 1.0, %v857
    %v860 = vrot.slane %v858, 1
    %v861 = vperm.slane %v858, 0
    %v862 = vperm.slane %v860, 0
    %863 = vrot.lane.b32.xlu0 %v861, 112
    %v864 = vpop.permute.xlu0 %863
    %865 = vrot.lane.b32.xlu0 %v862, 112
    %v866 = vpop.permute.xlu0 %865
    %vm869 = vcmask 0
    %870 = vst.msk [vmem:[%s6] sm:$0x1] %vm869, %v864
    %871 = vst.msk [vmem:[%s6 + $0x4] sm:$0x1] %vm869, %v866
    %v872 = vperm.slane %v442, %v395
    %v873 = vperm.slane %v447, %v395
    %vm876 = vcmask 57344
    %877 = vst.msk [vmem:[#allocation2] sm:$0x1] %vm876, %v872
    %878 = vst.msk [vmem:[#allocation2 + $0x4] sm:$0x1] %vm876, %v873
    %v879 = vld [vmem:[%s2 + $0x48] sm:$0xff]
    %v880 = vld [vmem:[%s2 + $0x50] sm:$0xff]
    %881 = vmatpush.msra.mxu0 0.0
    %882 = vmatpush.msra.mxu0 0.0
    %883 = vmatpush.msra.mxu0 0.0
    %884 = vmatpush.msra.mxu0 0.0
    %885 = vmatpush.msra.mxu0 0.0
    %886 = vmatpush.msra.mxu0 0.0
    %887 = vmatpush.msra.mxu0 0.0
    %888 = vmatpush.msra.mxu0 0.0
    %889 = vmatpush.msra.mxu0 0.0
    %890 = vmatpush.msra.mxu0 0.0
    %891 = vmatpush.msra.mxu0 0.0
    %892 = vmatpush.msra.mxu0 0.0
    %893 = vmatpush.msra.mxu0 0.0
    %894 = vmatpush.msra.mxu0 0.0
    %895 = vmatpush.msra.mxu0 %v880
    %896 = vmatpush.msra.mxu0 %v879
    %897 = vmatmul.f32.gmra.mxu0 %v474
    %v898 = vpop.f32.mrf.mxu0
    %v899 = vadd.f32 0.0, %v898
    %900 = vdwg.mxu0
    %v902 = vrot.slane %v899, 6
    %v904 = vadd.f32 %v177, %v902
    %v905 = vld [vmem:[%s2 + $0x58] sm:$0xff]
    %v906 = vld [vmem:[%s2 + $0x60] sm:$0xff]
    %907 = vmatpush.msra.mxu0 0.0
    %908 = vmatpush.msra.mxu0 0.0
    %909 = vmatpush.msra.mxu0 0.0
    %910 = vmatpush.msra.mxu0 0.0
    %911 = vmatpush.msra.mxu0 0.0
    %912 = vmatpush.msra.mxu0 0.0
    %913 = vmatpush.msra.mxu0 0.0
    %914 = vmatpush.msra.mxu0 0.0
    %915 = vmatpush.msra.mxu0 0.0
    %916 = vmatpush.msra.mxu0 0.0
    %917 = vmatpush.msra.mxu0 0.0
    %918 = vmatpush.msra.mxu0 0.0
    %919 = vmatpush.msra.mxu0 0.0
    %920 = vmatpush.msra.mxu0 0.0
    %921 = vmatpush.msra.mxu0 %v906
    %922 = vmatpush.msra.mxu0 %v905
    %923 = vmatmul.f32.gmra.mxu0 %v474
    %v924 = vpop.f32.mrf.mxu0
    %v925 = vadd.f32 0.0, %v924
    %926 = vdwg.mxu0
    %v928 = vrot.slane %v925, 6
    %929 = vrot.lane.b32.xlu0 %v928, 64
    %v930 = vpop.permute.xlu0 %929
    %v932 = vadd.f32 %v177, %v930
    %v933 = vld [vmem:[%s3 + $0x3] sm:$0x1]
    %v934 = vld [vmem:[%s3 + $0x4] sm:$0x1]
    %v935 = vperm.slane %v933, 0
    %936 = vmatpush.msra.mxu0 0.0
    %937 = vmatpush.msra.mxu0 0.0
    %938 = vmatpush.msra.mxu0 0.0
    %939 = vmatpush.msra.mxu0 0.0
    %940 = vmatpush.msra.mxu0 0.0
    %941 = vmatpush.msra.mxu0 0.0
    %942 = vmatpush.msra.mxu0 0.0
    %943 = vmatpush.msra.mxu0 0.0
    %944 = vmatpush.msra.mxu0 0.0
    %945 = vmatpush.msra.mxu0 0.0
    %946 = vmatpush.msra.mxu0 0.0
    %947 = vmatpush.msra.mxu0 0.0
    %948 = vmatpush.msra.mxu0 %v187
    %949 = vmatpush.msra.mxu0 %v186
    %950 = vmatpush.msra.mxu0 %v185
    %951 = vmatpush.msra.mxu0 %v184
    %952 = vmatmul.f32.gmra.mxu0 %v351
    %v953 = vpop.f32.mrf.mxu0
    %v954 = vadd.f32 %v935, %v953
    %955 = vdwg.mxu0
    %v956 = vperm.slane %v934, 0
    %957 = vmatpush.msra.mxu0 0.0
    %958 = vmatpush.msra.mxu0 0.0
    %959 = vmatpush.msra.mxu0 0.0
    %960 = vmatpush.msra.mxu0 0.0
    %961 = vmatpush.msra.mxu0 0.0
    %962 = vmatpush.msra.mxu0 0.0
    %963 = vmatpush.msra.mxu0 0.0
    %964 = vmatpush.msra.mxu0 0.0
    %965 = vmatpush.msra.mxu0 0.0
    %966 = vmatpush.msra.mxu0 0.0
    %967 = vmatpush.msra.mxu0 0.0
    %968 = vmatpush.msra.mxu0 0.0
    %969 = vmatpush.msra.mxu0 %v191
    %970 = vmatpush.msra.mxu0 %v190
    %971 = vmatpush.msra.mxu0 %v189
    %972 = vmatpush.msra.mxu0 %v188
    %973 = vmatmul.f32.gmra.mxu0 %v351
    %v974 = vpop.f32.mrf.mxu0
    %v975 = vadd.f32 %v956, %v974
    %976 = vdwg.mxu0
    %v978 = vrot.slane %v954, 6
    %v980 = vadd.f32 %v904, %v978
    %v981 = vxor.u32 %v980, 2147483648
    %v982 = vmul.f32 %v981, 1.442695
    %v983 = vpow.pop %v982
    %v984 = vadd.f32 %v983, 1.0
    %v985 = vrcp.pop %v984
    %v986 = vmul.f32 %v984, %v985
    %v987 = vsub.f32 1.0, %v986
    %v988 = vmul.f32 %v985, %v987
    %v989 = vadd.f32 %v985, %v988
    %vm990 = vweird.f32 %v984
    %vm991 = vweird.f32 %v985
    %vm992 = vmor %vm990, %vm991
    %v993 = vsel %vm992, %v985, %v989
    %v994 = vand.u32 2147483647, %v984
    %vm995 = vcmp.eq.f32.partialorder %v994, 8.507059e+37
    %v996 = vand.u32 %v984, 2147483648
    %v997 = vor.u32 1.1754944e-38, %v996
    %v998 = vsel %vm995, %v997, %v993
    %v999 = vmul.f32 1.0, %v998
    %v1001 = vrot.slane %v975, 6
    %v1003 = vmul.f32 %v999, %v1001
    %1005 = vrot.lane.b32.xlu0 %v1003, 64
    %v1006 = vpop.permute.xlu0 %1005
    %v1008 = vadd.f32 %v932, %v1006
    %v1009 = vtanh.pop %v1008
    %v1010 = vsub.f32 1.0, %v999
    %1012 = vrot.lane.b32.xlu0 %v1009, 96
    %v1013 = vpop.permute.xlu0 %1012
    %v1015 = vmul.f32 %v1010, %v1013
    %v1016 = vrot.slane %v347, 6
    %v1018 = vmul.f32 %v999, %v1016
    %v1019 = vadd.f32 %v1015, %v1018
    %v1021 = vrot.slane %v1019, 2
    %1022 = vrot.lane.b32.xlu0 %v1021, 96
    %v1023 = vpop.permute.xlu0 %1022
    %v1024 = vsel %vm127, %v1023, 0
    %1026 = vmatpush.msra.mxu0 0.0
    %1027 = vmatpush.msra.mxu0 0.0
    %1028 = vmatpush.msra.mxu0 0.0
    %1029 = vmatpush.msra.mxu0 0.0
    %1030 = vmatpush.msra.mxu0 0.0
    %1031 = vmatpush.msra.mxu0 0.0
    %1032 = vmatpush.msra.mxu0 0.0
    %1033 = vmatpush.msra.mxu0 0.0
    %1034 = vmatpush.msra.mxu0 0.0
    %1035 = vmatpush.msra.mxu0 0.0
    %1036 = vmatpush.msra.mxu0 0.0
    %1037 = vmatpush.msra.mxu0 0.0
    %1038 = vmatpush.msra.mxu0 %v183
    %1039 = vmatpush.msra.mxu0 %v182
    %1040 = vmatpush.msra.mxu0 %v181
    %1041 = vmatpush.msra.mxu0 %v180
    %1042 = vmatmul.f32.gmra.mxu0 %v1024
    %v1043 = vpop.f32.mrf.mxu0
    %v1044 = vadd.f32 0.0, %v1043
    %1045 = vdwg.mxu0
    %v1047 = vrot.slane %v1044, 1
    %v1048 = vperm.slane %v1044, 0
    %v1049 = vperm.slane %v1047, 0
    %v1052 = vadd.f32 %v1048, %v50
    %v1053 = vadd.f32 %v1049, %v53
    %v1054 = vtanh.pop %v1052
    %v1055 = vtanh.pop %v1053
    %v1056 = vmul.f32 %v1054, %v383
    %v1057 = vmul.f32 %v1055, %v383
    %v1058 = vsel %vm127, %v1056, 0.0
    %1059 = vadd.xlane.f32.xlu0 %v1058
    %v1060 = vpop.xlane.xlu0 %1059
    %v1061 = vsel %vm127, %v1057, 0.0
    %1062 = vadd.xlane.f32.xlu0 %v1061
    %v1063 = vpop.xlane.xlu0 %1062
    %v1066 = vperm.slane %v1060, %v395
    %v1067 = vperm.slane %v1063, %v395
    %v1068 = vsel %vm398, %v1067, %v1066
    %v1070 = vsel %vm401, %v1068, -inf
    %1071 = vmax.xlane.f32.xlu0 %v1070
    %v1072 = vpop.xlane.xlu0 %1071
    %v1074 = vperm.slane %v1072, 0
    %v1075 = vperm.slane %v1072, 1
    %v1078 = vsub.f32 %v1060, %v1074
    %v1079 = vsub.f32 %v1063, %v1075
    %v1080 = vmul.f32 %v1078, 1.442695
    %v1081 = vpow.pop %v1080
    %v1082 = vmul.f32 %v1079, 1.442695
    %v1083 = vpow.pop %v1082
    %1086 = vset.pattern.permute.xlu0 0
    %1087 = vperm.xlu0 %1086, %v1081
    %v1088 = vpop.permute.xlu0 %1087
    %1089 = vset.pattern.permute.xlu0 0
    %1090 = vperm.xlu0 %1089, %v1083
    %v1091 = vpop.permute.xlu0 %1090
    %v1092 = vperm.slane %v1088, %v395
    %v1093 = vperm.slane %v1091, %v395
    %v1094 = vsel %vm398, %v1093, %v1092
    %v1096 = vsel %vm401, %v1094, 0.0
    %1097 = vadd.xlane.f32.xlu0 %v1096
    %v1098 = vpop.xlane.xlu0 %1097
    %v1099 = vrcp.pop %v1098
    %v1101 = vperm.slane %v1099, 0
    %v1102 = vperm.slane %v1099, 1
    %v1105 = vmul.f32 %v1081, %v1101
    %v1106 = vmul.f32 %v1083, %v1102
    %1108 = vset.pattern.permute.xlu0 0
    %1109 = vperm.xlu0 %1108, %v1105
    %v1110 = vpop.permute.xlu0 %1109
    %1113 = vset.pattern.permute.xlu0 0
    %1114 = vperm.xlu0 %1113, %v1106
    %v1115 = vpop.permute.xlu0 %1114
    %v1117 = vmul.f32 %v1110, %v21
    %v1118 = vmul.f32 %v1115, %v22
    %v1119 = vsel %vm25, %v1117, 0.0
    %v1120 = vrot.slane %v1119, 4
    %v1121 = vadd.f32 %v1119, %v1120
    %v1122 = vrot.slane %v1121, 2
    %v1123 = vadd.f32 %v1121, %v1122
    %v1124 = vrot.slane %v1123, 1
    %v1125 = vadd.f32 %v1123, %v1124
    %v1126 = vsel %vm25, %v1118, 0.0
    %v1127 = vrot.slane %v1126, 4
    %v1128 = vadd.f32 %v1126, %v1127
    %v1129 = vrot.slane %v1128, 2
    %v1130 = vadd.f32 %v1128, %v1129
    %v1131 = vrot.slane %v1130, 1
    %v1132 = vadd.f32 %v1130, %v1131
    %v1133 = vld [vmem:[%s2 + $0xd0] sm:$0xff]
    %v1134 = vld [vmem:[%s2 + $0xd8] sm:$0xff]
    %v1135 = vld [vmem:[%s2 + $0xe0] sm:$0xff]
    %v1136 = vld [vmem:[%s2 + $0xe8] sm:$0xff]
    %v1137 = vld [vmem:[%s2 + $0xf0] sm:$0xff]
    %v1138 = vld [vmem:[%s2 + $0xf8] sm:$0xff]
    %v1141 = vsel %vm398, %v1132, %v1125
    %v1142 = vsel %vm25, %v1141, 0
    %1144 = vmatpush.msra.mxu0 0.0
    %1145 = vmatpush.msra.mxu0 0.0
    %1146 = vmatpush.msra.mxu0 0.0
    %1147 = vmatpush.msra.mxu0 0.0
    %1148 = vmatpush.msra.mxu0 0.0
    %1149 = vmatpush.msra.mxu0 0.0
    %1150 = vmatpush.msra.mxu0 0.0
    %1151 = vmatpush.msra.mxu0 0.0
    %1152 = vmatpush.msra.mxu0 0.0
    %1153 = vmatpush.msra.mxu0 0.0
    %1154 = vmatpush.msra.mxu0 0.0
    %1155 = vmatpush.msra.mxu0 0.0
    %1156 = vmatpush.msra.mxu0 0.0
    %1157 = vmatpush.msra.mxu0 0.0
    %1158 = vmatpush.msra.mxu0 %v1138
    %1159 = vmatpush.msra.mxu0 %v1137
    %1160 = vmatmul.f32.gmra.mxu0 %v1142
    %v1161 = vpop.f32.mrf.mxu0
    %v1162 = vadd.f32 0.0, %v1161
    %1163 = vdwg.mxu0
    %1164 = vmatpush.msra.mxu0 0.0
    %1165 = vmatpush.msra.mxu0 0.0
    %1166 = vmatpush.msra.mxu0 0.0
    %1167 = vmatpush.msra.mxu0 0.0
    %1168 = vmatpush.msra.mxu0 0.0
    %1169 = vmatpush.msra.mxu0 0.0
    %1170 = vmatpush.msra.mxu0 0.0
    %1171 = vmatpush.msra.mxu0 0.0
    %1172 = vmatpush.msra.mxu0 0.0
    %1173 = vmatpush.msra.mxu0 0.0
    %1174 = vmatpush.msra.mxu0 0.0
    %1175 = vmatpush.msra.mxu0 0.0
    %1176 = vmatpush.msra.mxu0 %v1136
    %1177 = vmatpush.msra.mxu0 %v1135
    %1178 = vmatpush.msra.mxu0 %v1134
    %1179 = vmatpush.msra.mxu0 %v1133
    %1180 = vmatmul.f32.gmra.mxu0 %v1024
    %v1181 = vpop.f32.mrf.mxu0
    %v1182 = vadd.f32 %v1162, %v1181
    %1183 = vdwg.mxu0
    %v1184 = vld [vmem:[%s3 + $0x5] sm:$0x1]
    %v1185 = vperm.slane %v1184, 0
    %v1186 = vadd.f32 %v1182, %v1185
    %v1187 = vld [vmem:[%s2 + $0x100] sm:$0xff]
    %v1188 = vld [vmem:[%s2 + $0x108] sm:$0xff]
    %v1189 = vld [vmem:[%s2 + $0x110] sm:$0xff]
    %v1190 = vld [vmem:[%s2 + $0x118] sm:$0xff]
    %v1191 = vld [vmem:[%s3 + $0x6] sm:$0x1]
    %v1192 = vperm.slane %v1191, 0
    %v1194 = vsel %vm127, %v1186, 0
    %1196 = vmatpush.msra.mxu0 0.0
    %1197 = vmatpush.msra.mxu0 0.0
    %1198 = vmatpush.msra.mxu0 0.0
    %1199 = vmatpush.msra.mxu0 0.0
    %1200 = vmatpush.msra.mxu0 0.0
    %1201 = vmatpush.msra.mxu0 0.0
    %1202 = vmatpush.msra.mxu0 0.0
    %1203 = vmatpush.msra.mxu0 0.0
    %1204 = vmatpush.msra.mxu0 0.0
    %1205 = vmatpush.msra.mxu0 0.0
    %1206 = vmatpush.msra.mxu0 0.0
    %1207 = vmatpush.msra.mxu0 0.0
    %1208 = vmatpush.msra.mxu0 %v1190
    %1209 = vmatpush.msra.mxu0 %v1189
    %1210 = vmatpush.msra.mxu0 %v1188
    %1211 = vmatpush.msra.mxu0 %v1187
    %1212 = vmatmul.f32.gmra.mxu0 %v1194
    %v1213 = vpop.f32.mrf.mxu0
    %v1214 = vadd.f32 %v1192, %v1213
    %1215 = vdwg.mxu0
    %v1216 = vld [vmem:[%s2 + $0x120] sm:$0xff]
    %v1217 = vld [vmem:[%s2 + $0x128] sm:$0xff]
    %v1218 = vld [vmem:[%s2 + $0x130] sm:$0xff]
    %v1219 = vld [vmem:[%s2 + $0x138] sm:$0xff]
    %v1220 = vld [vmem:[%s3 + $0x7] sm:$0x1]
    %v1221 = vperm.slane %v1220, 0
    %1222 = vmatpush.msra.mxu0 0.0
    %1223 = vmatpush.msra.mxu0 0.0
    %1224 = vmatpush.msra.mxu0 0.0
    %1225 = vmatpush.msra.mxu0 0.0
    %1226 = vmatpush.msra.mxu0 0.0
    %1227 = vmatpush.msra.mxu0 0.0
    %1228 = vmatpush.msra.mxu0 0.0
    %1229 = vmatpush.msra.mxu0 0.0
    %1230 = vmatpush.msra.mxu0 0.0
    %1231 = vmatpush.msra.mxu0 0.0
    %1232 = vmatpush.msra.mxu0 0.0
    %1233 = vmatpush.msra.mxu0 0.0
    %1234 = vmatpush.msra.mxu0 %v1219
    %1235 = vmatpush.msra.mxu0 %v1218
    %1236 = vmatpush.msra.mxu0 %v1217
    %1237 = vmatpush.msra.mxu0 %v1216
    %1238 = vmatmul.f32.gmra.mxu0 %v1194
    %v1239 = vpop.f32.mrf.mxu0
    %v1240 = vadd.f32 %v1221, %v1239
    %1241 = vdwg.mxu0
    %v1242 = vld [vmem:[%s3 + $0x8] sm:$0x1]
    %v1243 = vld [vmem:[%s3 + $0x9] sm:$0x1]
    %v1244 = vperm.slane %v1242, 0
    %1246 = vrot.lane.b32.xlu0 %v648, 96
    %v1247 = vpop.permute.xlu0 %1246
    %v1248 = vsel %vm127, %v1247, 0
    %1250 = vmatpush.msra.mxu0 0.0
    %1251 = vmatpush.msra.mxu0 0.0
    %1252 = vmatpush.msra.mxu0 0.0
    %1253 = vmatpush.msra.mxu0 0.0
    %1254 = vmatpush.msra.mxu0 0.0
    %1255 = vmatpush.msra.mxu0 0.0
    %1256 = vmatpush.msra.mxu0 0.0
    %1257 = vmatpush.msra.mxu0 0.0
    %1258 = vmatpush.msra.mxu0 0.0
    %1259 = vmatpush.msra.mxu0 0.0
    %1260 = vmatpush.msra.mxu0 0.0
    %1261 = vmatpush.msra.mxu0 0.0
    %1262 = vmatpush.msra.mxu0 %v195
    %1263 = vmatpush.msra.mxu0 %v194
    %1264 = vmatpush.msra.mxu0 %v193
    %1265 = vmatpush.msra.mxu0 %v192
    %1266 = vmatmul.f32.gmra.mxu0 %v1248
    %v1267 = vpop.f32.mrf.mxu0
    %v1268 = vadd.f32 %v1244, %v1267
    %1269 = vdwg.mxu0
    %v1270 = vperm.slane %v1243, 0
    %1271 = vmatpush.msra.mxu0 0.0
    %1272 = vmatpush.msra.mxu0 0.0
    %1273 = vmatpush.msra.mxu0 0.0
    %1274 = vmatpush.msra.mxu0 0.0
    %1275 = vmatpush.msra.mxu0 0.0
    %1276 = vmatpush.msra.mxu0 0.0
    %1277 = vmatpush.msra.mxu0 0.0
    %1278 = vmatpush.msra.mxu0 0.0
    %1279 = vmatpush.msra.mxu0 0.0
    %1280 = vmatpush.msra.mxu0 0.0
    %1281 = vmatpush.msra.mxu0 0.0
    %1282 = vmatpush.msra.mxu0 0.0
    %1283 = vmatpush.msra.mxu0 %v199
    %1284 = vmatpush.msra.mxu0 %v198
    %1285 = vmatpush.msra.mxu0 %v197
    %1286 = vmatpush.msra.mxu0 %v196
    %1287 = vmatmul.f32.gmra.mxu0 %v1248
    %v1288 = vpop.f32.mrf.mxu0
    %v1289 = vadd.f32 %v1270, %v1288
    %1290 = vdwg.mxu0
    %v1291 = vadd.f32 %v1214, %v1268
    %v1292 = vxor.u32 %v1291, 2147483648
    %v1293 = vmul.f32 %v1292, 1.442695
    %v1294 = vpow.pop %v1293
    %v1295 = vadd.f32 %v1294, 1.0
    %v1296 = vrcp.pop %v1295
    %v1297 = vmul.f32 %v1295, %v1296
    %v1298 = vsub.f32 1.0, %v1297
    %v1299 = vmul.f32 %v1296, %v1298
    %v1300 = vadd.f32 %v1296, %v1299
    %vm1301 = vweird.f32 %v1295
    %vm1302 = vweird.f32 %v1296
    %vm1303 = vmor %vm1301, %vm1302
    %v1304 = vsel %vm1303, %v1296, %v1300
    %v1305 = vand.u32 2147483647, %v1295
    %vm1306 = vcmp.eq.f32.partialorder %v1305, 8.507059e+37
    %v1307 = vand.u32 %v1295, 2147483648
    %v1308 = vor.u32 1.1754944e-38, %v1307
    %v1309 = vsel %vm1306, %v1308, %v1304
    %v1310 = vmul.f32 1.0, %v1309
    %v1311 = vmul.f32 %v1310, %v1289
    %v1312 = vadd.f32 %v1240, %v1311
    %v1313 = vtanh.pop %v1312
    %v1314 = vsub.f32 1.0, %v1310
    %1316 = vrot.lane.b32.xlu0 %v1313, 32
    %v1317 = vpop.permute.xlu0 %1316
    %v1319 = vmul.f32 %v1314, %v1317
    %v1320 = vmul.f32 %v1310, %v648
    %v1321 = vadd.f32 %v1319, %v1320
    %1322 = vrot.lane.b32.xlu0 %v1186, 32
    %v1323 = vpop.permute.xlu0 %1322
    %v1325 = vadd.f32 %v1321, %v1323
    %v1326 = vld [vmem:[%s2 + $0x180] sm:$0xff]
    %v1327 = vld [vmem:[%s2 + $0x188] sm:$0xff]
    %v1328 = vld [vmem:[%s2 + $0x190] sm:$0xff]
    %v1329 = vld [vmem:[%s2 + $0x198] sm:$0xff]
    %v1330 = vld [vmem:[%s3 + $0xa] sm:$0x1]
    %v1331 = vperm.slane %v1330, 0
    %1333 = vrot.lane.b32.xlu0 %v1325, 96
    %v1334 = vpop.permute.xlu0 %1333
    %v1335 = vsel %vm127, %v1334, 0
    %1337 = vmatpush.msra.mxu0 0.0
    %1338 = vmatpush.msra.mxu0 0.0
    %1339 = vmatpush.msra.mxu0 0.0
    %1340 = vmatpush.msra.mxu0 0.0
    %1341 = vmatpush.msra.mxu0 0.0
    %1342 = vmatpush.msra.mxu0 0.0
    %1343 = vmatpush.msra.mxu0 0.0
    %1344 = vmatpush.msra.mxu0 0.0
    %1345 = vmatpush.msra.mxu0 0.0
    %1346 = vmatpush.msra.mxu0 0.0
    %1347 = vmatpush.msra.mxu0 0.0
    %1348 = vmatpush.msra.mxu0 0.0
    %1349 = vmatpush.msra.mxu0 %v1329
    %1350 = vmatpush.msra.mxu0 %v1328
    %1351 = vmatpush.msra.mxu0 %v1327
    %1352 = vmatpush.msra.mxu0 %v1326
    %1353 = vmatmul.f32.gmra.mxu0 %v1335
    %v1354 = vpop.f32.mrf.mxu0
    %v1355 = vadd.f32 %v1331, %v1354
    %1356 = vdwg.mxu0
    %v1357 = vld [vmem:[%s2 + $0x1a0] sm:$0xff]
    %v1358 = vld [vmem:[%s2 + $0x1a8] sm:$0xff]
    %v1359 = vld [vmem:[%s2 + $0x1b0] sm:$0xff]
    %v1360 = vld [vmem:[%s2 + $0x1b8] sm:$0xff]
    %v1361 = vld [vmem:[%s3 + $0xb] sm:$0x1]
    %v1362 = vperm.slane %v1361, 0
    %1363 = vmatpush.msra.mxu0 0.0
    %1364 = vmatpush.msra.mxu0 0.0
    %1365 = vmatpush.msra.mxu0 0.0
    %1366 = vmatpush.msra.mxu0 0.0
    %1367 = vmatpush.msra.mxu0 0.0
    %1368 = vmatpush.msra.mxu0 0.0
    %1369 = vmatpush.msra.mxu0 0.0
    %1370 = vmatpush.msra.mxu0 0.0
    %1371 = vmatpush.msra.mxu0 0.0
    %1372 = vmatpush.msra.mxu0 0.0
    %1373 = vmatpush.msra.mxu0 0.0
    %1374 = vmatpush.msra.mxu0 0.0
    %1375 = vmatpush.msra.mxu0 %v1360
    %1376 = vmatpush.msra.mxu0 %v1359
    %1377 = vmatpush.msra.mxu0 %v1358
    %1378 = vmatpush.msra.mxu0 %v1357
    %1379 = vmatmul.f32.gmra.mxu0 %v1335
    %v1380 = vpop.f32.mrf.mxu0
    %v1381 = vadd.f32 %v1362, %v1380
    %1382 = vdwg.mxu0
    %v1383 = vld [vmem:[%s3 + $0xc] sm:$0x1]
    %v1384 = vld [vmem:[%s3 + $0xd] sm:$0x1]
    %v1385 = vperm.slane %v1383, 0
    %1387 = vrot.lane.b32.xlu0 %v784, 96
    %v1388 = vpop.permute.xlu0 %1387
    %v1389 = vsel %vm127, %v1388, 0
    %1391 = vmatpush.msra.mxu0 0.0
    %1392 = vmatpush.msra.mxu0 0.0
    %1393 = vmatpush.msra.mxu0 0.0
    %1394 = vmatpush.msra.mxu0 0.0
    %1395 = vmatpush.msra.mxu0 0.0
    %1396 = vmatpush.msra.mxu0 0.0
    %1397 = vmatpush.msra.mxu0 0.0
    %1398 = vmatpush.msra.mxu0 0.0
    %1399 = vmatpush.msra.mxu0 0.0
    %1400 = vmatpush.msra.mxu0 0.0
    %1401 = vmatpush.msra.mxu0 0.0
    %1402 = vmatpush.msra.mxu0 0.0
    %1403 = vmatpush.msra.mxu0 %v203
    %1404 = vmatpush.msra.mxu0 %v202
    %1405 = vmatpush.msra.mxu0 %v201
    %1406 = vmatpush.msra.mxu0 %v200
    %1407 = vmatmul.f32.gmra.mxu0 %v1389
    %v1408 = vpop.f32.mrf.mxu0
    %v1409 = vadd.f32 %v1385, %v1408
    %1410 = vdwg.mxu0
    %v1411 = vperm.slane %v1384, 0
    %1412 = vmatpush.msra.mxu0 0.0
    %1413 = vmatpush.msra.mxu0 0.0
    %1414 = vmatpush.msra.mxu0 0.0
    %1415 = vmatpush.msra.mxu0 0.0
    %1416 = vmatpush.msra.mxu0 0.0
    %1417 = vmatpush.msra.mxu0 0.0
    %1418 = vmatpush.msra.mxu0 0.0
    %1419 = vmatpush.msra.mxu0 0.0
    %1420 = vmatpush.msra.mxu0 0.0
    %1421 = vmatpush.msra.mxu0 0.0
    %1422 = vmatpush.msra.mxu0 0.0
    %1423 = vmatpush.msra.mxu0 0.0
    %1424 = vmatpush.msra.mxu0 %v207
    %1425 = vmatpush.msra.mxu0 %v206
    %1426 = vmatpush.msra.mxu0 %v205
    %1427 = vmatpush.msra.mxu0 %v204
    %1428 = vmatmul.f32.gmra.mxu0 %v1389
    %v1429 = vpop.f32.mrf.mxu0
    %v1430 = vadd.f32 %v1411, %v1429
    %1431 = vdwg.mxu0
    %v1432 = vadd.f32 %v1355, %v1409
    %v1433 = vxor.u32 %v1432, 2147483648
    %v1434 = vmul.f32 %v1433, 1.442695
    %v1435 = vpow.pop %v1434
    %v1436 = vadd.f32 %v1435, 1.0
    %v1437 = vrcp.pop %v1436
    %v1438 = vmul.f32 %v1436, %v1437
    %v1439 = vsub.f32 1.0, %v1438
    %v1440 = vmul.f32 %v1437, %v1439
    %v1441 = vadd.f32 %v1437, %v1440
    %vm1442 = vweird.f32 %v1436
    %vm1443 = vweird.f32 %v1437
    %vm1444 = vmor %vm1442, %vm1443
    %v1445 = vsel %vm1444, %v1437, %v1441
    %v1446 = vand.u32 2147483647, %v1436
    %vm1447 = vcmp.eq.f32.partialorder %v1446, 8.507059e+37
    %v1448 = vand.u32 %v1436, 2147483648
    %v1449 = vor.u32 1.1754944e-38, %v1448
    %v1450 = vsel %vm1447, %v1449, %v1445
    %v1451 = vmul.f32 1.0, %v1450
    %v1452 = vmul.f32 %v1451, %v1430
    %v1453 = vadd.f32 %v1381, %v1452
    %v1454 = vtanh.pop %v1453
    %v1455 = vsub.f32 1.0, %v1451
    %1457 = vrot.lane.b32.xlu0 %v1454, 32
    %v1458 = vpop.permute.xlu0 %1457
    %v1460 = vmul.f32 %v1455, %v1458
    %v1461 = vmul.f32 %v1451, %v784
    %v1462 = vadd.f32 %v1460, %v1461
    %v1463 = vadd.f32 %v1462, %v1325
    %1464 = vmatpush.msra.mxu0 0.0
    %1465 = vmatpush.msra.mxu0 0.0
    %1466 = vmatpush.msra.mxu0 0.0
    %1467 = vmatpush.msra.mxu0 0.0
    %1468 = vmatpush.msra.mxu0 0.0
    %1469 = vmatpush.msra.mxu0 0.0
    %1470 = vmatpush.msra.mxu0 0.0
    %1471 = vmatpush.msra.mxu0 0.0
    %1472 = vmatpush.msra.mxu0 0.0
    %1473 = vmatpush.msra.mxu0 0.0
    %1474 = vmatpush.msra.mxu0 0.0
    %1475 = vmatpush.msra.mxu0 0.0
    %1476 = vmatpush.msra.mxu0 0.0
    %1477 = vmatpush.msra.mxu0 0.0
    %1478 = vmatpush.msra.mxu0 %v213
    %1479 = vmatpush.msra.mxu0 %v212
    %1480 = vmatmul.f32.gmra.mxu0 %v1142
    %v1481 = vpop.f32.mrf.mxu0
    %v1482 = vadd.f32 0.0, %v1481
    %1483 = vdwg.mxu0
    %1485 = vrot.lane.b32.xlu0 %v1463, 96
    %v1486 = vpop.permute.xlu0 %1485
    %v1487 = vsel %vm127, %v1486, 0
    %1489 = vmatpush.msra.mxu0 0.0
    %1490 = vmatpush.msra.mxu0 0.0
    %1491 = vmatpush.msra.mxu0 0.0
    %1492 = vmatpush.msra.mxu0 0.0
    %1493 = vmatpush.msra.mxu0 0.0
    %1494 = vmatpush.msra.mxu0 0.0
    %1495 = vmatpush.msra.mxu0 0.0
    %1496 = vmatpush.msra.mxu0 0.0
    %1497 = vmatpush.msra.mxu0 0.0
    %1498 = vmatpush.msra.mxu0 0.0
    %1499 = vmatpush.msra.mxu0 0.0
    %1500 = vmatpush.msra.mxu0 0.0
    %1501 = vmatpush.msra.mxu0 %v211
    %1502 = vmatpush.msra.mxu0 %v210
    %1503 = vmatpush.msra.mxu0 %v209
    %1504 = vmatpush.msra.mxu0 %v208
    %1505 = vmatmul.f32.gmra.mxu0 %v1487
    %v1506 = vpop.f32.mrf.mxu0
    %v1507 = vadd.f32 %v1482, %v1506
    %1508 = vdwg.mxu0
    %v1509 = vld [vmem:[%s3 + $0xe] sm:$0x1]
    %v1510 = vperm.slane %v1509, 0
    %v1511 = vadd.f32 %v1507, %v1510
    %v1513 = vrot.slane %v1511, 1
    %1515 = vst.msk [vmem:[%s4 + $0x1] sm:$0x1] %vm837, %v1511
    %1516 = vst.msk [vmem:[%s4 + $0x5] sm:$0x1] %vm837, %v1513
    %v1517 = vxor.u32 %v1511, 2147483648
    %v1518 = vmul.f32 %v1517, 1.442695
    %v1519 = vpow.pop %v1518
    %v1520 = vadd.f32 %v1519, 1.0
    %v1521 = vrcp.pop %v1520
    %v1522 = vmul.f32 %v1520, %v1521
    %v1523 = vsub.f32 1.0, %v1522
    %v1524 = vmul.f32 %v1521, %v1523
    %v1525 = vadd.f32 %v1521, %v1524
    %vm1526 = vweird.f32 %v1520
    %vm1527 = vweird.f32 %v1521
    %vm1528 = vmor %vm1526, %vm1527
    %v1529 = vsel %vm1528, %v1521, %v1525
    %v1530 = vand.u32 2147483647, %v1520
    %vm1531 = vcmp.eq.f32.partialorder %v1530, 8.507059e+37
    %v1532 = vand.u32 %v1520, 2147483648
    %v1533 = vor.u32 1.1754944e-38, %v1532
    %v1534 = vsel %vm1531, %v1533, %v1529
    %v1535 = vmul.f32 1.0, %v1534
    %v1537 = vrot.slane %v1535, 1
    %v1538 = vperm.slane %v1535, 0
    %v1539 = vperm.slane %v1537, 0
    %1540 = vrot.lane.b32.xlu0 %v1538, 112
    %v1541 = vpop.permute.xlu0 %1540
    %1542 = vrot.lane.b32.xlu0 %v1539, 112
    %v1543 = vpop.permute.xlu0 %1542
    %1546 = vst.msk [vmem:[%s6 + $0x1] sm:$0x1] %vm869, %v1541
    %1547 = vst.msk [vmem:[%s6 + $0x5] sm:$0x1] %vm869, %v1543
    %v1548 = vperm.slane %v1110, %v395
    %v1549 = vperm.slane %v1115, %v395
    %1552 = vst.msk [vmem:[#allocation2 + $0x1] sm:$0x1] %vm876, %v1548
    %1553 = vst.msk [vmem:[#allocation2 + $0x5] sm:$0x1] %vm876, %v1549
    %v1554 = vld [vmem:[%s2 + $0x48] sm:$0xff]
    %v1555 = vld [vmem:[%s2 + $0x50] sm:$0xff]
    %1556 = vmatpush.msra.mxu0 0.0
    %1557 = vmatpush.msra.mxu0 0.0
    %1558 = vmatpush.msra.mxu0 0.0
    %1559 = vmatpush.msra.mxu0 0.0
    %1560 = vmatpush.msra.mxu0 0.0
    %1561 = vmatpush.msra.mxu0 0.0
    %1562 = vmatpush.msra.mxu0 0.0
    %1563 = vmatpush.msra.mxu0 0.0
    %1564 = vmatpush.msra.mxu0 0.0
    %1565 = vmatpush.msra.mxu0 0.0
    %1566 = vmatpush.msra.mxu0 0.0
    %1567 = vmatpush.msra.mxu0 0.0
    %1568 = vmatpush.msra.mxu0 0.0
    %1569 = vmatpush.msra.mxu0 0.0
    %1570 = vmatpush.msra.mxu0 %v1555
    %1571 = vmatpush.msra.mxu0 %v1554
    %1572 = vmatmul.f32.gmra.mxu0 %v1142
    %v1573 = vpop.f32.mrf.mxu0
    %v1574 = vadd.f32 0.0, %v1573
    %1575 = vdwg.mxu0
    %v1577 = vrot.slane %v1574, 4
    %v1579 = vadd.f32 %v177, %v1577
    %v1580 = vld [vmem:[%s2 + $0x58] sm:$0xff]
    %v1581 = vld [vmem:[%s2 + $0x60] sm:$0xff]
    %1582 = vmatpush.msra.mxu0 0.0
    %1583 = vmatpush.msra.mxu0 0.0
    %1584 = vmatpush.msra.mxu0 0.0
    %1585 = vmatpush.msra.mxu0 0.0
    %1586 = vmatpush.msra.mxu0 0.0
    %1587 = vmatpush.msra.mxu0 0.0
    %1588 = vmatpush.msra.mxu0 0.0
    %1589 = vmatpush.msra.mxu0 0.0
    %1590 = vmatpush.msra.mxu0 0.0
    %1591 = vmatpush.msra.mxu0 0.0
    %1592 = vmatpush.msra.mxu0 0.0
    %1593 = vmatpush.msra.mxu0 0.0
    %1594 = vmatpush.msra.mxu0 0.0
    %1595 = vmatpush.msra.mxu0 0.0
    %1596 = vmatpush.msra.mxu0 %v1581
    %1597 = vmatpush.msra.mxu0 %v1580
    %1598 = vmatmul.f32.gmra.mxu0 %v1142
    %v1599 = vpop.f32.mrf.mxu0
    %v1600 = vadd.f32 0.0, %v1599
    %1601 = vdwg.mxu0
    %v1603 = vrot.slane %v1600, 4
    %1604 = vrot.lane.b32.xlu0 %v1603, 64
    %v1605 = vpop.permute.xlu0 %1604
    %v1607 = vadd.f32 %v177, %v1605
    %v1608 = vld [vmem:[%s3 + $0x3] sm:$0x1]
    %v1609 = vld [vmem:[%s3 + $0x4] sm:$0x1]
    %v1610 = vperm.slane %v1608, 0
    %1611 = vmatpush.msra.mxu0 0.0
    %1612 = vmatpush.msra.mxu0 0.0
    %1613 = vmatpush.msra.mxu0 0.0
    %1614 = vmatpush.msra.mxu0 0.0
    %1615 = vmatpush.msra.mxu0 0.0
    %1616 = vmatpush.msra.mxu0 0.0
    %1617 = vmatpush.msra.mxu0 0.0
    %1618 = vmatpush.msra.mxu0 0.0
    %1619 = vmatpush.msra.mxu0 0.0
    %1620 = vmatpush.msra.mxu0 0.0
    %1621 = vmatpush.msra.mxu0 0.0
    %1622 = vmatpush.msra.mxu0 0.0
    %1623 = vmatpush.msra.mxu0 %v187
    %1624 = vmatpush.msra.mxu0 %v186
    %1625 = vmatpush.msra.mxu0 %v185
    %1626 = vmatpush.msra.mxu0 %v184
    %1627 = vmatmul.f32.gmra.mxu0 %v1024
    %v1628 = vpop.f32.mrf.mxu0
    %v1629 = vadd.f32 %v1610, %v1628
    %1630 = vdwg.mxu0
    %v1631 = vperm.slane %v1609, 0
    %1632 = vmatpush.msra.mxu0 0.0
    %1633 = vmatpush.msra.mxu0 0.0
    %1634 = vmatpush.msra.mxu0 0.0
    %1635 = vmatpush.msra.mxu0 0.0
    %1636 = vmatpush.msra.mxu0 0.0
    %1637 = vmatpush.msra.mxu0 0.0
    %1638 = vmatpush.msra.mxu0 0.0
    %1639 = vmatpush.msra.mxu0 0.0
    %1640 = vmatpush.msra.mxu0 0.0
    %1641 = vmatpush.msra.mxu0 0.0
    %1642 = vmatpush.msra.mxu0 0.0
    %1643 = vmatpush.msra.mxu0 0.0
    %1644 = vmatpush.msra.mxu0 %v191
    %1645 = vmatpush.msra.mxu0 %v190
    %1646 = vmatpush.msra.mxu0 %v189
    %1647 = vmatpush.msra.mxu0 %v188
    %1648 = vmatmul.f32.gmra.mxu0 %v1024
    %v1649 = vpop.f32.mrf.mxu0
    %v1650 = vadd.f32 %v1631, %v1649
    %1651 = vdwg.mxu0
    %v1653 = vrot.slane %v1629, 4
    %v1655 = vadd.f32 %v1579, %v1653
    %v1656 = vxor.u32 %v1655, 2147483648
    %v1657 = vmul.f32 %v1656, 1.442695
    %v1658 = vpow.pop %v1657
    %v1659 = vadd.f32 %v1658, 1.0
    %v1660 = vrcp.pop %v1659
    %v1661 = vmul.f32 %v1659, %v1660
    %v1662 = vsub.f32 1.0, %v1661
    %v1663 = vmul.f32 %v1660, %v1662
    %v1664 = vadd.f32 %v1660, %v1663
    %vm1665 = vweird.f32 %v1659
    %vm1666 = vweird.f32 %v1660
    %vm1667 = vmor %vm1665, %vm1666
    %v1668 = vsel %vm1667, %v1660, %v1664
    %v1669 = vand.u32 2147483647, %v1659
    %vm1670 = vcmp.eq.f32.partialorder %v1669, 8.507059e+37
    %v1671 = vand.u32 %v1659, 2147483648
    %v1672 = vor.u32 1.1754944e-38, %v1671
    %v1673 = vsel %vm1670, %v1672, %v1668
    %v1674 = vmul.f32 1.0, %v1673
    %v1676 = vrot.slane %v1650, 4
    %v1678 = vmul.f32 %v1674, %v1676
    %1680 = vrot.lane.b32.xlu0 %v1678, 64
    %v1681 = vpop.permute.xlu0 %1680
    %v1683 = vadd.f32 %v1607, %v1681
    %v1684 = vtanh.pop %v1683
    %v1685 = vsub.f32 1.0, %v1674
    %1687 = vrot.lane.b32.xlu0 %v1684, 96
    %v1688 = vpop.permute.xlu0 %1687
    %v1690 = vmul.f32 %v1685, %v1688
    %v1691 = vrot.slane %v1019, 6
    %v1693 = vmul.f32 %v1674, %v1691
    %v1694 = vadd.f32 %v1690, %v1693
    %v1696 = vrot.slane %v1694, 4
    %1697 = vrot.lane.b32.xlu0 %v1696, 96
    %v1698 = vpop.permute.xlu0 %1697
    %v1699 = vsel %vm127, %v1698, 0
    %1701 = vmatpush.msra.mxu0 0.0
    %1702 = vmatpush.msra.mxu0 0.0
    %1703 = vmatpush.msra.mxu0 0.0
    %1704 = vmatpush.msra.mxu0 0.0
    %1705 = vmatpush.msra.mxu0 0.0
    %1706 = vmatpush.msra.mxu0 0.0
    %1707 = vmatpush.msra.mxu0 0.0
    %1708 = vmatpush.msra.mxu0 0.0
    %1709 = vmatpush.msra.mxu0 0.0
    %1710 = vmatpush.msra.mxu0 0.0
    %1711 = vmatpush.msra.mxu0 0.0
    %1712 = vmatpush.msra.mxu0 0.0
    %1713 = vmatpush.msra.mxu0 %v183
    %1714 = vmatpush.msra.mxu0 %v182
    %1715 = vmatpush.msra.mxu0 %v181
    %1716 = vmatpush.msra.mxu0 %v180
    %1717 = vmatmul.f32.gmra.mxu0 %v1699
    %v1718 = vpop.f32.mrf.mxu0
    %v1719 = vadd.f32 0.0, %v1718
    %1720 = vdwg.mxu0
    %v1722 = vrot.slane %v1719, 1
    %v1723 = vperm.slane %v1719, 0
    %v1724 = vperm.slane %v1722, 0
    %v1727 = vadd.f32 %v1723, %v50
    %v1728 = vadd.f32 %v1724, %v53
    %v1729 = vtanh.pop %v1727
    %v1730 = vtanh.pop %v1728
    %v1731 = vmul.f32 %v1729, %v383
    %v1732 = vmul.f32 %v1730, %v383
    %v1733 = vsel %vm127, %v1731, 0.0
    %1734 = vadd.xlane.f32.xlu0 %v1733
    %v1735 = vpop.xlane.xlu0 %1734
    %v1736 = vsel %vm127, %v1732, 0.0
    %1737 = vadd.xlane.f32.xlu0 %v1736
    %v1738 = vpop.xlane.xlu0 %1737
    %v1741 = vperm.slane %v1735, %v395
    %v1742 = vperm.slane %v1738, %v395
    %v1743 = vsel %vm398, %v1742, %v1741
    %v1745 = vsel %vm401, %v1743, -inf
    %1746 = vmax.xlane.f32.xlu0 %v1745
    %v1747 = vpop.xlane.xlu0 %1746
    %v1749 = vperm.slane %v1747, 0
    %v1750 = vperm.slane %v1747, 1
    %v1753 = vsub.f32 %v1735, %v1749
    %v1754 = vsub.f32 %v1738, %v1750
    %v1755 = vmul.f32 %v1753, 1.442695
    %v1756 = vpow.pop %v1755
    %v1757 = vmul.f32 %v1754, 1.442695
    %v1758 = vpow.pop %v1757
    %1761 = vset.pattern.permute.xlu0 0
    %1762 = vperm.xlu0 %1761, %v1756
    %v1763 = vpop.permute.xlu0 %1762
    %1764 = vset.pattern.permute.xlu0 0
    %1765 = vperm.xlu0 %1764, %v1758
    %v1766 = vpop.permute.xlu0 %1765
    %v1767 = vperm.slane %v1763, %v395
    %v1768 = vperm.slane %v1766, %v395
    %v1769 = vsel %vm398, %v1768, %v1767
    %v1771 = vsel %vm401, %v1769, 0.0
    %1772 = vadd.xlane.f32.xlu0 %v1771
    %v1773 = vpop.xlane.xlu0 %1772
    %v1774 = vrcp.pop %v1773
    %v1776 = vperm.slane %v1774, 0
    %v1777 = vperm.slane %v1774, 1
    %v1780 = vmul.f32 %v1756, %v1776
    %v1781 = vmul.f32 %v1758, %v1777
    %1783 = vset.pattern.permute.xlu0 0
    %1784 = vperm.xlu0 %1783, %v1780
    %v1785 = vpop.permute.xlu0 %1784
    %1788 = vset.pattern.permute.xlu0 0
    %1789 = vperm.xlu0 %1788, %v1781
    %v1790 = vpop.permute.xlu0 %1789
    %v1792 = vmul.f32 %v1785, %v21
    %v1793 = vmul.f32 %v1790, %v22
    %v1794 = vsel %vm25, %v1792, 0.0
    %v1795 = vrot.slane %v1794, 4
    %v1796 = vadd.f32 %v1794, %v1795
    %v1797 = vrot.slane %v1796, 2
    %v1798 = vadd.f32 %v1796, %v1797
    %v1799 = vrot.slane %v1798, 1
    %v1800 = vadd.f32 %v1798, %v1799
    %v1801 = vsel %vm25, %v1793, 0.0
    %v1802 = vrot.slane %v1801, 4
    %v1803 = vadd.f32 %v1801, %v1802
    %v1804 = vrot.slane %v1803, 2
    %v1805 = vadd.f32 %v1803, %v1804
    %v1806 = vrot.slane %v1805, 1
    %v1807 = vadd.f32 %v1805, %v1806
    %v1808 = vld [vmem:[%s2 + $0xd0] sm:$0xff]
    %v1809 = vld [vmem:[%s2 + $0xd8] sm:$0xff]
    %v1810 = vld [vmem:[%s2 + $0xe0] sm:$0xff]
    %v1811 = vld [vmem:[%s2 + $0xe8] sm:$0xff]
    %v1812 = vld [vmem:[%s2 + $0xf0] sm:$0xff]
    %v1813 = vld [vmem:[%s2 + $0xf8] sm:$0xff]
    %v1816 = vsel %vm398, %v1807, %v1800
    %v1817 = vsel %vm25, %v1816, 0
    %1819 = vmatpush.msra.mxu0 0.0
    %1820 = vmatpush.msra.mxu0 0.0
    %1821 = vmatpush.msra.mxu0 0.0
    %1822 = vmatpush.msra.mxu0 0.0
    %1823 = vmatpush.msra.mxu0 0.0
    %1824 = vmatpush.msra.mxu0 0.0
    %1825 = vmatpush.msra.mxu0 0.0
    %1826 = vmatpush.msra.mxu0 0.0
    %1827 = vmatpush.msra.mxu0 0.0
    %1828 = vmatpush.msra.mxu0 0.0
    %1829 = vmatpush.msra.mxu0 0.0
    %1830 = vmatpush.msra.mxu0 0.0
    %1831 = vmatpush.msra.mxu0 0.0
    %1832 = vmatpush.msra.mxu0 0.0
    %1833 = vmatpush.msra.mxu0 %v1813
    %1834 = vmatpush.msra.mxu0 %v1812
    %1835 = vmatmul.f32.gmra.mxu0 %v1817
    %v1836 = vpop.f32.mrf.mxu0
    %v1837 = vadd.f32 0.0, %v1836
    %1838 = vdwg.mxu0
    %1839 = vmatpush.msra.mxu0 0.0
    %1840 = vmatpush.msra.mxu0 0.0
    %1841 = vmatpush.msra.mxu0 0.0
    %1842 = vmatpush.msra.mxu0 0.0
    %1843 = vmatpush.msra.mxu0 0.0
    %1844 = vmatpush.msra.mxu0 0.0
    %1845 = vmatpush.msra.mxu0 0.0
    %1846 = vmatpush.msra.mxu0 0.0
    %1847 = vmatpush.msra.mxu0 0.0
    %1848 = vmatpush.msra.mxu0 0.0
    %1849 = vmatpush.msra.mxu0 0.0
    %1850 = vmatpush.msra.mxu0 0.0
    %1851 = vmatpush.msra.mxu0 %v1811
    %1852 = vmatpush.msra.mxu0 %v1810
    %1853 = vmatpush.msra.mxu0 %v1809
    %1854 = vmatpush.msra.mxu0 %v1808
    %1855 = vmatmul.f32.gmra.mxu0 %v1699
    %v1856 = vpop.f32.mrf.mxu0
    %v1857 = vadd.f32 %v1837, %v1856
    %1858 = vdwg.mxu0
    %v1859 = vld [vmem:[%s3 + $0x5] sm:$0x1]
    %v1860 = vperm.slane %v1859, 0
    %v1861 = vadd.f32 %v1857, %v1860
    %v1862 = vld [vmem:[%s2 + $0x100] sm:$0xff]
    %v1863 = vld [vmem:[%s2 + $0x108] sm:$0xff]
    %v1864 = vld [vmem:[%s2 + $0x110] sm:$0xff]
    %v1865 = vld [vmem:[%s2 + $0x118] sm:$0xff]
    %v1866 = vld [vmem:[%s3 + $0x6] sm:$0x1]
    %v1867 = vperm.slane %v1866, 0
    %v1869 = vsel %vm127, %v1861, 0
    %1871 = vmatpush.msra.mxu0 0.0
    %1872 = vmatpush.msra.mxu0 0.0
    %1873 = vmatpush.msra.mxu0 0.0
    %1874 = vmatpush.msra.mxu0 0.0
    %1875 = vmatpush.msra.mxu0 0.0
    %1876 = vmatpush.msra.mxu0 0.0
    %1877 = vmatpush.msra.mxu0 0.0
    %1878 = vmatpush.msra.mxu0 0.0
    %1879 = vmatpush.msra.mxu0 0.0
    %1880 = vmatpush.msra.mxu0 0.0
    %1881 = vmatpush.msra.mxu0 0.0
    %1882 = vmatpush.msra.mxu0 0.0
    %1883 = vmatpush.msra.mxu0 %v1865
    %1884 = vmatpush.msra.mxu0 %v1864
    %1885 = vmatpush.msra.mxu0 %v1863
    %1886 = vmatpush.msra.mxu0 %v1862
    %1887 = vmatmul.f32.gmra.mxu0 %v1869
    %v1888 = vpop.f32.mrf.mxu0
    %v1889 = vadd.f32 %v1867, %v1888
    %1890 = vdwg.mxu0
    %v1891 = vld [vmem:[%s2 + $0x120] sm:$0xff]
    %v1892 = vld [vmem:[%s2 + $0x128] sm:$0xff]
    %v1893 = vld [vmem:[%s2 + $0x130] sm:$0xff]
    %v1894 = vld [vmem:[%s2 + $0x138] sm:$0xff]
    %v1895 = vld [vmem:[%s3 + $0x7] sm:$0x1]
    %v1896 = vperm.slane %v1895, 0
    %1897 = vmatpush.msra.mxu0 0.0
    %1898 = vmatpush.msra.mxu0 0.0
    %1899 = vmatpush.msra.mxu0 0.0
    %1900 = vmatpush.msra.mxu0 0.0
    %1901 = vmatpush.msra.mxu0 0.0
    %1902 = vmatpush.msra.mxu0 0.0
    %1903 = vmatpush.msra.mxu0 0.0
    %1904 = vmatpush.msra.mxu0 0.0
    %1905 = vmatpush.msra.mxu0 0.0
    %1906 = vmatpush.msra.mxu0 0.0
    %1907 = vmatpush.msra.mxu0 0.0
    %1908 = vmatpush.msra.mxu0 0.0
    %1909 = vmatpush.msra.mxu0 %v1894
    %1910 = vmatpush.msra.mxu0 %v1893
    %1911 = vmatpush.msra.mxu0 %v1892
    %1912 = vmatpush.msra.mxu0 %v1891
    %1913 = vmatmul.f32.gmra.mxu0 %v1869
    %v1914 = vpop.f32.mrf.mxu0
    %v1915 = vadd.f32 %v1896, %v1914
    %1916 = vdwg.mxu0
    %v1917 = vld [vmem:[%s3 + $0x8] sm:$0x1]
    %v1918 = vld [vmem:[%s3 + $0x9] sm:$0x1]
    %v1919 = vperm.slane %v1917, 0
    %1921 = vrot.lane.b32.xlu0 %v1321, 96
    %v1922 = vpop.permute.xlu0 %1921
    %v1923 = vsel %vm127, %v1922, 0
    %1925 = vmatpush.msra.mxu0 0.0
    %1926 = vmatpush.msra.mxu0 0.0
    %1927 = vmatpush.msra.mxu0 0.0
    %1928 = vmatpush.msra.mxu0 0.0
    %1929 = vmatpush.msra.mxu0 0.0
    %1930 = vmatpush.msra.mxu0 0.0
    %1931 = vmatpush.msra.mxu0 0.0
    %1932 = vmatpush.msra.mxu0 0.0
    %1933 = vmatpush.msra.mxu0 0.0
    %1934 = vmatpush.msra.mxu0 0.0
    %1935 = vmatpush.msra.mxu0 0.0
    %1936 = vmatpush.msra.mxu0 0.0
    %1937 = vmatpush.msra.mxu0 %v195
    %1938 = vmatpush.msra.mxu0 %v194
    %1939 = vmatpush.msra.mxu0 %v193
    %1940 = vmatpush.msra.mxu0 %v192
    %1941 = vmatmul.f32.gmra.mxu0 %v1923
    %v1942 = vpop.f32.mrf.mxu0
    %v1943 = vadd.f32 %v1919, %v1942
    %1944 = vdwg.mxu0
    %v1945 = vperm.slane %v1918, 0
    %1946 = vmatpush.msra.mxu0 0.0
    %1947 = vmatpush.msra.mxu0 0.0
    %1948 = vmatpush.msra.mxu0 0.0
    %1949 = vmatpush.msra.mxu0 0.0
    %1950 = vmatpush.msra.mxu0 0.0
    %1951 = vmatpush.msra.mxu0 0.0
    %1952 = vmatpush.msra.mxu0 0.0
    %1953 = vmatpush.msra.mxu0 0.0
    %1954 = vmatpush.msra.mxu0 0.0
    %1955 = vmatpush.msra.mxu0 0.0
    %1956 = vmatpush.msra.mxu0 0.0
    %1957 = vmatpush.msra.mxu0 0.0
    %1958 = vmatpush.msra.mxu0 %v199
    %1959 = vmatpush.msra.mxu0 %v198
    %1960 = vmatpush.msra.mxu0 %v197
    %1961 = vmatpush.msra.mxu0 %v196
    %1962 = vmatmul.f32.gmra.mxu0 %v1923
    %v1963 = vpop.f32.mrf.mxu0
    %v1964 = vadd.f32 %v1945, %v1963
    %1965 = vdwg.mxu0
    %v1966 = vadd.f32 %v1889, %v1943
    %v1967 = vxor.u32 %v1966, 2147483648
    %v1968 = vmul.f32 %v1967, 1.442695
    %v1969 = vpow.pop %v1968
    %v1970 = vadd.f32 %v1969, 1.0
    %v1971 = vrcp.pop %v1970
    %v1972 = vmul.f32 %v1970, %v1971
    %v1973 = vsub.f32 1.0, %v1972
    %v1974 = vmul.f32 %v1971, %v1973
    %v1975 = vadd.f32 %v1971, %v1974
    %vm1976 = vweird.f32 %v1970
    %vm1977 = vweird.f32 %v1971
    %vm1978 = vmor %vm1976, %vm1977
    %v1979 = vsel %vm1978, %v1971, %v1975
    %v1980 = vand.u32 2147483647, %v1970
    %vm1981 = vcmp.eq.f32.partialorder %v1980, 8.507059e+37
    %v1982 = vand.u32 %v1970, 2147483648
    %v1983 = vor.u32 1.1754944e-38, %v1982
    %v1984 = vsel %vm1981, %v1983, %v1979
    %v1985 = vmul.f32 1.0, %v1984
    %v1986 = vmul.f32 %v1985, %v1964
    %v1987 = vadd.f32 %v1915, %v1986
    %v1988 = vtanh.pop %v1987
    %v1989 = vsub.f32 1.0, %v1985
    %1991 = vrot.lane.b32.xlu0 %v1988, 32
    %v1992 = vpop.permute.xlu0 %1991
    %v1994 = vmul.f32 %v1989, %v1992
    %v1995 = vmul.f32 %v1985, %v1321
    %v1996 = vadd.f32 %v1994, %v1995
    %1997 = vrot.lane.b32.xlu0 %v1861, 32
    %v1998 = vpop.permute.xlu0 %1997
    %v2000 = vadd.f32 %v1996, %v1998
    %v2001 = vld [vmem:[%s2 + $0x180] sm:$0xff]
    %v2002 = vld [vmem:[%s2 + $0x188] sm:$0xff]
    %v2003 = vld [vmem:[%s2 + $0x190] sm:$0xff]
    %v2004 = vld [vmem:[%s2 + $0x198] sm:$0xff]
    %v2005 = vld [vmem:[%s3 + $0xa] sm:$0x1]
    %v2006 = vperm.slane %v2005, 0
    %2008 = vrot.lane.b32.xlu0 %v2000, 96
    %v2009 = vpop.permute.xlu0 %2008
    %v2010 = vsel %vm127, %v2009, 0
    %2012 = vmatpush.msra.mxu0 0.0
    %2013 = vmatpush.msra.mxu0 0.0
    %2014 = vmatpush.msra.mxu0 0.0
    %2015 = vmatpush.msra.mxu0 0.0
    %2016 = vmatpush.msra.mxu0 0.0
    %2017 = vmatpush.msra.mxu0 0.0
    %2018 = vmatpush.msra.mxu0 0.0
    %2019 = vmatpush.msra.mxu0 0.0
    %2020 = vmatpush.msra.mxu0 0.0
    %2021 = vmatpush.msra.mxu0 0.0
    %2022 = vmatpush.msra.mxu0 0.0
    %2023 = vmatpush.msra.mxu0 0.0
    %2024 = vmatpush.msra.mxu0 %v2004
    %2025 = vmatpush.msra.mxu0 %v2003
    %2026 = vmatpush.msra.mxu0 %v2002
    %2027 = vmatpush.msra.mxu0 %v2001
    %2028 = vmatmul.f32.gmra.mxu0 %v2010
    %v2029 = vpop.f32.mrf.mxu0
    %v2030 = vadd.f32 %v2006, %v2029
    %2031 = vdwg.mxu0
    %v2032 = vld [vmem:[%s2 + $0x1a0] sm:$0xff]
    %v2033 = vld [vmem:[%s2 + $0x1a8] sm:$0xff]
    %v2034 = vld [vmem:[%s2 + $0x1b0] sm:$0xff]
    %v2035 = vld [vmem:[%s2 + $0x1b8] sm:$0xff]
    %v2036 = vld [vmem:[%s3 + $0xb] sm:$0x1]
    %v2037 = vperm.slane %v2036, 0
    %2038 = vmatpush.msra.mxu0 0.0
    %2039 = vmatpush.msra.mxu0 0.0
    %2040 = vmatpush.msra.mxu0 0.0
    %2041 = vmatpush.msra.mxu0 0.0
    %2042 = vmatpush.msra.mxu0 0.0
    %2043 = vmatpush.msra.mxu0 0.0
    %2044 = vmatpush.msra.mxu0 0.0
    %2045 = vmatpush.msra.mxu0 0.0
    %2046 = vmatpush.msra.mxu0 0.0
    %2047 = vmatpush.msra.mxu0 0.0
    %2048 = vmatpush.msra.mxu0 0.0
    %2049 = vmatpush.msra.mxu0 0.0
    %2050 = vmatpush.msra.mxu0 %v2035
    %2051 = vmatpush.msra.mxu0 %v2034
    %2052 = vmatpush.msra.mxu0 %v2033
    %2053 = vmatpush.msra.mxu0 %v2032
    %2054 = vmatmul.f32.gmra.mxu0 %v2010
    %v2055 = vpop.f32.mrf.mxu0
    %v2056 = vadd.f32 %v2037, %v2055
    %2057 = vdwg.mxu0
    %v2058 = vld [vmem:[%s3 + $0xc] sm:$0x1]
    %v2059 = vld [vmem:[%s3 + $0xd] sm:$0x1]
    %v2060 = vperm.slane %v2058, 0
    %2062 = vrot.lane.b32.xlu0 %v1462, 96
    %v2063 = vpop.permute.xlu0 %2062
    %v2064 = vsel %vm127, %v2063, 0
    %2066 = vmatpush.msra.mxu0 0.0
    %2067 = vmatpush.msra.mxu0 0.0
    %2068 = vmatpush.msra.mxu0 0.0
    %2069 = vmatpush.msra.mxu0 0.0
    %2070 = vmatpush.msra.mxu0 0.0
    %2071 = vmatpush.msra.mxu0 0.0
    %2072 = vmatpush.msra.mxu0 0.0
    %2073 = vmatpush.msra.mxu0 0.0
    %2074 = vmatpush.msra.mxu0 0.0
    %2075 = vmatpush.msra.mxu0 0.0
    %2076 = vmatpush.msra.mxu0 0.0
    %2077 = vmatpush.msra.mxu0 0.0
    %2078 = vmatpush.msra.mxu0 %v203
    %2079 = vmatpush.msra.mxu0 %v202
    %2080 = vmatpush.msra.mxu0 %v201
    %2081 = vmatpush.msra.mxu0 %v200
    %2082 = vmatmul.f32.gmra.mxu0 %v2064
    %v2083 = vpop.f32.mrf.mxu0
    %v2084 = vadd.f32 %v2060, %v2083
    %2085 = vdwg.mxu0
    %v2086 = vperm.slane %v2059, 0
    %2087 = vmatpush.msra.mxu0 0.0
    %2088 = vmatpush.msra.mxu0 0.0
    %2089 = vmatpush.msra.mxu0 0.0
    %2090 = vmatpush.msra.mxu0 0.0
    %2091 = vmatpush.msra.mxu0 0.0
    %2092 = vmatpush.msra.mxu0 0.0
    %2093 = vmatpush.msra.mxu0 0.0
    %2094 = vmatpush.msra.mxu0 0.0
    %2095 = vmatpush.msra.mxu0 0.0
    %2096 = vmatpush.msra.mxu0 0.0
    %2097 = vmatpush.msra.mxu0 0.0
    %2098 = vmatpush.msra.mxu0 0.0
    %2099 = vmatpush.msra.mxu0 %v207
    %2100 = vmatpush.msra.mxu0 %v206
    %2101 = vmatpush.msra.mxu0 %v205
    %2102 = vmatpush.msra.mxu0 %v204
    %2103 = vmatmul.f32.gmra.mxu0 %v2064
    %v2104 = vpop.f32.mrf.mxu0
    %v2105 = vadd.f32 %v2086, %v2104
    %2106 = vdwg.mxu0
    %v2107 = vadd.f32 %v2030, %v2084
    %v2108 = vxor.u32 %v2107, 2147483648
    %v2109 = vmul.f32 %v2108, 1.442695
    %v2110 = vpow.pop %v2109
    %v2111 = vadd.f32 %v2110, 1.0
    %v2112 = vrcp.pop %v2111
    %v2113 = vmul.f32 %v2111, %v2112
    %v2114 = vsub.f32 1.0, %v2113
    %v2115 = vmul.f32 %v2112, %v2114
    %v2116 = vadd.f32 %v2112, %v2115
    %vm2117 = vweird.f32 %v2111
    %vm2118 = vweird.f32 %v2112
    %vm2119 = vmor %vm2117, %vm2118
    %v2120 = vsel %vm2119, %v2112, %v2116
    %v2121 = vand.u32 2147483647, %v2111
    %vm2122 = vcmp.eq.f32.partialorder %v2121, 8.507059e+37
    %v2123 = vand.u32 %v2111, 2147483648
    %v2124 = vor.u32 1.1754944e-38, %v2123
    %v2125 = vsel %vm2122, %v2124, %v2120
    %v2126 = vmul.f32 1.0, %v2125
    %v2127 = vmul.f32 %v2126, %v2105
    %v2128 = vadd.f32 %v2056, %v2127
    %v2129 = vtanh.pop %v2128
    %v2130 = vsub.f32 1.0, %v2126
    %2132 = vrot.lane.b32.xlu0 %v2129, 32
    %v2133 = vpop.permute.xlu0 %2132
    %v2135 = vmul.f32 %v2130, %v2133
    %v2136 = vmul.f32 %v2126, %v1462
    %v2137 = vadd.f32 %v2135, %v2136
    %v2138 = vadd.f32 %v2137, %v2000
    %2139 = vmatpush.msra.mxu0 0.0
    %2140 = vmatpush.msra.mxu0 0.0
    %2141 = vmatpush.msra.mxu0 0.0
    %2142 = vmatpush.msra.mxu0 0.0
    %2143 = vmatpush.msra.mxu0 0.0
    %2144 = vmatpush.msra.mxu0 0.0
    %2145 = vmatpush.msra.mxu0 0.0
    %2146 = vmatpush.msra.mxu0 0.0
    %2147 = vmatpush.msra.mxu0 0.0
    %2148 = vmatpush.msra.mxu0 0.0
    %2149 = vmatpush.msra.mxu0 0.0
    %2150 = vmatpush.msra.mxu0 0.0
    %2151 = vmatpush.msra.mxu0 0.0
    %2152 = vmatpush.msra.mxu0 0.0
    %2153 = vmatpush.msra.mxu0 %v213
    %2154 = vmatpush.msra.mxu0 %v212
    %2155 = vmatmul.f32.gmra.mxu0 %v1817
    %v2156 = vpop.f32.mrf.mxu0
    %v2157 = vadd.f32 0.0, %v2156
    %2158 = vdwg.mxu0
    %2160 = vrot.lane.b32.xlu0 %v2138, 96
    %v2161 = vpop.permute.xlu0 %2160
    %v2162 = vsel %vm127, %v2161, 0
    %2164 = vmatpush.msra.mxu0 0.0
    %2165 = vmatpush.msra.mxu0 0.0
    %2166 = vmatpush.msra.mxu0 0.0
    %2167 = vmatpush.msra.mxu0 0.0
    %2168 = vmatpush.msra.mxu0 0.0
    %2169 = vmatpush.msra.mxu0 0.0
    %2170 = vmatpush.msra.mxu0 0.0
    %2171 = vmatpush.msra.mxu0 0.0
    %2172 = vmatpush.msra.mxu0 0.0
    %2173 = vmatpush.msra.mxu0 0.0
    %2174 = vmatpush.msra.mxu0 0.0
    %2175 = vmatpush.msra.mxu0 0.0
    %2176 = vmatpush.msra.mxu0 %v211
    %2177 = vmatpush.msra.mxu0 %v210
    %2178 = vmatpush.msra.mxu0 %v209
    %2179 = vmatpush.msra.mxu0 %v208
    %2180 = vmatmul.f32.gmra.mxu0 %v2162
    %v2181 = vpop.f32.mrf.mxu0
    %v2182 = vadd.f32 %v2157, %v2181
    %2183 = vdwg.mxu0
    %v2184 = vld [vmem:[%s3 + $0xe] sm:$0x1]
    %v2185 = vperm.slane %v2184, 0
    %v2186 = vadd.f32 %v2182, %v2185
    %v2188 = vrot.slane %v2186, 1
    %2190 = vst.msk [vmem:[%s4 + $0x2] sm:$0x1] %vm837, %v2186
    %2191 = vst.msk [vmem:[%s4 + $0x6] sm:$0x1] %vm837, %v2188
    %v2192 = vxor.u32 %v2186, 2147483648
    %v2193 = vmul.f32 %v2192, 1.442695
    %v2194 = vpow.pop %v2193
    %v2195 = vadd.f32 %v2194, 1.0
    %v2196 = vrcp.pop %v2195
    %v2197 = vmul.f32 %v2195, %v2196
    %v2198 = vsub.f32 1.0, %v2197
    %v2199 = vmul.f32 %v2196, %v2198
    %v2200 = vadd.f32 %v2196, %v2199
    %vm2201 = vweird.f32 %v2195
    %vm2202 = vweird.f32 %v2196
    %vm2203 = vmor %vm2201, %vm2202
    %v2204 = vsel %vm2203, %v2196, %v2200
    %v2205 = vand.u32 2147483647, %v2195
    %vm2206 = vcmp.eq.f32.partialorder %v2205, 8.507059e+37
    %v2207 = vand.u32 %v2195, 2147483648
    %v2208 = vor.u32 1.1754944e-38, %v2207
    %v2209 = vsel %vm2206, %v2208, %v2204
    %v2210 = vmul.f32 1.0, %v2209
    %v2212 = vrot.slane %v2210, 1
    %v2213 = vperm.slane %v2210, 0
    %v2214 = vperm.slane %v2212, 0
    %2215 = vrot.lane.b32.xlu0 %v2213, 112
    %v2216 = vpop.permute.xlu0 %2215
    %2217 = vrot.lane.b32.xlu0 %v2214, 112
    %v2218 = vpop.permute.xlu0 %2217
    %2221 = vst.msk [vmem:[%s6 + $0x2] sm:$0x1] %vm869, %v2216
    %2222 = vst.msk [vmem:[%s6 + $0x6] sm:$0x1] %vm869, %v2218
    %v2223 = vperm.slane %v1785, %v395
    %v2224 = vperm.slane %v1790, %v395
    %2227 = vst.msk [vmem:[#allocation2 + $0x2] sm:$0x1] %vm876, %v2223
    %2228 = vst.msk [vmem:[#allocation2 + $0x6] sm:$0x1] %vm876, %v2224
    %v2229 = vld [vmem:[%s2 + $0x48] sm:$0xff]
    %v2230 = vld [vmem:[%s2 + $0x50] sm:$0xff]
    %2231 = vmatpush.msra.mxu0 0.0
    %2232 = vmatpush.msra.mxu0 0.0
    %2233 = vmatpush.msra.mxu0 0.0
    %2234 = vmatpush.msra.mxu0 0.0
    %2235 = vmatpush.msra.mxu0 0.0
    %2236 = vmatpush.msra.mxu0 0.0
    %2237 = vmatpush.msra.mxu0 0.0
    %2238 = vmatpush.msra.mxu0 0.0
    %2239 = vmatpush.msra.mxu0 0.0
    %2240 = vmatpush.msra.mxu0 0.0
    %2241 = vmatpush.msra.mxu0 0.0
    %2242 = vmatpush.msra.mxu0 0.0
    %2243 = vmatpush.msra.mxu0 0.0
    %2244 = vmatpush.msra.mxu0 0.0
    %2245 = vmatpush.msra.mxu0 %v2230
    %2246 = vmatpush.msra.mxu0 %v2229
    %2247 = vmatmul.f32.gmra.mxu0 %v1817
    %v2248 = vpop.f32.mrf.mxu0
    %v2249 = vadd.f32 0.0, %v2248
    %2250 = vdwg.mxu0
    %v2252 = vrot.slane %v2249, 2
    %v2254 = vadd.f32 %v177, %v2252
    %v2255 = vld [vmem:[%s2 + $0x58] sm:$0xff]
    %v2256 = vld [vmem:[%s2 + $0x60] sm:$0xff]
    %2257 = vmatpush.msra.mxu0 0.0
    %2258 = vmatpush.msra.mxu0 0.0
    %2259 = vmatpush.msra.mxu0 0.0
    %2260 = vmatpush.msra.mxu0 0.0
    %2261 = vmatpush.msra.mxu0 0.0
    %2262 = vmatpush.msra.mxu0 0.0
    %2263 = vmatpush.msra.mxu0 0.0
    %2264 = vmatpush.msra.mxu0 0.0
    %2265 = vmatpush.msra.mxu0 0.0
    %2266 = vmatpush.msra.mxu0 0.0
    %2267 = vmatpush.msra.mxu0 0.0
    %2268 = vmatpush.msra.mxu0 0.0
    %2269 = vmatpush.msra.mxu0 0.0
    %2270 = vmatpush.msra.mxu0 0.0
    %2271 = vmatpush.msra.mxu0 %v2256
    %2272 = vmatpush.msra.mxu0 %v2255
    %2273 = vmatmul.f32.gmra.mxu0 %v1817
    %v2274 = vpop.f32.mrf.mxu0
    %v2275 = vadd.f32 0.0, %v2274
    %2276 = vdwg.mxu0
    %v2278 = vrot.slane %v2275, 2
    %2279 = vrot.lane.b32.xlu0 %v2278, 64
    %v2280 = vpop.permute.xlu0 %2279
    %v2282 = vadd.f32 %v177, %v2280
    %v2283 = vld [vmem:[%s3 + $0x3] sm:$0x1]
    %v2284 = vld [vmem:[%s3 + $0x4] sm:$0x1]
    %v2285 = vperm.slane %v2283, 0
    %2286 = vmatpush.msra.mxu0 0.0
    %2287 = vmatpush.msra.mxu0 0.0
    %2288 = vmatpush.msra.mxu0 0.0
    %2289 = vmatpush.msra.mxu0 0.0
    %2290 = vmatpush.msra.mxu0 0.0
    %2291 = vmatpush.msra.mxu0 0.0
    %2292 = vmatpush.msra.mxu0 0.0
    %2293 = vmatpush.msra.mxu0 0.0
    %2294 = vmatpush.msra.mxu0 0.0
    %2295 = vmatpush.msra.mxu0 0.0
    %2296 = vmatpush.msra.mxu0 0.0
    %2297 = vmatpush.msra.mxu0 0.0
    %2298 = vmatpush.msra.mxu0 %v187
    %2299 = vmatpush.msra.mxu0 %v186
    %2300 = vmatpush.msra.mxu0 %v185
    %2301 = vmatpush.msra.mxu0 %v184
    %2302 = vmatmul.f32.gmra.mxu0 %v1699
    %v2303 = vpop.f32.mrf.mxu0
    %v2304 = vadd.f32 %v2285, %v2303
    %2305 = vdwg.mxu0
    %v2306 = vperm.slane %v2284, 0
    %2307 = vmatpush.msra.mxu0 0.0
    %2308 = vmatpush.msra.mxu0 0.0
    %2309 = vmatpush.msra.mxu0 0.0
    %2310 = vmatpush.msra.mxu0 0.0
    %2311 = vmatpush.msra.mxu0 0.0
    %2312 = vmatpush.msra.mxu0 0.0
    %2313 = vmatpush.msra.mxu0 0.0
    %2314 = vmatpush.msra.mxu0 0.0
    %2315 = vmatpush.msra.mxu0 0.0
    %2316 = vmatpush.msra.mxu0 0.0
    %2317 = vmatpush.msra.mxu0 0.0
    %2318 = vmatpush.msra.mxu0 0.0
    %2319 = vmatpush.msra.mxu0 %v191
    %2320 = vmatpush.msra.mxu0 %v190
    %2321 = vmatpush.msra.mxu0 %v189
    %2322 = vmatpush.msra.mxu0 %v188
    %2323 = vmatmul.f32.gmra.mxu0 %v1699
    %v2324 = vpop.f32.mrf.mxu0
    %v2325 = vadd.f32 %v2306, %v2324
    %2326 = vdwg.mxu0
    %v2328 = vrot.slane %v2304, 2
    %v2330 = vadd.f32 %v2254, %v2328
    %v2331 = vxor.u32 %v2330, 2147483648
    %v2332 = vmul.f32 %v2331, 1.442695
    %v2333 = vpow.pop %v2332
    %v2334 = vadd.f32 %v2333, 1.0
    %v2335 = vrcp.pop %v2334
    %v2336 = vmul.f32 %v2334, %v2335
    %v2337 = vsub.f32 1.0, %v2336
    %v2338 = vmul.f32 %v2335, %v2337
    %v2339 = vadd.f32 %v2335, %v2338
    %vm2340 = vweird.f32 %v2334
    %vm2341 = vweird.f32 %v2335
    %vm2342 = vmor %vm2340, %vm2341
    %v2343 = vsel %vm2342, %v2335, %v2339
    %v2344 = vand.u32 2147483647, %v2334
    %vm2345 = vcmp.eq.f32.partialorder %v2344, 8.507059e+37
    %v2346 = vand.u32 %v2334, 2147483648
    %v2347 = vor.u32 1.1754944e-38, %v2346
    %v2348 = vsel %vm2345, %v2347, %v2343
    %v2349 = vmul.f32 1.0, %v2348
    %v2351 = vrot.slane %v2325, 2
    %v2353 = vmul.f32 %v2349, %v2351
    %2355 = vrot.lane.b32.xlu0 %v2353, 64
    %v2356 = vpop.permute.xlu0 %2355
    %v2358 = vadd.f32 %v2282, %v2356
    %v2359 = vtanh.pop %v2358
    %v2360 = vsub.f32 1.0, %v2349
    %2362 = vrot.lane.b32.xlu0 %v2359, 96
    %v2363 = vpop.permute.xlu0 %2362
    %v2365 = vmul.f32 %v2360, %v2363
    %v2366 = vrot.slane %v1694, 6
    %v2368 = vmul.f32 %v2349, %v2366
    %v2369 = vadd.f32 %v2365, %v2368
    %v2371 = vrot.slane %v2369, 6
    %2372 = vrot.lane.b32.xlu0 %v2371, 96
    %v2373 = vpop.permute.xlu0 %2372
    %v2374 = vsel %vm127, %v2373, 0
    %2376 = vmatpush.msra.mxu0 0.0
    %2377 = vmatpush.msra.mxu0 0.0
    %2378 = vmatpush.msra.mxu0 0.0
    %2379 = vmatpush.msra.mxu0 0.0
    %2380 = vmatpush.msra.mxu0 0.0
    %2381 = vmatpush.msra.mxu0 0.0
    %2382 = vmatpush.msra.mxu0 0.0
    %2383 = vmatpush.msra.mxu0 0.0
    %2384 = vmatpush.msra.mxu0 0.0
    %2385 = vmatpush.msra.mxu0 0.0
    %2386 = vmatpush.msra.mxu0 0.0
    %2387 = vmatpush.msra.mxu0 0.0
    %2388 = vmatpush.msra.mxu0 %v183
    %2389 = vmatpush.msra.mxu0 %v182
    %2390 = vmatpush.msra.mxu0 %v181
    %2391 = vmatpush.msra.mxu0 %v180
    %2392 = vmatmul.f32.gmra.mxu0 %v2374
    %v2393 = vpop.f32.mrf.mxu0
    %v2394 = vadd.f32 0.0, %v2393
    %2395 = vdwg.mxu0
    %v2397 = vrot.slane %v2394, 1
    %v2398 = vperm.slane %v2394, 0
    %v2399 = vperm.slane %v2397, 0
    %v2402 = vadd.f32 %v2398, %v50
    %v2403 = vadd.f32 %v2399, %v53
    %v2404 = vtanh.pop %v2402
    %v2405 = vtanh.pop %v2403
    %v2406 = vmul.f32 %v2404, %v383
    %v2407 = vmul.f32 %v2405, %v383
    %v2408 = vsel %vm127, %v2406, 0.0
    %2409 = vadd.xlane.f32.xlu0 %v2408
    %v2410 = vpop.xlane.xlu0 %2409
    %v2411 = vsel %vm127, %v2407, 0.0
    %2412 = vadd.xlane.f32.xlu0 %v2411
    %v2413 = vpop.xlane.xlu0 %2412
    %v2416 = vperm.slane %v2410, %v395
    %v2417 = vperm.slane %v2413, %v395
    %v2418 = vsel %vm398, %v2417, %v2416
    %v2420 = vsel %vm401, %v2418, -inf
    %2421 = vmax.xlane.f32.xlu0 %v2420
    %v2422 = vpop.xlane.xlu0 %2421
    %v2424 = vperm.slane %v2422, 0
    %v2425 = vperm.slane %v2422, 1
    %v2428 = vsub.f32 %v2410, %v2424
    %v2429 = vsub.f32 %v2413, %v2425
    %v2430 = vmul.f32 %v2428, 1.442695
    %v2431 = vpow.pop %v2430
    %v2432 = vmul.f32 %v2429, 1.442695
    %v2433 = vpow.pop %v2432
    %2436 = vset.pattern.permute.xlu0 0
    %2437 = vperm.xlu0 %2436, %v2431
    %v2438 = vpop.permute.xlu0 %2437
    %2439 = vset.pattern.permute.xlu0 0
    %2440 = vperm.xlu0 %2439, %v2433
    %v2441 = vpop.permute.xlu0 %2440
    %v2442 = vperm.slane %v2438, %v395
    %v2443 = vperm.slane %v2441, %v395
    %v2444 = vsel %vm398, %v2443, %v2442
    %v2446 = vsel %vm401, %v2444, 0.0
    %2447 = vadd.xlane.f32.xlu0 %v2446
    %v2448 = vpop.xlane.xlu0 %2447
    %v2449 = vrcp.pop %v2448
    %v2451 = vperm.slane %v2449, 0
    %v2452 = vperm.slane %v2449, 1
    %v2455 = vmul.f32 %v2431, %v2451
    %v2456 = vmul.f32 %v2433, %v2452
    %2458 = vset.pattern.permute.xlu0 0
    %2459 = vperm.xlu0 %2458, %v2455
    %v2460 = vpop.permute.xlu0 %2459
    %2463 = vset.pattern.permute.xlu0 0
    %2464 = vperm.xlu0 %2463, %v2456
    %v2465 = vpop.permute.xlu0 %2464
    %v2467 = vmul.f32 %v2460, %v21
    %v2468 = vmul.f32 %v2465, %v22
    %v2469 = vsel %vm25, %v2467, 0.0
    %v2470 = vrot.slane %v2469, 4
    %v2471 = vadd.f32 %v2469, %v2470
    %v2472 = vrot.slane %v2471, 2
    %v2473 = vadd.f32 %v2471, %v2472
    %v2474 = vrot.slane %v2473, 1
    %v2475 = vadd.f32 %v2473, %v2474
    %v2476 = vsel %vm25, %v2468, 0.0
    %v2477 = vrot.slane %v2476, 4
    %v2478 = vadd.f32 %v2476, %v2477
    %v2479 = vrot.slane %v2478, 2
    %v2480 = vadd.f32 %v2478, %v2479
    %v2481 = vrot.slane %v2480, 1
    %v2482 = vadd.f32 %v2480, %v2481
    %v2483 = vld [vmem:[%s2 + $0xd0] sm:$0xff]
    %v2484 = vld [vmem:[%s2 + $0xd8] sm:$0xff]
    %v2485 = vld [vmem:[%s2 + $0xe0] sm:$0xff]
    %v2486 = vld [vmem:[%s2 + $0xe8] sm:$0xff]
    %v2487 = vld [vmem:[%s2 + $0xf0] sm:$0xff]
    %v2488 = vld [vmem:[%s2 + $0xf8] sm:$0xff]
    %v2491 = vsel %vm398, %v2482, %v2475
    %v2492 = vsel %vm25, %v2491, 0
    %2494 = vmatpush.msra.mxu0 0.0
    %2495 = vmatpush.msra.mxu0 0.0
    %2496 = vmatpush.msra.mxu0 0.0
    %2497 = vmatpush.msra.mxu0 0.0
    %2498 = vmatpush.msra.mxu0 0.0
    %2499 = vmatpush.msra.mxu0 0.0
    %2500 = vmatpush.msra.mxu0 0.0
    %2501 = vmatpush.msra.mxu0 0.0
    %2502 = vmatpush.msra.mxu0 0.0
    %2503 = vmatpush.msra.mxu0 0.0
    %2504 = vmatpush.msra.mxu0 0.0
    %2505 = vmatpush.msra.mxu0 0.0
    %2506 = vmatpush.msra.mxu0 0.0
    %2507 = vmatpush.msra.mxu0 0.0
    %2508 = vmatpush.msra.mxu0 %v2488
    %2509 = vmatpush.msra.mxu0 %v2487
    %2510 = vmatmul.f32.gmra.mxu0 %v2492
    %v2511 = vpop.f32.mrf.mxu0
    %v2512 = vadd.f32 0.0, %v2511
    %2513 = vdwg.mxu0
    %2514 = vmatpush.msra.mxu0 0.0
    %2515 = vmatpush.msra.mxu0 0.0
    %2516 = vmatpush.msra.mxu0 0.0
    %2517 = vmatpush.msra.mxu0 0.0
    %2518 = vmatpush.msra.mxu0 0.0
    %2519 = vmatpush.msra.mxu0 0.0
    %2520 = vmatpush.msra.mxu0 0.0
    %2521 = vmatpush.msra.mxu0 0.0
    %2522 = vmatpush.msra.mxu0 0.0
    %2523 = vmatpush.msra.mxu0 0.0
    %2524 = vmatpush.msra.mxu0 0.0
    %2525 = vmatpush.msra.mxu0 0.0
    %2526 = vmatpush.msra.mxu0 %v2486
    %2527 = vmatpush.msra.mxu0 %v2485
    %2528 = vmatpush.msra.mxu0 %v2484
    %2529 = vmatpush.msra.mxu0 %v2483
    %2530 = vmatmul.f32.gmra.mxu0 %v2374
    %v2531 = vpop.f32.mrf.mxu0
    %v2532 = vadd.f32 %v2512, %v2531
    %2533 = vdwg.mxu0
    %v2534 = vld [vmem:[%s3 + $0x5] sm:$0x1]
    %v2535 = vperm.slane %v2534, 0
    %v2536 = vadd.f32 %v2532, %v2535
    %v2537 = vld [vmem:[%s2 + $0x100] sm:$0xff]
    %v2538 = vld [vmem:[%s2 + $0x108] sm:$0xff]
    %v2539 = vld [vmem:[%s2 + $0x110] sm:$0xff]
    %v2540 = vld [vmem:[%s2 + $0x118] sm:$0xff]
    %v2541 = vld [vmem:[%s3 + $0x6] sm:$0x1]
    %v2542 = vperm.slane %v2541, 0
    %v2544 = vsel %vm127, %v2536, 0
    %2546 = vmatpush.msra.mxu0 0.0
    %2547 = vmatpush.msra.mxu0 0.0
    %2548 = vmatpush.msra.mxu0 0.0
    %2549 = vmatpush.msra.mxu0 0.0
    %2550 = vmatpush.msra.mxu0 0.0
    %2551 = vmatpush.msra.mxu0 0.0
    %2552 = vmatpush.msra.mxu0 0.0
    %2553 = vmatpush.msra.mxu0 0.0
    %2554 = vmatpush.msra.mxu0 0.0
    %2555 = vmatpush.msra.mxu0 0.0
    %2556 = vmatpush.msra.mxu0 0.0
    %2557 = vmatpush.msra.mxu0 0.0
    %2558 = vmatpush.msra.mxu0 %v2540
    %2559 = vmatpush.msra.mxu0 %v2539
    %2560 = vmatpush.msra.mxu0 %v2538
    %2561 = vmatpush.msra.mxu0 %v2537
    %2562 = vmatmul.f32.gmra.mxu0 %v2544
    %v2563 = vpop.f32.mrf.mxu0
    %v2564 = vadd.f32 %v2542, %v2563
    %2565 = vdwg.mxu0
    %v2566 = vld [vmem:[%s2 + $0x120] sm:$0xff]
    %v2567 = vld [vmem:[%s2 + $0x128] sm:$0xff]
    %v2568 = vld [vmem:[%s2 + $0x130] sm:$0xff]
    %v2569 = vld [vmem:[%s2 + $0x138] sm:$0xff]
    %v2570 = vld [vmem:[%s3 + $0x7] sm:$0x1]
    %v2571 = vperm.slane %v2570, 0
    %2572 = vmatpush.msra.mxu0 0.0
    %2573 = vmatpush.msra.mxu0 0.0
    %2574 = vmatpush.msra.mxu0 0.0
    %2575 = vmatpush.msra.mxu0 0.0
    %2576 = vmatpush.msra.mxu0 0.0
    %2577 = vmatpush.msra.mxu0 0.0
    %2578 = vmatpush.msra.mxu0 0.0
    %2579 = vmatpush.msra.mxu0 0.0
    %2580 = vmatpush.msra.mxu0 0.0
    %2581 = vmatpush.msra.mxu0 0.0
    %2582 = vmatpush.msra.mxu0 0.0
    %2583 = vmatpush.msra.mxu0 0.0
    %2584 = vmatpush.msra.mxu0 %v2569
    %2585 = vmatpush.msra.mxu0 %v2568
    %2586 = vmatpush.msra.mxu0 %v2567
    %2587 = vmatpush.msra.mxu0 %v2566
    %2588 = vmatmul.f32.gmra.mxu0 %v2544
    %v2589 = vpop.f32.mrf.mxu0
    %v2590 = vadd.f32 %v2571, %v2589
    %2591 = vdwg.mxu0
    %v2592 = vld [vmem:[%s3 + $0x8] sm:$0x1]
    %v2593 = vld [vmem:[%s3 + $0x9] sm:$0x1]
    %v2594 = vperm.slane %v2592, 0
    %2596 = vrot.lane.b32.xlu0 %v1996, 96
    %v2597 = vpop.permute.xlu0 %2596
    %v2598 = vsel %vm127, %v2597, 0
    %2600 = vmatpush.msra.mxu0 0.0
    %2601 = vmatpush.msra.mxu0 0.0
    %2602 = vmatpush.msra.mxu0 0.0
    %2603 = vmatpush.msra.mxu0 0.0
    %2604 = vmatpush.msra.mxu0 0.0
    %2605 = vmatpush.msra.mxu0 0.0
    %2606 = vmatpush.msra.mxu0 0.0
    %2607 = vmatpush.msra.mxu0 0.0
    %2608 = vmatpush.msra.mxu0 0.0
    %2609 = vmatpush.msra.mxu0 0.0
    %2610 = vmatpush.msra.mxu0 0.0
    %2611 = vmatpush.msra.mxu0 0.0
    %2612 = vmatpush.msra.mxu0 %v195
    %2613 = vmatpush.msra.mxu0 %v194
    %2614 = vmatpush.msra.mxu0 %v193
    %2615 = vmatpush.msra.mxu0 %v192
    %2616 = vmatmul.f32.gmra.mxu0 %v2598
    %v2617 = vpop.f32.mrf.mxu0
    %v2618 = vadd.f32 %v2594, %v2617
    %2619 = vdwg.mxu0
    %v2620 = vperm.slane %v2593, 0
    %2621 = vmatpush.msra.mxu0 0.0
    %2622 = vmatpush.msra.mxu0 0.0
    %2623 = vmatpush.msra.mxu0 0.0
    %2624 = vmatpush.msra.mxu0 0.0
    %2625 = vmatpush.msra.mxu0 0.0
    %2626 = vmatpush.msra.mxu0 0.0
    %2627 = vmatpush.msra.mxu0 0.0
    %2628 = vmatpush.msra.mxu0 0.0
    %2629 = vmatpush.msra.mxu0 0.0
    %2630 = vmatpush.msra.mxu0 0.0
    %2631 = vmatpush.msra.mxu0 0.0
    %2632 = vmatpush.msra.mxu0 0.0
    %2633 = vmatpush.msra.mxu0 %v199
    %2634 = vmatpush.msra.mxu0 %v198
    %2635 = vmatpush.msra.mxu0 %v197
    %2636 = vmatpush.msra.mxu0 %v196
    %2637 = vmatmul.f32.gmra.mxu0 %v2598
    %v2638 = vpop.f32.mrf.mxu0
    %v2639 = vadd.f32 %v2620, %v2638
    %2640 = vdwg.mxu0
    %v2641 = vadd.f32 %v2564, %v2618
    %v2642 = vxor.u32 %v2641, 2147483648
    %v2643 = vmul.f32 %v2642, 1.442695
    %v2644 = vpow.pop %v2643
    %v2645 = vadd.f32 %v2644, 1.0
    %v2646 = vrcp.pop %v2645
    %v2647 = vmul.f32 %v2645, %v2646
    %v2648 = vsub.f32 1.0, %v2647
    %v2649 = vmul.f32 %v2646, %v2648
    %v2650 = vadd.f32 %v2646, %v2649
    %vm2651 = vweird.f32 %v2645
    %vm2652 = vweird.f32 %v2646
    %vm2653 = vmor %vm2651, %vm2652
    %v2654 = vsel %vm2653, %v2646, %v2650
    %v2655 = vand.u32 2147483647, %v2645
    %vm2656 = vcmp.eq.f32.partialorder %v2655, 8.507059e+37
    %v2657 = vand.u32 %v2645, 2147483648
    %v2658 = vor.u32 1.1754944e-38, %v2657
    %v2659 = vsel %vm2656, %v2658, %v2654
    %v2660 = vmul.f32 1.0, %v2659
    %v2661 = vmul.f32 %v2660, %v2639
    %v2662 = vadd.f32 %v2590, %v2661
    %v2663 = vtanh.pop %v2662
    %v2664 = vsub.f32 1.0, %v2660
    %2666 = vrot.lane.b32.xlu0 %v2663, 32
    %v2667 = vpop.permute.xlu0 %2666
    %v2669 = vmul.f32 %v2664, %v2667
    %v2670 = vmul.f32 %v2660, %v1996
    %v2671 = vadd.f32 %v2669, %v2670
    %2672 = vrot.lane.b32.xlu0 %v2536, 32
    %v2673 = vpop.permute.xlu0 %2672
    %v2675 = vadd.f32 %v2671, %v2673
    %v2676 = vld [vmem:[%s2 + $0x180] sm:$0xff]
    %v2677 = vld [vmem:[%s2 + $0x188] sm:$0xff]
    %v2678 = vld [vmem:[%s2 + $0x190] sm:$0xff]
    %v2679 = vld [vmem:[%s2 + $0x198] sm:$0xff]
    %v2680 = vld [vmem:[%s3 + $0xa] sm:$0x1]
    %v2681 = vperm.slane %v2680, 0
    %2683 = vrot.lane.b32.xlu0 %v2675, 96
    %v2684 = vpop.permute.xlu0 %2683
    %v2685 = vsel %vm127, %v2684, 0
    %2687 = vmatpush.msra.mxu0 0.0
    %2688 = vmatpush.msra.mxu0 0.0
    %2689 = vmatpush.msra.mxu0 0.0
    %2690 = vmatpush.msra.mxu0 0.0
    %2691 = vmatpush.msra.mxu0 0.0
    %2692 = vmatpush.msra.mxu0 0.0
    %2693 = vmatpush.msra.mxu0 0.0
    %2694 = vmatpush.msra.mxu0 0.0
    %2695 = vmatpush.msra.mxu0 0.0
    %2696 = vmatpush.msra.mxu0 0.0
    %2697 = vmatpush.msra.mxu0 0.0
    %2698 = vmatpush.msra.mxu0 0.0
    %2699 = vmatpush.msra.mxu0 %v2679
    %2700 = vmatpush.msra.mxu0 %v2678
    %2701 = vmatpush.msra.mxu0 %v2677
    %2702 = vmatpush.msra.mxu0 %v2676
    %2703 = vmatmul.f32.gmra.mxu0 %v2685
    %v2704 = vpop.f32.mrf.mxu0
    %v2705 = vadd.f32 %v2681, %v2704
    %2706 = vdwg.mxu0
    %v2707 = vld [vmem:[%s2 + $0x1a0] sm:$0xff]
    %v2708 = vld [vmem:[%s2 + $0x1a8] sm:$0xff]
    %v2709 = vld [vmem:[%s2 + $0x1b0] sm:$0xff]
    %v2710 = vld [vmem:[%s2 + $0x1b8] sm:$0xff]
    %v2711 = vld [vmem:[%s3 + $0xb] sm:$0x1]
    %v2712 = vperm.slane %v2711, 0
    %2713 = vmatpush.msra.mxu0 0.0
    %2714 = vmatpush.msra.mxu0 0.0
    %2715 = vmatpush.msra.mxu0 0.0
    %2716 = vmatpush.msra.mxu0 0.0
    %2717 = vmatpush.msra.mxu0 0.0
    %2718 = vmatpush.msra.mxu0 0.0
    %2719 = vmatpush.msra.mxu0 0.0
    %2720 = vmatpush.msra.mxu0 0.0
    %2721 = vmatpush.msra.mxu0 0.0
    %2722 = vmatpush.msra.mxu0 0.0
    %2723 = vmatpush.msra.mxu0 0.0
    %2724 = vmatpush.msra.mxu0 0.0
    %2725 = vmatpush.msra.mxu0 %v2710
    %2726 = vmatpush.msra.mxu0 %v2709
    %2727 = vmatpush.msra.mxu0 %v2708
    %2728 = vmatpush.msra.mxu0 %v2707
    %2729 = vmatmul.f32.gmra.mxu0 %v2685
    %v2730 = vpop.f32.mrf.mxu0
    %v2731 = vadd.f32 %v2712, %v2730
    %2732 = vdwg.mxu0
    %v2733 = vld [vmem:[%s3 + $0xc] sm:$0x1]
    %v2734 = vld [vmem:[%s3 + $0xd] sm:$0x1]
    %v2735 = vperm.slane %v2733, 0
    %2737 = vrot.lane.b32.xlu0 %v2137, 96
    %v2738 = vpop.permute.xlu0 %2737
    %v2739 = vsel %vm127, %v2738, 0
    %2741 = vmatpush.msra.mxu0 0.0
    %2742 = vmatpush.msra.mxu0 0.0
    %2743 = vmatpush.msra.mxu0 0.0
    %2744 = vmatpush.msra.mxu0 0.0
    %2745 = vmatpush.msra.mxu0 0.0
    %2746 = vmatpush.msra.mxu0 0.0
    %2747 = vmatpush.msra.mxu0 0.0
    %2748 = vmatpush.msra.mxu0 0.0
    %2749 = vmatpush.msra.mxu0 0.0
    %2750 = vmatpush.msra.mxu0 0.0
    %2751 = vmatpush.msra.mxu0 0.0
    %2752 = vmatpush.msra.mxu0 0.0
    %2753 = vmatpush.msra.mxu0 %v203
    %2754 = vmatpush.msra.mxu0 %v202
    %2755 = vmatpush.msra.mxu0 %v201
    %2756 = vmatpush.msra.mxu0 %v200
    %2757 = vmatmul.f32.gmra.mxu0 %v2739
    %v2758 = vpop.f32.mrf.mxu0
    %v2759 = vadd.f32 %v2735, %v2758
    %2760 = vdwg.mxu0
    %v2761 = vperm.slane %v2734, 0
    %2762 = vmatpush.msra.mxu0 0.0
    %2763 = vmatpush.msra.mxu0 0.0
    %2764 = vmatpush.msra.mxu0 0.0
    %2765 = vmatpush.msra.mxu0 0.0
    %2766 = vmatpush.msra.mxu0 0.0
    %2767 = vmatpush.msra.mxu0 0.0
    %2768 = vmatpush.msra.mxu0 0.0
    %2769 = vmatpush.msra.mxu0 0.0
    %2770 = vmatpush.msra.mxu0 0.0
    %2771 = vmatpush.msra.mxu0 0.0
    %2772 = vmatpush.msra.mxu0 0.0
    %2773 = vmatpush.msra.mxu0 0.0
    %2774 = vmatpush.msra.mxu0 %v207
    %2775 = vmatpush.msra.mxu0 %v206
    %2776 = vmatpush.msra.mxu0 %v205
    %2777 = vmatpush.msra.mxu0 %v204
    %2778 = vmatmul.f32.gmra.mxu0 %v2739
    %v2779 = vpop.f32.mrf.mxu0
    %v2780 = vadd.f32 %v2761, %v2779
    %2781 = vdwg.mxu0
    %v2782 = vadd.f32 %v2705, %v2759
    %v2783 = vxor.u32 %v2782, 2147483648
    %v2784 = vmul.f32 %v2783, 1.442695
    %v2785 = vpow.pop %v2784
    %v2786 = vadd.f32 %v2785, 1.0
    %v2787 = vrcp.pop %v2786
    %v2788 = vmul.f32 %v2786, %v2787
    %v2789 = vsub.f32 1.0, %v2788
    %v2790 = vmul.f32 %v2787, %v2789
    %v2791 = vadd.f32 %v2787, %v2790
    %vm2792 = vweird.f32 %v2786
    %vm2793 = vweird.f32 %v2787
    %vm2794 = vmor %vm2792, %vm2793
    %v2795 = vsel %vm2794, %v2787, %v2791
    %v2796 = vand.u32 2147483647, %v2786
    %vm2797 = vcmp.eq.f32.partialorder %v2796, 8.507059e+37
    %v2798 = vand.u32 %v2786, 2147483648
    %v2799 = vor.u32 1.1754944e-38, %v2798
    %v2800 = vsel %vm2797, %v2799, %v2795
    %v2801 = vmul.f32 1.0, %v2800
    %v2802 = vmul.f32 %v2801, %v2780
    %v2803 = vadd.f32 %v2731, %v2802
    %v2804 = vtanh.pop %v2803
    %v2805 = vsub.f32 1.0, %v2801
    %2807 = vrot.lane.b32.xlu0 %v2804, 32
    %v2808 = vpop.permute.xlu0 %2807
    %v2810 = vmul.f32 %v2805, %v2808
    %v2811 = vmul.f32 %v2801, %v2137
    %v2812 = vadd.f32 %v2810, %v2811
    %v2813 = vadd.f32 %v2812, %v2675
    %2814 = vmatpush.msra.mxu0 0.0
    %2815 = vmatpush.msra.mxu0 0.0
    %2816 = vmatpush.msra.mxu0 0.0
    %2817 = vmatpush.msra.mxu0 0.0
    %2818 = vmatpush.msra.mxu0 0.0
    %2819 = vmatpush.msra.mxu0 0.0
    %2820 = vmatpush.msra.mxu0 0.0
    %2821 = vmatpush.msra.mxu0 0.0
    %2822 = vmatpush.msra.mxu0 0.0
    %2823 = vmatpush.msra.mxu0 0.0
    %2824 = vmatpush.msra.mxu0 0.0
    %2825 = vmatpush.msra.mxu0 0.0
    %2826 = vmatpush.msra.mxu0 0.0
    %2827 = vmatpush.msra.mxu0 0.0
    %2828 = vmatpush.msra.mxu0 %v213
    %2829 = vmatpush.msra.mxu0 %v212
    %2830 = vmatmul.f32.gmra.mxu0 %v2492
    %v2831 = vpop.f32.mrf.mxu0
    %v2832 = vadd.f32 0.0, %v2831
    %2833 = vdwg.mxu0
    %2835 = vrot.lane.b32.xlu0 %v2813, 96
    %v2836 = vpop.permute.xlu0 %2835
    %v2837 = vsel %vm127, %v2836, 0
    %2839 = vmatpush.msra.mxu0 0.0
    %2840 = vmatpush.msra.mxu0 0.0
    %2841 = vmatpush.msra.mxu0 0.0
    %2842 = vmatpush.msra.mxu0 0.0
    %2843 = vmatpush.msra.mxu0 0.0
    %2844 = vmatpush.msra.mxu0 0.0
    %2845 = vmatpush.msra.mxu0 0.0
    %2846 = vmatpush.msra.mxu0 0.0
    %2847 = vmatpush.msra.mxu0 0.0
    %2848 = vmatpush.msra.mxu0 0.0
    %2849 = vmatpush.msra.mxu0 0.0
    %2850 = vmatpush.msra.mxu0 0.0
    %2851 = vmatpush.msra.mxu0 %v211
    %2852 = vmatpush.msra.mxu0 %v210
    %2853 = vmatpush.msra.mxu0 %v209
    %2854 = vmatpush.msra.mxu0 %v208
    %2855 = vmatmul.f32.gmra.mxu0 %v2837
    %v2856 = vpop.f32.mrf.mxu0
    %v2857 = vadd.f32 %v2832, %v2856
    %2858 = vdwg.mxu0
    %v2859 = vld [vmem:[%s3 + $0xe] sm:$0x1]
    %v2860 = vperm.slane %v2859, 0
    %v2861 = vadd.f32 %v2857, %v2860
    %v2863 = vrot.slane %v2861, 1
    %2865 = vst.msk [vmem:[%s4 + $0x3] sm:$0x1] %vm837, %v2861
    %2866 = vst.msk [vmem:[%s4 + $0x7] sm:$0x1] %vm837, %v2863
    %v2867 = vxor.u32 %v2861, 2147483648
    %v2868 = vmul.f32 %v2867, 1.442695
    %v2869 = vpow.pop %v2868
    %v2870 = vadd.f32 %v2869, 1.0
    %v2871 = vrcp.pop %v2870
    %v2872 = vmul.f32 %v2870, %v2871
    %v2873 = vsub.f32 1.0, %v2872
    %v2874 = vmul.f32 %v2871, %v2873
    %v2875 = vadd.f32 %v2871, %v2874
    %vm2876 = vweird.f32 %v2870
    %vm2877 = vweird.f32 %v2871
    %vm2878 = vmor %vm2876, %vm2877
    %v2879 = vsel %vm2878, %v2871, %v2875
    %v2880 = vand.u32 2147483647, %v2870
    %vm2881 = vcmp.eq.f32.partialorder %v2880, 8.507059e+37
    %v2882 = vand.u32 %v2870, 2147483648
    %v2883 = vor.u32 1.1754944e-38, %v2882
    %v2884 = vsel %vm2881, %v2883, %v2879
    %v2885 = vmul.f32 1.0, %v2884
    %v2887 = vrot.slane %v2885, 1
    %v2888 = vperm.slane %v2885, 0
    %v2889 = vperm.slane %v2887, 0
    %2890 = vrot.lane.b32.xlu0 %v2888, 112
    %v2891 = vpop.permute.xlu0 %2890
    %2892 = vrot.lane.b32.xlu0 %v2889, 112
    %v2893 = vpop.permute.xlu0 %2892
    %2896 = vst.msk [vmem:[%s6 + $0x3] sm:$0x1] %vm869, %v2891
    %2897 = vst.msk [vmem:[%s6 + $0x7] sm:$0x1] %vm869, %v2893
    %v2898 = vperm.slane %v2460, %v395
    %v2899 = vperm.slane %v2465, %v395
    %2902 = vst.msk [vmem:[#allocation2 + $0x3] sm:$0x1] %vm876, %v2898
    %2903 = vst.msk [vmem:[#allocation2 + $0x7] sm:$0x1] %vm876, %v2899
    // Predicated region
    $region18: #{run_decoder.1} parent=1 // pred_check
      _
    $region19: #{run_decoder.1} parent=1 // pred_check_branch
      %2905 = sbr.rel (0) target = $region21
    $region20: #{run_decoder.1} parent=1 // pred_region
      _
    $region21: #{run_decoder.1} parent=1 // pred_fallthru
      _
    // Predicated region
    $region22: #{run_decoder.1} parent=1 // pred_check
      _
    $region23: #{run_decoder.1} parent=1 // pred_check_branch
      %2907 = sbr.rel (0) target = $region25
    $region24: #{run_decoder.1} parent=1 // pred_region
      %2909 = vsyncadd [#allocation3], 0
      %s2910 = sshll.u32 [#allocation2], 4
      %s2911 = int_to_ptr.vmem [resolvable:$true] %s2910
      %s2912 = sshll.u32 %s5, 4
      %s2913 = int_to_ptr.hbm [resolvable:$true] %s2912
      %2918 = dma.vmem_to_hbm [thread:$0]  %s2911, 128, %s2913, [#allocation3], 64, 64, 4
    $region25: #{run_decoder.1} parent=1 // pred_fallthru
      _
    // Predicated region
    $region26: #{run_decoder.1} parent=1 // pred_check
      _
    $region27: #{run_decoder.1} parent=1 // pred_check_branch
      %2920 = sbr.rel (0) target = $region29
    $region28: #{run_decoder.1} parent=1 // pred_region
      _
    $region29: #{run_decoder.1} parent=1 // pred_fallthru
      _
    // Predicated region
    $region30: #{run_decoder.1} parent=1 // pred_check
      _
    $region31: #{run_decoder.1} parent=1 // pred_check_branch
      %2922 = sbr.rel (0) target = $region33
    $region32: #{run_decoder.1} parent=1 // pred_region
      _
    $region33: #{run_decoder.1} parent=1 // pred_fallthru
      _
    // Predicated region
    $region34: #{run_decoder.1} parent=1 // pred_check
      _
    $region35: #{run_decoder.1} parent=1 // pred_check_branch
      %2924 = sbr.rel (0) target = $region37
    $region36: #{run_decoder.1} parent=1 // pred_region
      %2926 = dma.done [#allocation3], 128
    $region37: #{run_decoder.1} parent=1 // pred_fallthru
      _
    // Predicated region
    $region38: #{run_decoder.1} parent=1 // pred_check
      _
    $region39: #{run_decoder.1} parent=1 // pred_check_branch
      %2928 = sbr.rel (0) target = $region41
    $region40: #{run_decoder.1} parent=1 // pred_region
      _
    $region41: #{run_decoder.1} parent=1 // pred_fallthru
      _
    %2929 = vsyncpa [#allocation3], 1

</llo_original>
